<compile_context>
chip_gen: v6e
topology: v6e:2x2x1
jax: 0.10.0
libtpu: 0.0.40
codegen_flags: <defaults>
</compile_context>

<pallas_src>
import functools

import jax
import jax.numpy as jnp
import numpy as np
from jax.experimental import pallas as pl
from jax.experimental.pallas import tpu as pltpu

EPS = 1e-5


@functools.lru_cache(maxsize=1)
def _tpu_vmem_limit():
    """Generation-aware scoped-VMEM budget with a v7x-safe fallback."""
    cap = 0
    try:
        info = pltpu.get_tpu_info()
        cap = int(getattr(info, "vmem_capacity_bytes", 0) or 0)
    except Exception:
        cap = 0
    if cap <= 0:
        cap = 64 * 1024 * 1024          # v7x physical VMEM per TensorCore
    # ~75% of physical, capped: ~96 MiB on v5e/v6e (128 MiB), 48 MiB on v7x (64 MiB).
    return int(min(cap * 3 // 4, 100 * 1024 * 1024))


def _conv_stats_pool_kernel(x_ref, w_ref, pmax_ref, pmin_ref, stats_ref,
                            rmax_scr, rmin_scr, *, valid_w, pool):
    """3x3 conv (bf16 MXU, f32 acc) + BN partial sums + fused max/min pooling.

    x_ref:     (Hb+2, Wp, C) bf16  spatially padded input rows (with halo)
    w_ref:     (9, C, C)     bf16  w[dy*3+dx][ci, co] = conv_weight[co, ci, dy, dx]
    pmax_ref:  (bho, Wo, C)  f32   per-pool-window max of the raw conv output
    pmin_ref:  (bho, Wo, C)  f32   per-pool-window min of the raw conv output
    stats_ref: (2, C)        f32   row 0: sum, row 1: sum of squares (valid cols only)
    rmax_scr:  (bho, Wp, C)  f32   scratch: H-pooled max at full padded width
    rmin_scr:  (bho, Wp, C)  f32   scratch: H-pooled min at full padded width
    """
    hb2, wp, c = x_ref.shape
    hb = hb2 - 2
    m = hb * wp
    bho, wo, _ = pmax_ref.shape

    # Load each dy row window once (leading-dim ref slice; Wp % 16 == 0 keeps the bf16
    # (Hb, Wp, C) -> (Hb*Wp, C) merge sublane-tile aligned).
    lhs = [x_ref[pl.ds(dy, hb), :, :].reshape(m, c) for dy in range(3)]

    # dx-outer / dy-inner: sum the three dy matmuls of a dx group first (same shift),
    # then a single sublane roll per group realigns the W axis -> 2 rolls, 3 group adds.
    acc = None
    for dx in range(3):
        g = None
        for dy in range(3):
            p = jnp.dot(lhs[dy], w_ref[dy * 3 + dx],
                        preferred_element_type=jnp.float32)
            g = p if g is None else g + p
        if dx:
            g = pltpu.roll(g, m - dx, axis=0)
        acc = g if acc is None else acc + g

    # One-pass BN partial statistics over the valid columns of this block.  The mask is
    # an axis-aligned iota compare on the (Hb, Wp, C) view (no integer modulo).
    # Note: variance is finalized as E[x^2] - mean^2 in f32 in the wrapper; fine for
    # roughly zero-mean conv activations.
    a3 = acc.reshape(hb, wp, c)
    col = jax.lax.broadcasted_iota(jnp.int32, (hb, wp, c), 1)
    av = jnp.where(col < valid_w, a3, 0.0).reshape(m, c)
    stats_ref[0:1, :] = jnp.sum(av, axis=0, keepdims=True)
    stats_ref[1:2, :] = jnp.sum(av * av, axis=0, keepdims=True)

    # Fused MaxPool: emit per-window MAX and MIN of the raw conv output so the BN affine
    # can be applied after pooling in phase 2.  H offsets via a leading-dim split
    # (no relayout), W offsets via strided sublane loads from a VMEM scratch.
    a4 = acc.reshape(bho, pool, wp, c)
    rmax_scr[...] = jnp.max(a4, axis=1)
    rmin_scr[...] = jnp.min(a4, axis=1)
    pmax = rmax_scr[:, pl.ds(0, wo, stride=pool), :]
    pmin = rmin_scr[:, pl.ds(0, wo, stride=pool), :]
    for px in range(1, pool):
        pmax = jnp.maximum(pmax, rmax_scr[:, pl.ds(px, wo, stride=pool), :])
        pmin = jnp.minimum(pmin, rmin_scr[:, pl.ds(px, wo, stride=pool), :])
    pmax_ref[...] = pmax
    pmin_ref[...] = pmin


def _bn_select_relu_kernel(pmax_ref, pmin_ref, ab_ref, o_ref):
    """BN-after-pool: out = relu(a * where(a>=0, pooled_max, pooled_min) + b)."""
    c = ab_ref.shape[-1]
    a = ab_ref[0:1, :].reshape(1, 1, c)
    b = ab_ref[1:2, :].reshape(1, 1, c)
    sel = jnp.where(a >= 0.0, pmax_ref[...], pmin_ref[...])
    o_ref[...] = jnp.maximum(sel * a + b, 0.0).astype(o_ref.dtype)


def _pick_row_block(h, scale, cap):
    """Largest divisor of H that is <= cap (>= scale) and a multiple of scale."""
    cap = max(scale, min(h, cap))
    for d in range(cap, scale - 1, -1):
        if h % d == 0 and d % scale == 0:
            return d
    return h


@functools.partial(jax.jit, static_argnames=("scale", "row_block"))
def down_crfb(x_nchw, conv_w, conv_b, bn_gamma, bn_beta, scale, row_block=None):
    """Forward pass of downCRFB. Input/output are NCHW, matching PyTorch."""
    del conv_b  # exactly cancelled by the train-mode BatchNorm mean subtraction
    N, C, H, W = x_nchw.shape
    assert H % scale == 0 and W % scale == 0
    Ho, Wo = H // scale, W // scale

    Wp = ((W + 2 + 15) // 16) * 16                  # bf16-sublane-aligned padded width
    vmem_limit = _tpu_vmem_limit()

    # Auto row block: ~32 bytes/element of live VMEM per conv row (double-buffered bf16
    # input rows, dy windows, f32 group/acc values, row-pool scratch), 2x headroom.
    bytes_per_row = 32 * Wp * C
    cap_rows = max(scale, int((vmem_limit // 2) // max(bytes_per_row, 1)))
    if row_block is not None:
        cap_rows = min(cap_rows, int(row_block))
    Hb = _pick_row_block(H, scale, min(cap_rows, 256))
    R = H // Hb                                     # row blocks
    bho = Hb // scale                               # pooled rows per grid block

    # ---- glue: NCHW -> NHWC (bf16), spatial zero pad, halo-blocked row layout ----
    x_nhwc = jnp.transpose(x_nchw, (0, 2, 3, 1)).astype(jnp.bfloat16)
    xp = jnp.pad(x_nhwc, ((0, 0), (1, 1), (1, Wp - W - 1), (0, 0)))
    # For very large inputs an ANY-space input + manual double-buffered DMA would avoid
    # this (Hb+2)/Hb-sized duplicate; with the larger Hb the duplication is <= ~6%.
    xb = jnp.stack([xp[:, r * Hb: r * Hb + Hb + 2] for r in range(R)], axis=1)
    # xb: (N, R, Hb+2, Wp, C) -- non-overlapping blocks, halo rows materialized once.

    # conv weight (Co, Ci, 3, 3) -> (9, Ci, Co), bf16 for the MXU (f32 accumulation).
    wk = jnp.transpose(conv_w, (2, 3, 1, 0)).reshape(9, C, C).astype(jnp.bfloat16)

    # ---- phase 1: conv + BN partial statistics + fused max/min pooling ----
    cost1 = pl.CostEstimate(
        flops=2 * N * H * Wp * 9 * C * C, transcendentals=0,
        bytes_accessed=(xb.size * 2 + wk.size * 2
                        + 2 * N * Ho * Wo * C * 4 + N * R * 2 * C * 4))
    pmax, pmin, stats = pl.pallas_call(
        functools.partial(_conv_stats_pool_kernel, valid_w=W, pool=scale),
        grid=(N, R),
        in_specs=[
            pl.BlockSpec((None, None, Hb + 2, Wp, C), lambda n, r: (n, r, 0, 0, 0)),
            pl.BlockSpec((9, C, C), lambda n, r: (0, 0, 0)),
        ],
        out_specs=[
            pl.BlockSpec((None, bho, Wo, C), lambda n, r: (n, r, 0, 0)),
            pl.BlockSpec((None, bho, Wo, C), lambda n, r: (n, r, 0, 0)),
            pl.BlockSpec((None, None, 2, C), lambda n, r: (n, r, 0, 0)),
        ],
        out_shape=[
            jax.ShapeDtypeStruct((N, Ho, Wo, C), jnp.float32),
            jax.ShapeDtypeStruct((N, Ho, Wo, C), jnp.float32),
            jax.ShapeDtypeStruct((N, R, 2, C), jnp.float32),
        ],
        scratch_shapes=[pltpu.VMEM((bho, Wp, C), jnp.float32),
                        pltpu.VMEM((bho, Wp, C), jnp.float32)],
        compiler_params=pltpu.CompilerParams(
            dimension_semantics=("parallel", "parallel"),
            vmem_limit_bytes=vmem_limit),
        cost_estimate=cost1,
    )(xb, wk)

    # ---- glue: finalize train-mode BN (biased variance) into a per-channel affine ----
    count = float(N * H * W)
    ssum = jnp.sum(stats[:, :, 0, :], axis=(0, 1))
    ssq = jnp.sum(stats[:, :, 1, :], axis=(0, 1))
    mean = ssum / count
    var = jnp.maximum(ssq / count - mean * mean, 0.0)
    a = bn_gamma.astype(jnp.float32) * jax.lax.rsqrt(var + EPS)
    b = bn_beta.astype(jnp.float32) - mean * a
    ab = jnp.stack([a, b], axis=0)                  # (2, C) f32

    # ---- phase 2: BN affine on the pooled max/min -> ReLU ----
    cost2 = pl.CostEstimate(
        flops=4 * N * Ho * Wo * C, transcendentals=0,
        bytes_accessed=3 * N * Ho * Wo * C * 4 + 2 * C * 4)
    out_nhwc = pl.pallas_call(
        _bn_select_relu_kernel,
        grid=(N, R),
        in_specs=[
            pl.BlockSpec((None, bho, Wo, C), lambda n, r: (n, r, 0, 0)),
            pl.BlockSpec((None, bho, Wo, C), lambda n, r: (n, r, 0, 0)),
            pl.BlockSpec((2, C), lambda n, r: (0, 0)),
        ],
        out_specs=pl.BlockSpec((None, bho, Wo, C), lambda n, r: (n, r, 0, 0)),
        out_shape=jax.ShapeDtypeStruct((N, Ho, Wo, C), jnp.float32),
        compiler_params=pltpu.CompilerParams(
            dimension_semantics=("parallel", "parallel"),
            vmem_limit_bytes=vmem_limit),
        cost_estimate=cost2,
    )(pmax, pmin, ab)

    # glue: NHWC -> NCHW
    return jnp.transpose(out_nhwc, (0, 3, 1, 2))


def reference(x, conv_w, conv_b, gamma, beta, scale):
    """Pure-JAX reference matching PyTorch semantics (train-mode BatchNorm)."""
    y = jax.lax.conv_general_dilated(
        x, conv_w, window_strides=(1, 1), padding=((1, 1), (1, 1)),
        dimension_numbers=('NCHW', 'OIHW', 'NCHW'),
        precision=jax.lax.Precision.HIGHEST)
    y = y + conv_b[None, :, None, None]
    mu = jnp.mean(y, axis=(0, 2, 3), keepdims=True)
    var = jnp.mean((y - mu) ** 2, axis=(0, 2, 3), keepdims=True)
    y = (y - mu) * jax.lax.rsqrt(var + EPS) \
        * gamma[None, :, None, None] + beta[None, :, None, None]
    y = jnp.maximum(y, 0.0)
    n, c, h, w = y.shape
    y = y.reshape(n, c, h // scale, scale, w // scale, scale)
    return jnp.max(y, axis=(3, 5))


if __name__ == "__main__":
    N, C, H, W, scale = 2, 4, 16, 16, 2

    key = jax.random.PRNGKey(0)
    k1, k2, k3, k4, k5 = jax.random.split(key, 5)
    x = jax.random.normal(k1, (N, C, H, W), jnp.float32)
    conv_w = 0.2 * jax.random.normal(k2, (C, C, 3, 3), jnp.float32)
    conv_b = 0.1 * jax.random.normal(k3, (C,), jnp.float32)
    # mixed-sign gamma exercises both branches of the pooled max/min BN fusion
    bn_gamma = 0.5 * jax.random.normal(k4, (C,), jnp.float32)
    bn_beta = 0.1 * jax.random.normal(k5, (C,), jnp.float32)

    out = down_crfb(x, conv_w, conv_b, bn_gamma, bn_beta, scale=scale)
    out = jax.block_until_ready(out)

    ref = reference(x, conv_w, conv_b, bn_gamma, bn_beta, scale)
    assert out.shape == (N, C, H // scale, W // scale), out.shape
    # bf16 MXU operands (f32 accumulation) vs. an f32 HIGHEST-precision reference.
    np.testing.assert_allclose(np.asarray(out), np.asarray(ref), rtol=2e-2, atol=2e-2)
    print("KERNEL_OK")
</pallas_src>

<mosaic_0001>
module attributes {stable_mosaic.version = 11 : i64} {
  func.func @_conv_stats_pool_kernel(%arg0: i32, %arg1: i32, %arg2: memref<1x1x18x32x4xbf16, #tpu.memory_space<vmem>>, %arg3: memref<9x4x4xbf16, #tpu.memory_space<vmem>>, %arg4: memref<1x8x8x4xf32, #tpu.memory_space<vmem>>, %arg5: memref<1x8x8x4xf32, #tpu.memory_space<vmem>>, %arg6: memref<1x1x2x4xf32, #tpu.memory_space<vmem>>, %arg7: memref<8x32x4xf32, #tpu.memory_space<vmem>>, %arg8: memref<8x32x4xf32, #tpu.memory_space<vmem>>) attributes {dimension_semantics = [#tpu.dimension_semantics<parallel>, #tpu.dimension_semantics<parallel>], iteration_bounds = array<i64: 2, 1>, scalar_prefetch = 0 : i64, scratch_operands = 2 : i64, tpu.core_type = #tpu.core_type<tc>, window_params = [{transform_indices = @transform_0, window_bounds = array<i64: 1, 1, 18, 32, 4>}, {pipeline_mode = #tpu.pipeline_mode<synchronous>, transform_indices = @transform_1, window_bounds = array<i64: 9, 4, 4>}, {transform_indices = @transform_2, window_bounds = array<i64: 1, 8, 8, 4>}, {transform_indices = @transform_3, window_bounds = array<i64: 1, 8, 8, 4>}, {transform_indices = @transform_4, window_bounds = array<i64: 1, 1, 2, 4>}]} {
    %c0 = arith.constant 0 : index
    %c0_0 = arith.constant 0 : index
    %c0_1 = arith.constant 0 : index
    %c0_2 = arith.constant 0 : index
    %c0_3 = arith.constant 0 : index
    %0 = vector.load %arg2[%c0, %c0_0, %c0_1, %c0_2, %c0_3] : memref<1x1x18x32x4xbf16, #tpu.memory_space<vmem>>, vector<1x1x16x32x4xbf16>
    %1 = vector.shape_cast %0 : vector<1x1x16x32x4xbf16> to vector<16x32x4xbf16>
    %2 = vector.shape_cast %1 : vector<16x32x4xbf16> to vector<512x4xbf16>
    %c0_4 = arith.constant 0 : index
    %c0_5 = arith.constant 0 : index
    %c1 = arith.constant 1 : index
    %c0_6 = arith.constant 0 : index
    %c0_7 = arith.constant 0 : index
    %3 = vector.load %arg2[%c0_4, %c0_5, %c1, %c0_6, %c0_7] : memref<1x1x18x32x4xbf16, #tpu.memory_space<vmem>>, vector<1x1x16x32x4xbf16>
    %4 = vector.shape_cast %3 : vector<1x1x16x32x4xbf16> to vector<16x32x4xbf16>
    %5 = vector.shape_cast %4 : vector<16x32x4xbf16> to vector<512x4xbf16>
    %c0_8 = arith.constant 0 : index
    %c0_9 = arith.constant 0 : index
    %c2 = arith.constant 2 : index
    %c0_10 = arith.constant 0 : index
    %c0_11 = arith.constant 0 : index
    %6 = vector.load %arg2[%c0_8, %c0_9, %c2, %c0_10, %c0_11] : memref<1x1x18x32x4xbf16, #tpu.memory_space<vmem>>, vector<1x1x16x32x4xbf16>
    %7 = vector.shape_cast %6 : vector<1x1x16x32x4xbf16> to vector<16x32x4xbf16>
    %8 = vector.shape_cast %7 : vector<16x32x4xbf16> to vector<512x4xbf16>
    %c0_12 = arith.constant 0 : index
    %c0_13 = arith.constant 0 : index
    %c0_14 = arith.constant 0 : index
    %9 = vector.load %arg3[%c0_12, %c0_13, %c0_14] : memref<9x4x4xbf16, #tpu.memory_space<vmem>>, vector<1x4x4xbf16>
    %10 = vector.shape_cast %9 : vector<1x4x4xbf16> to vector<4x4xbf16>
    %cst = arith.constant dense<0.000000e+00> : vector<512x4xf32>
    %11 = tpu.matmul %2, %10, %cst {dimension_numbers = #tpu.dot_dimension_numbers<[1], [0], [0], [1], [0, 0, 1, 1], [], []>} : vector<512x4xbf16>, vector<4x4xbf16>, vector<512x4xf32> -> vector<512x4xf32>
    %c3 = arith.constant 3 : index
    %c0_15 = arith.constant 0 : index
    %c0_16 = arith.constant 0 : index
    %12 = vector.load %arg3[%c3, %c0_15, %c0_16] : memref<9x4x4xbf16, #tpu.memory_space<vmem>>, vector<1x4x4xbf16>
    %13 = vector.shape_cast %12 : vector<1x4x4xbf16> to vector<4x4xbf16>
    %cst_17 = arith.constant dense<0.000000e+00> : vector<512x4xf32>
    %14 = tpu.matmul %5, %13, %cst_17 {dimension_numbers = #tpu.dot_dimension_numbers<[1], [0], [0], [1], [0, 0, 1, 1], [], []>} : vector<512x4xbf16>, vector<4x4xbf16>, vector<512x4xf32> -> vector<512x4xf32>
    %15 = arith.addf %11, %14 : vector<512x4xf32>
    %c6 = arith.constant 6 : index
    %c0_18 = arith.constant 0 : index
    %c0_19 = arith.constant 0 : index
    %16 = vector.load %arg3[%c6, %c0_18, %c0_19] : memref<9x4x4xbf16, #tpu.memory_space<vmem>>, vector<1x4x4xbf16>
    %17 = vector.shape_cast %16 : vector<1x4x4xbf16> to vector<4x4xbf16>
    %cst_20 = arith.constant dense<0.000000e+00> : vector<512x4xf32>
    %18 = tpu.matmul %8, %17, %cst_20 {dimension_numbers = #tpu.dot_dimension_numbers<[1], [0], [0], [1], [0, 0, 1, 1], [], []>} : vector<512x4xbf16>, vector<4x4xbf16>, vector<512x4xf32> -> vector<512x4xf32>
    %19 = arith.addf %15, %18 : vector<512x4xf32>
    %c1_21 = arith.constant 1 : index
    %c0_22 = arith.constant 0 : index
    %c0_23 = arith.constant 0 : index
    %20 = vector.load %arg3[%c1_21, %c0_22, %c0_23] : memref<9x4x4xbf16, #tpu.memory_space<vmem>>, vector<1x4x4xbf16>
    %21 = vector.shape_cast %20 : vector<1x4x4xbf16> to vector<4x4xbf16>
    %cst_24 = arith.constant dense<0.000000e+00> : vector<512x4xf32>
    %22 = tpu.matmul %2, %21, %cst_24 {dimension_numbers = #tpu.dot_dimension_numbers<[1], [0], [0], [1], [0, 0, 1, 1], [], []>} : vector<512x4xbf16>, vector<4x4xbf16>, vector<512x4xf32> -> vector<512x4xf32>
    %c4 = arith.constant 4 : index
    %c0_25 = arith.constant 0 : index
    %c0_26 = arith.constant 0 : index
    %23 = vector.load %arg3[%c4, %c0_25, %c0_26] : memref<9x4x4xbf16, #tpu.memory_space<vmem>>, vector<1x4x4xbf16>
    %24 = vector.shape_cast %23 : vector<1x4x4xbf16> to vector<4x4xbf16>
    %cst_27 = arith.constant dense<0.000000e+00> : vector<512x4xf32>
    %25 = tpu.matmul %5, %24, %cst_27 {dimension_numbers = #tpu.dot_dimension_numbers<[1], [0], [0], [1], [0, 0, 1, 1], [], []>} : vector<512x4xbf16>, vector<4x4xbf16>, vector<512x4xf32> -> vector<512x4xf32>
    %26 = arith.addf %22, %25 : vector<512x4xf32>
    %c7 = arith.constant 7 : index
    %c0_28 = arith.constant 0 : index
    %c0_29 = arith.constant 0 : index
    %27 = vector.load %arg3[%c7, %c0_28, %c0_29] : memref<9x4x4xbf16, #tpu.memory_space<vmem>>, vector<1x4x4xbf16>
    %28 = vector.shape_cast %27 : vector<1x4x4xbf16> to vector<4x4xbf16>
    %cst_30 = arith.constant dense<0.000000e+00> : vector<512x4xf32>
    %29 = tpu.matmul %8, %28, %cst_30 {dimension_numbers = #tpu.dot_dimension_numbers<[1], [0], [0], [1], [0, 0, 1, 1], [], []>} : vector<512x4xbf16>, vector<4x4xbf16>, vector<512x4xf32> -> vector<512x4xf32>
    %30 = arith.addf %26, %29 : vector<512x4xf32>
    %c511_i32 = arith.constant 511 : i32
    %31 = tpu.dynamic_rotate %30 by %c511_i32 dim 0 : vector<512x4xf32>, i32 -> vector<512x4xf32>
    %32 = arith.addf %19, %31 : vector<512x4xf32>
    %c2_31 = arith.constant 2 : index
    %c0_32 = arith.constant 0 : index
    %c0_33 = arith.constant 0 : index
    %33 = vector.load %arg3[%c2_31, %c0_32, %c0_33] : memref<9x4x4xbf16, #tpu.memory_space<vmem>>, vector<1x4x4xbf16>
    %34 = vector.shape_cast %33 : vector<1x4x4xbf16> to vector<4x4xbf16>
    %cst_34 = arith.constant dense<0.000000e+00> : vector<512x4xf32>
    %35 = tpu.matmul %2, %34, %cst_34 {dimension_numbers = #tpu.dot_dimension_numbers<[1], [0], [0], [1], [0, 0, 1, 1], [], []>} : vector<512x4xbf16>, vector<4x4xbf16>, vector<512x4xf32> -> vector<512x4xf32>
    %c5 = arith.constant 5 : index
    %c0_35 = arith.constant 0 : index
    %c0_36 = arith.constant 0 : index
    %36 = vector.load %arg3[%c5, %c0_35, %c0_36] : memref<9x4x4xbf16, #tpu.memory_space<vmem>>, vector<1x4x4xbf16>
    %37 = vector.shape_cast %36 : vector<1x4x4xbf16> to vector<4x4xbf16>
    %cst_37 = arith.constant dense<0.000000e+00> : vector<512x4xf32>
    %38 = tpu.matmul %5, %37, %cst_37 {dimension_numbers = #tpu.dot_dimension_numbers<[1], [0], [0], [1], [0, 0, 1, 1], [], []>} : vector<512x4xbf16>, vector<4x4xbf16>, vector<512x4xf32> -> vector<512x4xf32>
    %39 = arith.addf %35, %38 : vector<512x4xf32>
    %c8 = arith.constant 8 : index
    %c0_38 = arith.constant 0 : index
    %c0_39 = arith.constant 0 : index
    %40 = vector.load %arg3[%c8, %c0_38, %c0_39] : memref<9x4x4xbf16, #tpu.memory_space<vmem>>, vector<1x4x4xbf16>
    %41 = vector.shape_cast %40 : vector<1x4x4xbf16> to vector<4x4xbf16>
    %cst_40 = arith.constant dense<0.000000e+00> : vector<512x4xf32>
    %42 = tpu.matmul %8, %41, %cst_40 {dimension_numbers = #tpu.dot_dimension_numbers<[1], [0], [0], [1], [0, 0, 1, 1], [], []>} : vector<512x4xbf16>, vector<4x4xbf16>, vector<512x4xf32> -> vector<512x4xf32>
    %43 = arith.addf %39, %42 : vector<512x4xf32>
    %c510_i32 = arith.constant 510 : i32
    %44 = tpu.dynamic_rotate %43 by %c510_i32 dim 0 : vector<512x4xf32>, i32 -> vector<512x4xf32>
    %45 = arith.addf %32, %44 : vector<512x4xf32>
    %46 = vector.shape_cast %45 : vector<512x4xf32> to vector<16x32x4xf32>
    %47 = tpu.iota {dimensions = array<i32: 1>} : vector<16x32x4xi32>
    %c16_i32 = arith.constant 16 : i32
    %48 = vector.broadcast %c16_i32 : i32 to vector<16x32x4xi32>
    %49 = arith.cmpi slt, %47, %48 : vector<16x32x4xi32>
    %cst_41 = arith.constant 0.000000e+00 : f32
    %50 = vector.broadcast %cst_41 : f32 to vector<16x32x4xf32>
    %51 = arith.select %49, %46, %50 : vector<16x32x4xi1>, vector<16x32x4xf32>
    %52 = vector.shape_cast %51 : vector<16x32x4xf32> to vector<512x4xf32>
    %cst_42 = arith.constant dense<0.000000e+00> : vector<4xf32>
    %53 = vector.multi_reduction <add>, %52, %cst_42 [0] : vector<512x4xf32> to vector<4xf32>
    %54 = vector.shape_cast %53 : vector<4xf32> to vector<1x4xf32>
    %c0_43 = arith.constant 0 : index
    %c0_44 = arith.constant 0 : index
    %c0_45 = arith.constant 0 : index
    %c0_46 = arith.constant 0 : index
    %55 = vector.load %arg6[%c0_43, %c0_44, %c0_45, %c0_46] : memref<1x1x2x4xf32, #tpu.memory_space<vmem>>, vector<1x1x1x4xf32>
    %56 = vector.shape_cast %55 : vector<1x1x1x4xf32> to vector<1x4xf32>
    %57 = vector.shape_cast %54 : vector<1x4xf32> to vector<1x1x1x4xf32>
    tpu.vector_store %arg6[%c0_43, %c0_44, %c0_45, %c0_46], %57 {strides = array<i32>} : memref<1x1x2x4xf32, #tpu.memory_space<vmem>>, vector<1x1x1x4xf32>,
    %58 = arith.mulf %52, %52 : vector<512x4xf32>
    %cst_47 = arith.constant dense<0.000000e+00> : vector<4xf32>
    %59 = vector.multi_reduction <add>, %58, %cst_47 [0] : vector<512x4xf32> to vector<4xf32>
    %60 = vector.shape_cast %59 : vector<4xf32> to vector<1x4xf32>
    %c0_48 = arith.constant 0 : index
    %c0_49 = arith.constant 0 : index
    %c1_50 = arith.constant 1 : index
    %c0_51 = arith.constant 0 : index
    %61 = vector.load %arg6[%c0_48, %c0_49, %c1_50, %c0_51] : memref<1x1x2x4xf32, #tpu.memory_space<vmem>>, vector<1x1x1x4xf32>
    %62 = vector.shape_cast %61 : vector<1x1x1x4xf32> to vector<1x4xf32>
    %63 = vector.shape_cast %60 : vector<1x4xf32> to vector<1x1x1x4xf32>
    tpu.vector_store %arg6[%c0_48, %c0_49, %c1_50, %c0_51], %63 {strides = array<i32>} : memref<1x1x2x4xf32, #tpu.memory_space<vmem>>, vector<1x1x1x4xf32>,
    %64 = vector.shape_cast %45 : vector<512x4xf32> to vector<8x2x32x4xf32>
    %cst_52 = arith.constant dense<0xFF800000> : vector<8x32x4xf32>
    %65 = vector.multi_reduction <maximumf>, %64, %cst_52 [1] : vector<8x2x32x4xf32> to vector<8x32x4xf32>
    %c0_53 = arith.constant 0 : index
    %c0_54 = arith.constant 0 : index
    %c0_55 = arith.constant 0 : index
    %66 = vector.load %arg7[%c0_53, %c0_54, %c0_55] : memref<8x32x4xf32, #tpu.memory_space<vmem>>, vector<8x32x4xf32>
    tpu.vector_store %arg7[%c0_53, %c0_54, %c0_55], %65 {strides = array<i32>} : memref<8x32x4xf32, #tpu.memory_space<vmem>>, vector<8x32x4xf32>,
    %cst_56 = arith.constant dense<0x7F800000> : vector<8x32x4xf32>
    %67 = vector.multi_reduction <minimumf>, %64, %cst_56 [1] : vector<8x2x32x4xf32> to vector<8x32x4xf32>
    %c0_57 = arith.constant 0 : index
    %c0_58 = arith.constant 0 : index
    %c0_59 = arith.constant 0 : index
    %68 = vector.load %arg8[%c0_57, %c0_58, %c0_59] : memref<8x32x4xf32, #tpu.memory_space<vmem>>, vector<8x32x4xf32>
    tpu.vector_store %arg8[%c0_57, %c0_58, %c0_59], %67 {strides = array<i32>} : memref<8x32x4xf32, #tpu.memory_space<vmem>>, vector<8x32x4xf32>,
    %c0_60 = arith.constant 0 : index
    %c0_61 = arith.constant 0 : index
    %c0_62 = arith.constant 0 : index
    %69 = tpu.strided_load %arg7[%c0_60, %c0_61, %c0_62] {strides = array<i32: 1, 2, 1>} : memref<8x32x4xf32, #tpu.memory_space<vmem>>, vector<8x8x4xf32>
    %c0_63 = arith.constant 0 : index
    %c0_64 = arith.constant 0 : index
    %c0_65 = arith.constant 0 : index
    %70 = tpu.strided_load %arg8[%c0_63, %c0_64, %c0_65] {strides = array<i32: 1, 2, 1>} : memref<8x32x4xf32, #tpu.memory_space<vmem>>, vector<8x8x4xf32>
    %c0_66 = arith.constant 0 : index
    %c1_67 = arith.constant 1 : index
    %c0_68 = arith.constant 0 : index
    %71 = tpu.strided_load %arg7[%c0_66, %c1_67, %c0_68] {strides = array<i32: 1, 2, 1>} : memref<8x32x4xf32, #tpu.memory_space<vmem>>, vector<8x8x4xf32>
    %72 = arith.maximumf %69, %71 : vector<8x8x4xf32>
    %c0_69 = arith.constant 0 : index
    %c1_70 = arith.constant 1 : index
    %c0_71 = arith.constant 0 : index
    %73 = tpu.strided_load %arg8[%c0_69, %c1_70, %c0_71] {strides = array<i32: 1, 2, 1>} : memref<8x32x4xf32, #tpu.memory_space<vmem>>, vector<8x8x4xf32>
    %74 = arith.minimumf %70, %73 : vector<8x8x4xf32>
    %c0_72 = arith.constant 0 : index
    %c0_73 = arith.constant 0 : index
    %c0_74 = arith.constant 0 : index
    %c0_75 = arith.constant 0 : index
    %75 = vector.load %arg4[%c0_72, %c0_73, %c0_74, %c0_75] : memref<1x8x8x4xf32, #tpu.memory_space<vmem>>, vector<1x8x8x4xf32>
    %76 = vector.shape_cast %75 : vector<1x8x8x4xf32> to vector<8x8x4xf32>
    %77 = vector.shape_cast %72 : vector<8x8x4xf32> to vector<1x8x8x4xf32>
    tpu.vector_store %arg4[%c0_72, %c0_73, %c0_74, %c0_75], %77 {strides = array<i32>} : memref<1x8x8x4xf32, #tpu.memory_space<vmem>>, vector<1x8x8x4xf32>,
    %c0_76 = arith.constant 0 : index
    %c0_77 = arith.constant 0 : index
    %c0_78 = arith.constant 0 : index
    %c0_79 = arith.constant 0 : index
    %78 = vector.load %arg5[%c0_76, %c0_77, %c0_78, %c0_79] : memref<1x8x8x4xf32, #tpu.memory_space<vmem>>, vector<1x8x8x4xf32>
    %79 = vector.shape_cast %78 : vector<1x8x8x4xf32> to vector<8x8x4xf32>
    %80 = vector.shape_cast %74 : vector<8x8x4xf32> to vector<1x8x8x4xf32>
    tpu.vector_store %arg5[%c0_76, %c0_77, %c0_78, %c0_79], %80 {strides = array<i32>} : memref<1x8x8x4xf32, #tpu.memory_space<vmem>>, vector<1x8x8x4xf32>,
    return
  }
  func.func @transform_0(%arg0: i32, %arg1: i32) -> (i32, i32, i32, i32, i32) {
    %c0_i32 = arith.constant 0 : i32
    %c0_i32_0 = arith.constant 0 : i32
    %c0_i32_1 = arith.constant 0 : i32
    %c0_i32_2 = arith.constant 0 : i32
    return %arg0, %arg1, %c0_i32, %c0_i32_0, %c0_i32_1 : i32, i32, i32, i32, i32
  }
  func.func @transform_1(%arg0: i32, %arg1: i32) -> (i32, i32, i32) {
    %c0_i32 = arith.constant 0 : i32
    %c0_i32_0 = arith.constant 0 : i32
    %c0_i32_1 = arith.constant 0 : i32
    %c0_i32_2 = arith.constant 0 : i32
    return %c0_i32, %c0_i32_0, %c0_i32_1 : i32, i32, i32
  }
  func.func @transform_2(%arg0: i32, %arg1: i32) -> (i32, i32, i32, i32) {
    %c0_i32 = arith.constant 0 : i32
    %c0_i32_0 = arith.constant 0 : i32
    %c0_i32_1 = arith.constant 0 : i32
    return %arg0, %arg1, %c0_i32, %c0_i32_0 : i32, i32, i32, i32
  }
  func.func @transform_3(%arg0: i32, %arg1: i32) -> (i32, i32, i32, i32) {
    %c0_i32 = arith.constant 0 : i32
    %c0_i32_0 = arith.constant 0 : i32
    %c0_i32_1 = arith.constant 0 : i32
    return %arg0, %arg1, %c0_i32, %c0_i32_0 : i32, i32, i32, i32
  }
  func.func @transform_4(%arg0: i32, %arg1: i32) -> (i32, i32, i32, i32) {
    %c0_i32 = arith.constant 0 : i32
    %c0_i32_0 = arith.constant 0 : i32
    %c0_i32_1 = arith.constant 0 : i32
    return %arg0, %arg1, %c0_i32, %c0_i32_0 : i32, i32, i32, i32
  }
}

module attributes {stable_mosaic.version = 11 : i64} {
  func.func @_bn_select_relu_kernel(%arg0: i32, %arg1: i32, %arg2: memref<1x8x8x4xf32, #tpu.memory_space<vmem>>, %arg3: memref<1x8x8x4xf32, #tpu.memory_space<vmem>>, %arg4: memref<2x4xf32, #tpu.memory_space<vmem>>, %arg5: memref<1x8x8x4xf32, #tpu.memory_space<vmem>>) attributes {dimension_semantics = [#tpu.dimension_semantics<parallel>, #tpu.dimension_semantics<parallel>], iteration_bounds = array<i64: 2, 1>, scalar_prefetch = 0 : i64, scratch_operands = 0 : i64, tpu.core_type = #tpu.core_type<tc>, window_params = [{transform_indices = @transform_0, window_bounds = array<i64: 1, 8, 8, 4>}, {transform_indices = @transform_1, window_bounds = array<i64: 1, 8, 8, 4>}, {pipeline_mode = #tpu.pipeline_mode<synchronous>, transform_indices = @transform_2, window_bounds = array<i64: 2, 4>}, {transform_indices = @transform_3, window_bounds = array<i64: 1, 8, 8, 4>}]} {
    %c0 = arith.constant 0 : index
    %c0_0 = arith.constant 0 : index
    %0 = vector.load %arg4[%c0, %c0_0] : memref<2x4xf32, #tpu.memory_space<vmem>>, vector<1x4xf32>
    %1 = vector.shape_cast %0 : vector<1x4xf32> to vector<1x1x4xf32>
    %c1 = arith.constant 1 : index
    %c0_1 = arith.constant 0 : index
    %2 = vector.load %arg4[%c1, %c0_1] : memref<2x4xf32, #tpu.memory_space<vmem>>, vector<1x4xf32>
    %3 = vector.shape_cast %2 : vector<1x4xf32> to vector<1x1x4xf32>
    %cst = arith.constant 0.000000e+00 : f32
    %4 = vector.broadcast %cst : f32 to vector<1x1x4xf32>
    %5 = arith.cmpf oge, %1, %4 : vector<1x1x4xf32>
    %c0_2 = arith.constant 0 : index
    %c0_3 = arith.constant 0 : index
    %c0_4 = arith.constant 0 : index
    %c0_5 = arith.constant 0 : index
    %6 = vector.load %arg2[%c0_2, %c0_3, %c0_4, %c0_5] : memref<1x8x8x4xf32, #tpu.memory_space<vmem>>, vector<1x8x8x4xf32>
    %7 = vector.shape_cast %6 : vector<1x8x8x4xf32> to vector<8x8x4xf32>
    %c0_6 = arith.constant 0 : index
    %c0_7 = arith.constant 0 : index
    %c0_8 = arith.constant 0 : index
    %c0_9 = arith.constant 0 : index
    %8 = vector.load %arg3[%c0_6, %c0_7, %c0_8, %c0_9] : memref<1x8x8x4xf32, #tpu.memory_space<vmem>>, vector<1x8x8x4xf32>
    %9 = vector.shape_cast %8 : vector<1x8x8x4xf32> to vector<8x8x4xf32>
    %10 = vector.shape_cast %5 : vector<1x1x4xi1> to vector<1x1x4xi1>
    %11 = vector.broadcast %10 : vector<1x1x4xi1> to vector<8x8x4xi1>
    %12 = arith.select %11, %7, %9 : vector<8x8x4xi1>, vector<8x8x4xf32>
    %13 = vector.broadcast %1 : vector<1x1x4xf32> to vector<8x8x4xf32>
    %14 = arith.mulf %12, %13 : vector<8x8x4xf32>
    %15 = vector.broadcast %3 : vector<1x1x4xf32> to vector<8x8x4xf32>
    %16 = arith.addf %14, %15 : vector<8x8x4xf32>
    %cst_10 = arith.constant 0.000000e+00 : f32
    %17 = vector.broadcast %cst_10 : f32 to vector<8x8x4xf32>
    %18 = arith.maximumf %16, %17 : vector<8x8x4xf32>
    %c0_11 = arith.constant 0 : index
    %c0_12 = arith.constant 0 : index
    %c0_13 = arith.constant 0 : index
    %c0_14 = arith.constant 0 : index
    %19 = vector.load %arg5[%c0_11, %c0_12, %c0_13, %c0_14] : memref<1x8x8x4xf32, #tpu.memory_space<vmem>>, vector<1x8x8x4xf32>
    %20 = vector.shape_cast %19 : vector<1x8x8x4xf32> to vector<8x8x4xf32>
    %21 = vector.shape_cast %18 : vector<8x8x4xf32> to vector<1x8x8x4xf32>
    tpu.vector_store %arg5[%c0_11, %c0_12, %c0_13, %c0_14], %21 {strides = array<i32>} : memref<1x8x8x4xf32, #tpu.memory_space<vmem>>, vector<1x8x8x4xf32>,
    return
  }
  func.func @transform_0(%arg0: i32, %arg1: i32) -> (i32, i32, i32, i32) {
    %c0_i32 = arith.constant 0 : i32
    %c0_i32_0 = arith.constant 0 : i32
    %c0_i32_1 = arith.constant 0 : i32
    return %arg0, %arg1, %c0_i32, %c0_i32_0 : i32, i32, i32, i32
  }
  func.func @transform_1(%arg0: i32, %arg1: i32) -> (i32, i32, i32, i32) {
    %c0_i32 = arith.constant 0 : i32
    %c0_i32_0 = arith.constant 0 : i32
    %c0_i32_1 = arith.constant 0 : i32
    return %arg0, %arg1, %c0_i32, %c0_i32_0 : i32, i32, i32, i32
  }
  func.func @transform_2(%arg0: i32, %arg1: i32) -> (i32, i32) {
    %c0_i32 = arith.constant 0 : i32
    %c0_i32_0 = arith.constant 0 : i32
    %c0_i32_1 = arith.constant 0 : i32
    return %c0_i32, %c0_i32_0 : i32, i32
  }
  func.func @transform_3(%arg0: i32, %arg1: i32) -> (i32, i32, i32, i32) {
    %c0_i32 = arith.constant 0 : i32
    %c0_i32_0 = arith.constant 0 : i32
    %c0_i32_1 = arith.constant 0 : i32
    return %arg0, %arg1, %c0_i32, %c0_i32_0 : i32, i32, i32, i32
  }
}

</mosaic_0001>

<llo_original>
// kernel: down_crfb.3
$region0: #{down_crfb.3}
  #allocation0 [shape = 'u32[]', space=smem, size = 0x4, offset = 0x4, fixed_abs, tag = 'smem constant byte address 0x4 - core index']
  #allocation1 [shape = 'u32[144,128]{1,0:T(1,128)}', space=vmem, size = 0x12000, scoped, tag = 'internal scratch']
  %s0 = inlined_call_operand.vmem [shape: f32[2,8,8,4], index: 0, kind: input, shape index: {}]
  %s1 = inlined_call_operand.vmem [shape: f32[2,8,8,4], index: 1, kind: input, shape index: {}]
  %s2 = inlined_call_operand.vmem [shape: f32[2,4], index: 2, kind: input, shape index: {}]
  %s3 = inlined_call_operand.vmem [shape: f32[2,8,8,4], index: 3, kind: output, shape index: {}]
  %s4 = sld [smem:[#allocation0]]
  $region45: #{down_crfb.3} parent=0
    _
  %s6 = ssub.s32 1, %s4
  %s7 = scalar_select 0, %s6, %s4
  loop: start=0, step=1, limit=4
  $region2: #{down_crfb.3} parent=0 // loop_pre_header
    _
  $region3: #{down_crfb.3} parent=0 // loop_header
    %s9 = sphi 0, %s13
    %p10 = scmp.ge.s32.totalorder %s9, 4
    %s16 = sphi 0, %s28
    %s17 = sphi 0, %s24
    %s18 = sphi 0, %s16
    %s19 = sphi 0, %s17
    %s20 = sphi 0, %s18
    %s21 = sphi 0, %s19
    %s33 = sphi 0, %s35
    %s36 = sphi 0, %s33
    %s37 = sphi 0, %s36
    %s53 = sphi 0, %s37
    %s61 = sphi 0, %s63
    %s64 = sphi 0, %s61
    %s65 = sphi 0, %s64
    %s81 = sphi 0, %s65
    %s85 = sphi 0, %s85
    %s87 = sphi 0, %s85
    %s88 = sphi 0, %s87
    %s102 = sphi 0, %s88
    %s110 = sphi 0, %s112
    %s113 = sphi 0, %s110
    %s114 = sphi 0, %s113
    %s130 = sphi 0, %s114
  $region4: #{down_crfb.3} parent=0 // loop_header_branch
    %12 = sbr.rel (%p10) target = $region8
  $region5: #{down_crfb.3} parent=0 // loop_body
    %s14 = ssub.s32 %s9, 1
    %s15 = ssub.s32 %s9, 2
    %s22 = sadd.s32 1, %s17
    %p23 = scmp.ge.s32.totalorder %s22, 1
    %s24 = scalar_select %p23, 0, %s22
    %s25 = sadd.s32 1, %s16
    %s26 = scalar_select %p23, %s25, %s16
    %p27 = scmp.ge.s32.totalorder %s26, 2
    %s28 = scalar_select %p27, 0, %s26
    %s29 = ssub.s32 %s16, %s28
    %s30 = ssub.s32 %s17, %s24
    %s31 = sor.u32 %s29, %s30
    %p32 = scmp.eq.s32.totalorder %s31, 0
    %s34 = sadd.s32 %s33, 1
    %s35 = scalar_select %p32, %s33, %s34
    %p38 = pneg %p32
    %p39 = scmp.eq.s32.totalorder %s9, 1
    %p40 = por %p38, %p39
    %p41 = scmp.ne.s32.totalorder %s33, %s36
    %p42 = scmp.eq.s32.totalorder %s9, 0
    %p43 = por %p41, %p42
    %p44 = scmp.ne.s32.totalorder %s33, %s36
    %p45 = scmp.eq.s32.totalorder %s14, 1
    %p46 = por %p44, %p45
    %p47 = scmp.ne.s32.totalorder %s36, %s37
    %p48 = scmp.eq.s32.totalorder %s14, 0
    %p49 = por %p47, %p48
    %p50 = scmp.ne.s32.totalorder %s36, %s37
    %p51 = scmp.eq.s32.totalorder %s15, 1
    %p52 = por %p50, %p51
    %p54 = scmp.ne.s32.totalorder %s37, %s53
    %p55 = scmp.eq.s32.totalorder %s15, 0
    %p56 = por %p54, %p55
    %s57 = ssub.s32 %s16, %s28
    %s58 = ssub.s32 %s17, %s24
    %s59 = sor.u32 %s57, %s58
    %p60 = scmp.eq.s32.totalorder %s59, 0
    %s62 = sadd.s32 %s61, 1
    %s63 = scalar_select %p60, %s61, %s62
    %p66 = pneg %p60
    %p67 = scmp.eq.s32.totalorder %s9, 1
    %p68 = por %p66, %p67
    %p69 = scmp.ne.s32.totalorder %s61, %s64
    %p70 = scmp.eq.s32.totalorder %s9, 0
    %p71 = por %p69, %p70
    %p72 = scmp.ne.s32.totalorder %s61, %s64
    %p73 = scmp.eq.s32.totalorder %s14, 1
    %p74 = por %p72, %p73
    %p75 = scmp.ne.s32.totalorder %s64, %s65
    %p76 = scmp.eq.s32.totalorder %s14, 0
    %p77 = por %p75, %p76
    %p78 = scmp.ne.s32.totalorder %s64, %s65
    %p79 = scmp.eq.s32.totalorder %s15, 1
    %p80 = por %p78, %p79
    %p82 = scmp.ne.s32.totalorder %s65, %s81
    %p83 = scmp.eq.s32.totalorder %s15, 0
    %p84 = por %p82, %p83
    %s86 = sadd.s32 %s85, 1
    %p89 = scmp.eq.s32.totalorder %s9, 1
    %p90 = scmp.ne.s32.totalorder %s85, %s87
    %p91 = scmp.eq.s32.totalorder %s9, 0
    %p92 = por %p90, %p91
    %p93 = scmp.ne.s32.totalorder %s85, %s87
    %p94 = scmp.eq.s32.totalorder %s14, 1
    %p95 = por %p93, %p94
    %p96 = scmp.ne.s32.totalorder %s87, %s88
    %p97 = scmp.eq.s32.totalorder %s14, 0
    %p98 = por %p96, %p97
    %p99 = scmp.ne.s32.totalorder %s87, %s88
    %p100 = scmp.eq.s32.totalorder %s15, 1
    %p101 = por %p99, %p100
    %p103 = scmp.ne.s32.totalorder %s88, %s102
    %p104 = scmp.eq.s32.totalorder %s15, 0
    %p105 = por %p103, %p104
    %s106 = ssub.s32 %s16, %s28
    %s107 = ssub.s32 %s17, %s24
    %s108 = sor.u32 %s106, %s107
    %p109 = scmp.eq.s32.totalorder %s108, 0
    %s111 = sadd.s32 %s110, 1
    %s112 = scalar_select %p109, %s110, %s111
    %p115 = pneg %p109
    %p116 = scmp.eq.s32.totalorder %s9, 1
    %p117 = por %p115, %p116
    %p118 = scmp.ne.s32.totalorder %s110, %s113
    %p119 = scmp.eq.s32.totalorder %s9, 0
    %p120 = por %p118, %p119
    %p121 = scmp.ne.s32.totalorder %s110, %s113
    %p122 = scmp.eq.s32.totalorder %s14, 1
    %p123 = por %p121, %p122
    %p124 = scmp.ne.s32.totalorder %s113, %s114
    %p125 = scmp.eq.s32.totalorder %s14, 0
    %p126 = por %p124, %p125
    %p127 = scmp.ne.s32.totalorder %s113, %s114
    %p128 = scmp.eq.s32.totalorder %s15, 1
    %p129 = por %p127, %p128
    %p131 = scmp.ne.s32.totalorder %s114, %s130
    %p132 = scmp.eq.s32.totalorder %s15, 0
    %p133 = por %p131, %p132
    %p134 = scmp.le.s32.totalorder 1, %s9
    %p135 = scmp.lt.s32.totalorder %s9, 3
    %p136 = pnand %p134, %p135
    %p137 = pneg %p136
    // Predicated region
    $region9: #{down_crfb.3} parent=5 // pred_check
      _
    $region10: #{down_crfb.3} parent=5 // pred_check_branch
      %139 = sbr.rel (%p136) target = $region12
    $region11: #{down_crfb.3} parent=5 // pred_region
      %s140 = ssub.s32 %s9, 1
      // Predicated region
      $region13: #{down_crfb.3} parent=11 // pred_check
        %p141 = pneg %p98
      $region14: #{down_crfb.3} parent=11 // pred_check_branch
        %143 = sbr.rel (%p141) target = $region16
      $region15: #{down_crfb.3} parent=11 // pred_region
        _
      $region16: #{down_crfb.3} parent=11 // pred_fallthru
        _
    $region12: #{down_crfb.3} parent=5 // pred_fallthru
      _
    %p144 = scmp.lt.s32.totalorder %s9, 2
    // Predicated region
    $region17: #{down_crfb.3} parent=5 // pred_check
      %p145 = pneg %p144
    $region18: #{down_crfb.3} parent=5 // pred_check_branch
      %147 = sbr.rel (%p145) target = $region20
    $region19: #{down_crfb.3} parent=5 // pred_region
      // Predicated region
      $region21: #{down_crfb.3} parent=19 // pred_check
        %p148 = pneg %p43
      $region22: #{down_crfb.3} parent=19 // pred_check_branch
        %150 = sbr.rel (%p148) target = $region24
      $region23: #{down_crfb.3} parent=19 // pred_region
        %s151 = smul.u32 8, %s17
        %p152 = scmp.lt.s32.totalorder %s16, 1
        %s153 = scalar_select %p152, %s16, 1
        %p154 = scmp.lt.s32.totalorder %s151, 7
        %s155 = scalar_select %p154, %s151, 7
        %s156 = smul.addr %s153, 8
        %s157 = sadd.s32 %s155, %s156
        %s158 = smul.addr %s157, 8
        %s159 = scalar_lea.vmem %s0, %s158
        %s160 = smul.u32 8, %s17
      $region24: #{down_crfb.3} parent=19 // pred_fallthru
        _
      // Predicated region
      $region25: #{down_crfb.3} parent=19 // pred_check
        %p161 = pneg %p71
      $region26: #{down_crfb.3} parent=19 // pred_check_branch
        %163 = sbr.rel (%p161) target = $region28
      $region27: #{down_crfb.3} parent=19 // pred_region
        %s164 = smul.u32 8, %s17
        %p165 = scmp.lt.s32.totalorder %s16, 1
        %s166 = scalar_select %p165, %s16, 1
        %p167 = scmp.lt.s32.totalorder %s164, 7
        %s168 = scalar_select %p167, %s164, 7
        %s169 = smul.addr %s166, 8
        %s170 = sadd.s32 %s168, %s169
        %s171 = smul.addr %s170, 8
        %s172 = scalar_lea.vmem %s1, %s171
        %s173 = smul.u32 8, %s17
      $region28: #{down_crfb.3} parent=19 // pred_fallthru
        _
    $region20: #{down_crfb.3} parent=5 // pred_fallthru
      _
    %p174 = scmp.le.s32.totalorder 1, %s9
    %p175 = scmp.lt.s32.totalorder %s9, 3
    %p176 = pnand %p174, %p175
    %p177 = pneg %p176
    // Predicated region
    $region29: #{down_crfb.3} parent=5 // pred_check
      _
    $region30: #{down_crfb.3} parent=5 // pred_check_branch
      %179 = sbr.rel (%p176) target = $region32
    $region31: #{down_crfb.3} parent=5 // pred_region
      %s180 = ssub.s32 %s9, 1
      %s181 = smul.u32 8, %s19
      %p182 = scmp.lt.s32.totalorder %s18, 1
      %s183 = scalar_select %p182, %s18, 1
      %p184 = scmp.lt.s32.totalorder %s181, 7
      %s185 = scalar_select %p184, %s181, 7
      %s186 = smul.addr %s183, 8
      %s187 = sadd.s32 %s185, %s186
      %s188 = smul.addr %s187, 8
      %s189 = scalar_lea.vmem %s0, %s188
      %p190 = pneg %p49
      %p191 = pneg %p46
      %s192 = smul.u32 8, %s19
      %p193 = scmp.lt.s32.totalorder %s18, 1
      %s194 = scalar_select %p193, %s18, 1
      %p195 = scmp.lt.s32.totalorder %s192, 7
      %s196 = scalar_select %p195, %s192, 7
      %s197 = smul.addr %s194, 8
      %s198 = sadd.s32 %s196, %s197
      %s199 = smul.addr %s198, 8
      %s200 = scalar_lea.vmem %s1, %s199
      %p201 = pneg %p77
      %p202 = pneg %p74
      %p203 = pneg %p98
      %p204 = pneg %p95
      %p205 = pneg %p126
      %p206 = pneg %p123
      %s207 = smul.u32 8, %s19
      %p208 = scmp.lt.s32.totalorder %s18, 1
      %s209 = scalar_select %p208, %s18, 1
      %p210 = scmp.lt.s32.totalorder %s207, 7
      %s211 = scalar_select %p210, %s207, 7
      %s212 = smul.addr %s209, 8
      %s213 = sadd.s32 %s211, %s212
      %s214 = smul.addr %s213, 8
      %s215 = scalar_lea.vmem %s3, %s214
      %s216 = smul.u32 8, %s19
      %p217 = scmp.lt.s32.totalorder %s18, 1
      %s218 = scalar_select %p217, %s18, 1
      %p219 = scmp.lt.s32.totalorder %s216, 7
      %s220 = scalar_select %p219, %s216, 7
      %s221 = smul.addr %s218, 8
      %s222 = sadd.s32 %s220, %s221
      %s223 = smul.addr %s222, 8
      %s224 = scalar_lea.vmem %s0, %s223
      %s225 = smul.u32 8, %s19
      %s226 = smul.u32 8, %s19
      %p227 = scmp.lt.s32.totalorder %s18, 1
      %s228 = scalar_select %p227, %s18, 1
      %p229 = scmp.lt.s32.totalorder %s226, 7
      %s230 = scalar_select %p229, %s226, 7
      %s231 = smul.addr %s228, 8
      %s232 = sadd.s32 %s230, %s231
      %s233 = smul.addr %s232, 8
      %s234 = scalar_lea.vmem %s1, %s233
      %s235 = smul.u32 8, %s19
      %s236 = smul.u32 8, %s19
      %p237 = scmp.lt.s32.totalorder %s18, 1
      %s238 = scalar_select %p237, %s18, 1
      %p239 = scmp.lt.s32.totalorder %s236, 7
      %s240 = scalar_select %p239, %s236, 7
      %s241 = smul.addr %s238, 8
      %s242 = sadd.s32 %s240, %s241
      %s243 = smul.addr %s242, 8
      %s244 = scalar_lea.vmem %s3, %s243
      %s245 = smul.u32 8, %s19
      %v246 = vld [vmem:[%s2] sm:$0x1]
      %v247 = vld [vmem:[%s2 + $0x1] sm:$0x1]
      %vm248 = vcmp.ge.f32.partialorder %v246, 0.0
      %v249 = vld [vmem:[%s224] sm:$0xff]
      %v250 = vld [vmem:[%s224 + $0x8] sm:$0xff]
      %v251 = vld [vmem:[%s224 + $0x10] sm:$0xff]
      %v252 = vld [vmem:[%s224 + $0x18] sm:$0xff]
      %v253 = vld [vmem:[%s224 + $0x20] sm:$0xff]
      %v254 = vld [vmem:[%s224 + $0x28] sm:$0xff]
      %v255 = vld [vmem:[%s224 + $0x30] sm:$0xff]
      %v256 = vld [vmem:[%s224 + $0x38] sm:$0xff]
      %v257 = vld [vmem:[%s234] sm:$0xff]
      %v258 = vld [vmem:[%s234 + $0x8] sm:$0xff]
      %v259 = vld [vmem:[%s234 + $0x10] sm:$0xff]
      %v260 = vld [vmem:[%s234 + $0x18] sm:$0xff]
      %v261 = vld [vmem:[%s234 + $0x20] sm:$0xff]
      %v262 = vld [vmem:[%s234 + $0x28] sm:$0xff]
      %v263 = vld [vmem:[%s234 + $0x30] sm:$0xff]
      %v264 = vld [vmem:[%s234 + $0x38] sm:$0xff]
      %v265 = vsel %vm248, 1, 0
      %v266 = vlaneseq
      %v267 = vshrl.u32 %v266, 7
      %v268 = vsub.s32 0, %v267
      %v269 = vrot.slane %v265, %v268
      %vm270 = vcmp.eq.s32.totalorder %v269, 1
      %v271 = vsel %vm270, %v249, %v257
      %v272 = vsel %vm270, %v250, %v258
      %v273 = vsel %vm270, %v251, %v259
      %v274 = vsel %vm270, %v252, %v260
      %v275 = vsel %vm270, %v253, %v261
      %v276 = vsel %vm270, %v254, %v262
      %v277 = vsel %vm270, %v255, %v263
      %v278 = vsel %vm270, %v256, %v264
      %v279 = vlaneseq
      %v280 = vshrl.u32 %v279, 7
      %v281 = vsub.s32 0, %v280
      %v282 = vrot.slane %v246, %v281
      %v283 = vmul.f32 %v271, %v282
      %v284 = vmul.f32 %v272, %v282
      %v285 = vmul.f32 %v273, %v282
      %v286 = vmul.f32 %v274, %v282
      %v287 = vmul.f32 %v275, %v282
      %v288 = vmul.f32 %v276, %v282
      %v289 = vmul.f32 %v277, %v282
      %v290 = vmul.f32 %v278, %v282
      %v291 = vlaneseq
      %v292 = vshrl.u32 %v291, 7
      %v293 = vsub.s32 0, %v292
      %v294 = vrot.slane %v247, %v293
      %v295 = vadd.f32 %v283, %v294
      %v296 = vadd.f32 %v284, %v294
      %v297 = vadd.f32 %v285, %v294
      %v298 = vadd.f32 %v286, %v294
      %v299 = vadd.f32 %v287, %v294
      %v300 = vadd.f32 %v288, %v294
      %v301 = vadd.f32 %v289, %v294
      %v302 = vadd.f32 %v290, %v294
      %v303 = vmax.f32 %v295, 0.0
      %v304 = vmax.f32 %v296, 0.0
      %v305 = vmax.f32 %v297, 0.0
      %v306 = vmax.f32 %v298, 0.0
      %v307 = vmax.f32 %v299, 0.0
      %v308 = vmax.f32 %v300, 0.0
      %v309 = vmax.f32 %v301, 0.0
      %v310 = vmax.f32 %v302, 0.0
      %vm311 = vcmask 31744
      %312 = vst.msk [vmem:[%s244] sm:$0xff] %vm311, %v303
      %313 = vst.msk [vmem:[%s244 + $0x8] sm:$0xff] %vm311, %v304
      %314 = vst.msk [vmem:[%s244 + $0x10] sm:$0xff] %vm311, %v305
      %315 = vst.msk [vmem:[%s244 + $0x18] sm:$0xff] %vm311, %v306
      %316 = vst.msk [vmem:[%s244 + $0x20] sm:$0xff] %vm311, %v307
      %317 = vst.msk [vmem:[%s244 + $0x28] sm:$0xff] %vm311, %v308
      %318 = vst.msk [vmem:[%s244 + $0x30] sm:$0xff] %vm311, %v309
      %319 = vst.msk [vmem:[%s244 + $0x38] sm:$0xff] %vm311, %v310
      %s320 = smul.u32 8, %s19
      %p321 = scmp.lt.s32.totalorder %s18, 1
      %s322 = scalar_select %p321, %s18, 1
      %p323 = scmp.lt.s32.totalorder %s320, 7
      %s324 = scalar_select %p323, %s320, 7
      %s325 = smul.addr %s322, 8
      %s326 = sadd.s32 %s324, %s325
      %s327 = smul.addr %s326, 8
      %s328 = scalar_lea.vmem %s3, %s327
      // Predicated region
      $region33: #{down_crfb.3} parent=31 // pred_check
        %p329 = pneg %p123
      $region34: #{down_crfb.3} parent=31 // pred_check_branch
        %331 = sbr.rel (%p329) target = $region36
      $region35: #{down_crfb.3} parent=31 // pred_region
        %s332 = smul.u32 8, %s19
      $region36: #{down_crfb.3} parent=31 // pred_fallthru
        _
    $region32: #{down_crfb.3} parent=5 // pred_fallthru
      _
    %p333 = scmp.le.s32.totalorder 2, %s9
    // Predicated region
    $region37: #{down_crfb.3} parent=5 // pred_check
      %p334 = pneg %p333
    $region38: #{down_crfb.3} parent=5 // pred_check_branch
      %336 = sbr.rel (%p334) target = $region40
    $region39: #{down_crfb.3} parent=5 // pred_region
      %s337 = ssub.s32 %s9, 2
      // Predicated region
      $region41: #{down_crfb.3} parent=39 // pred_check
        %p338 = pneg %p129
      $region42: #{down_crfb.3} parent=39 // pred_check_branch
        %340 = sbr.rel (%p338) target = $region44
      $region43: #{down_crfb.3} parent=39 // pred_region
        %s341 = smul.u32 8, %s21
        %p342 = scmp.lt.s32.totalorder %s20, 1
        %s343 = scalar_select %p342, %s20, 1
        %p344 = scmp.lt.s32.totalorder %s341, 7
        %s345 = scalar_select %p344, %s341, 7
        %s346 = smul.addr %s343, 8
        %s347 = sadd.s32 %s345, %s346
        %s348 = smul.addr %s347, 8
        %s349 = scalar_lea.vmem %s3, %s348
      $region44: #{down_crfb.3} parent=39 // pred_fallthru
        _
    $region40: #{down_crfb.3} parent=5 // pred_fallthru
      _
  $region6: #{down_crfb.3} parent=0 // loop_footer
    %s13 = sadd.s32 1, %s9
  $region7: #{down_crfb.3} parent=0 // loop_footer_branch
    %8 = sbr.rel target = $region3
  $region8: #{down_crfb.3} parent=0 // loop_exit
    _

// kernel: down_crfb.2
$region0: #{down_crfb.2}
  #allocation0 [shape = 'u32[]', space=smem, size = 0x4, offset = 0x4, fixed_abs, tag = 'smem constant byte address 0x4 - core index']
  #allocation1 [shape = 'u32[144,128]{1,0:T(1,128)}', space=vmem, size = 0x12000, scoped, tag = 'internal scratch']
  #allocation2 [shape = 'f32[8,32,4]{2,1,0:T(8,128)}', space=vmem, size = 0x20000, scoped, tag = 'scratch operand']
  #allocation3 [shape = 'f32[8,32,4]{2,1,0:T(8,128)}', space=vmem, size = 0x20000, scoped, tag = 'scratch operand']
  %s0 = inlined_call_operand.vmem [shape: bf16[2,1,18,32,4], index: 0, kind: input, shape index: {}]
  %s1 = inlined_call_operand.vmem [shape: bf16[9,4,4], index: 1, kind: input, shape index: {}]
  %s2 = inlined_call_operand.vmem [shape: f32[2,8,8,4], index: 2, kind: output, shape index: {0}]
  %s3 = inlined_call_operand.vmem [shape: f32[2,8,8,4], index: 3, kind: output, shape index: {1}]
  %s4 = inlined_call_operand.vmem [shape: f32[2,1,2,4], index: 4, kind: output, shape index: {2}]
  %5 = xla_tuple %s2, %s3, %s4
  %s6 = sld [smem:[#allocation0]]
  $region57: #{down_crfb.2} parent=0
    _
  %s8 = ssub.s32 1, %s6
  %s9 = scalar_select 0, %s8, %s6
  loop: start=0, step=1, limit=4
  $region2: #{down_crfb.2} parent=0 // loop_pre_header
    _
  $region3: #{down_crfb.2} parent=0 // loop_header
    %s11 = sphi 0, %s15
    %p12 = scmp.ge.s32.totalorder %s11, 4
    %s18 = sphi 0, %s30
    %s19 = sphi 0, %s26
    %s20 = sphi 0, %s18
    %s21 = sphi 0, %s19
    %s22 = sphi 0, %s20
    %s23 = sphi 0, %s21
    %s35 = sphi 0, %s37
    %s38 = sphi 0, %s35
    %s39 = sphi 0, %s38
    %s55 = sphi 0, %s39
    %s59 = sphi 0, %s59
    %s61 = sphi 0, %s59
    %s62 = sphi 0, %s61
    %s76 = sphi 0, %s62
    %s84 = sphi 0, %s86
    %s87 = sphi 0, %s84
    %s88 = sphi 0, %s87
    %s104 = sphi 0, %s88
    %s112 = sphi 0, %s114
    %s115 = sphi 0, %s112
    %s116 = sphi 0, %s115
    %s132 = sphi 0, %s116
    %s140 = sphi 0, %s142
    %s143 = sphi 0, %s140
    %s144 = sphi 0, %s143
    %s160 = sphi 0, %s144
  $region4: #{down_crfb.2} parent=0 // loop_header_branch
    %14 = sbr.rel (%p12) target = $region8
  $region5: #{down_crfb.2} parent=0 // loop_body
    %s16 = ssub.s32 %s11, 1
    %s17 = ssub.s32 %s11, 2
    %s24 = sadd.s32 1, %s19
    %p25 = scmp.ge.s32.totalorder %s24, 1
    %s26 = scalar_select %p25, 0, %s24
    %s27 = sadd.s32 1, %s18
    %s28 = scalar_select %p25, %s27, %s18
    %p29 = scmp.ge.s32.totalorder %s28, 2
    %s30 = scalar_select %p29, 0, %s28
    %s31 = ssub.s32 %s18, %s30
    %s32 = ssub.s32 %s19, %s26
    %s33 = sor.u32 %s31, %s32
    %p34 = scmp.eq.s32.totalorder %s33, 0
    %s36 = sadd.s32 %s35, 1
    %s37 = scalar_select %p34, %s35, %s36
    %p40 = pneg %p34
    %p41 = scmp.eq.s32.totalorder %s11, 1
    %p42 = por %p40, %p41
    %p43 = scmp.ne.s32.totalorder %s35, %s38
    %p44 = scmp.eq.s32.totalorder %s11, 0
    %p45 = por %p43, %p44
    %p46 = scmp.ne.s32.totalorder %s35, %s38
    %p47 = scmp.eq.s32.totalorder %s16, 1
    %p48 = por %p46, %p47
    %p49 = scmp.ne.s32.totalorder %s38, %s39
    %p50 = scmp.eq.s32.totalorder %s16, 0
    %p51 = por %p49, %p50
    %p52 = scmp.ne.s32.totalorder %s38, %s39
    %p53 = scmp.eq.s32.totalorder %s17, 1
    %p54 = por %p52, %p53
    %p56 = scmp.ne.s32.totalorder %s39, %s55
    %p57 = scmp.eq.s32.totalorder %s17, 0
    %p58 = por %p56, %p57
    %s60 = sadd.s32 %s59, 1
    %p63 = scmp.eq.s32.totalorder %s11, 1
    %p64 = scmp.ne.s32.totalorder %s59, %s61
    %p65 = scmp.eq.s32.totalorder %s11, 0
    %p66 = por %p64, %p65
    %p67 = scmp.ne.s32.totalorder %s59, %s61
    %p68 = scmp.eq.s32.totalorder %s16, 1
    %p69 = por %p67, %p68
    %p70 = scmp.ne.s32.totalorder %s61, %s62
    %p71 = scmp.eq.s32.totalorder %s16, 0
    %p72 = por %p70, %p71
    %p73 = scmp.ne.s32.totalorder %s61, %s62
    %p74 = scmp.eq.s32.totalorder %s17, 1
    %p75 = por %p73, %p74
    %p77 = scmp.ne.s32.totalorder %s62, %s76
    %p78 = scmp.eq.s32.totalorder %s17, 0
    %p79 = por %p77, %p78
    %s80 = ssub.s32 %s18, %s30
    %s81 = ssub.s32 %s19, %s26
    %s82 = sor.u32 %s80, %s81
    %p83 = scmp.eq.s32.totalorder %s82, 0
    %s85 = sadd.s32 %s84, 1
    %s86 = scalar_select %p83, %s84, %s85
    %p89 = pneg %p83
    %p90 = scmp.eq.s32.totalorder %s11, 1
    %p91 = por %p89, %p90
    %p92 = scmp.ne.s32.totalorder %s84, %s87
    %p93 = scmp.eq.s32.totalorder %s11, 0
    %p94 = por %p92, %p93
    %p95 = scmp.ne.s32.totalorder %s84, %s87
    %p96 = scmp.eq.s32.totalorder %s16, 1
    %p97 = por %p95, %p96
    %p98 = scmp.ne.s32.totalorder %s87, %s88
    %p99 = scmp.eq.s32.totalorder %s16, 0
    %p100 = por %p98, %p99
    %p101 = scmp.ne.s32.totalorder %s87, %s88
    %p102 = scmp.eq.s32.totalorder %s17, 1
    %p103 = por %p101, %p102
    %p105 = scmp.ne.s32.totalorder %s88, %s104
    %p106 = scmp.eq.s32.totalorder %s17, 0
    %p107 = por %p105, %p106
    %s108 = ssub.s32 %s18, %s30
    %s109 = ssub.s32 %s19, %s26
    %s110 = sor.u32 %s108, %s109
    %p111 = scmp.eq.s32.totalorder %s110, 0
    %s113 = sadd.s32 %s112, 1
    %s114 = scalar_select %p111, %s112, %s113
    %p117 = pneg %p111
    %p118 = scmp.eq.s32.totalorder %s11, 1
    %p119 = por %p117, %p118
    %p120 = scmp.ne.s32.totalorder %s112, %s115
    %p121 = scmp.eq.s32.totalorder %s11, 0
    %p122 = por %p120, %p121
    %p123 = scmp.ne.s32.totalorder %s112, %s115
    %p124 = scmp.eq.s32.totalorder %s16, 1
    %p125 = por %p123, %p124
    %p126 = scmp.ne.s32.totalorder %s115, %s116
    %p127 = scmp.eq.s32.totalorder %s16, 0
    %p128 = por %p126, %p127
    %p129 = scmp.ne.s32.totalorder %s115, %s116
    %p130 = scmp.eq.s32.totalorder %s17, 1
    %p131 = por %p129, %p130
    %p133 = scmp.ne.s32.totalorder %s116, %s132
    %p134 = scmp.eq.s32.totalorder %s17, 0
    %p135 = por %p133, %p134
    %s136 = ssub.s32 %s18, %s30
    %s137 = ssub.s32 %s19, %s26
    %s138 = sor.u32 %s136, %s137
    %p139 = scmp.eq.s32.totalorder %s138, 0
    %s141 = sadd.s32 %s140, 1
    %s142 = scalar_select %p139, %s140, %s141
    %p145 = pneg %p139
    %p146 = scmp.eq.s32.totalorder %s11, 1
    %p147 = por %p145, %p146
    %p148 = scmp.ne.s32.totalorder %s140, %s143
    %p149 = scmp.eq.s32.totalorder %s11, 0
    %p150 = por %p148, %p149
    %p151 = scmp.ne.s32.totalorder %s140, %s143
    %p152 = scmp.eq.s32.totalorder %s16, 1
    %p153 = por %p151, %p152
    %p154 = scmp.ne.s32.totalorder %s143, %s144
    %p155 = scmp.eq.s32.totalorder %s16, 0
    %p156 = por %p154, %p155
    %p157 = scmp.ne.s32.totalorder %s143, %s144
    %p158 = scmp.eq.s32.totalorder %s17, 1
    %p159 = por %p157, %p158
    %p161 = scmp.ne.s32.totalorder %s144, %s160
    %p162 = scmp.eq.s32.totalorder %s17, 0
    %p163 = por %p161, %p162
    %p164 = scmp.le.s32.totalorder 1, %s11
    %p165 = scmp.lt.s32.totalorder %s11, 3
    %p166 = pnand %p164, %p165
    %p167 = pneg %p166
    // Predicated region
    $region9: #{down_crfb.2} parent=5 // pred_check
      _
    $region10: #{down_crfb.2} parent=5 // pred_check_branch
      %169 = sbr.rel (%p166) target = $region12
    $region11: #{down_crfb.2} parent=5 // pred_region
      %s170 = ssub.s32 %s11, 1
      // Predicated region
      $region13: #{down_crfb.2} parent=11 // pred_check
        %p171 = pneg %p72
      $region14: #{down_crfb.2} parent=11 // pred_check_branch
        %173 = sbr.rel (%p171) target = $region16
      $region15: #{down_crfb.2} parent=11 // pred_region
        _
      $region16: #{down_crfb.2} parent=11 // pred_fallthru
        _
    $region12: #{down_crfb.2} parent=5 // pred_fallthru
      _
    %p174 = scmp.lt.s32.totalorder %s11, 2
    // Predicated region
    $region17: #{down_crfb.2} parent=5 // pred_check
      %p175 = pneg %p174
    $region18: #{down_crfb.2} parent=5 // pred_check_branch
      %177 = sbr.rel (%p175) target = $region20
    $region19: #{down_crfb.2} parent=5 // pred_region
      // Predicated region
      $region21: #{down_crfb.2} parent=19 // pred_check
        %p178 = pneg %p45
      $region22: #{down_crfb.2} parent=19 // pred_check_branch
        %180 = sbr.rel (%p178) target = $region24
      $region23: #{down_crfb.2} parent=19 // pred_region
        %p181 = scmp.lt.s32.totalorder %s18, 1
        %s182 = scalar_select %p181, %s18, 1
        %p183 = scmp.lt.s32.totalorder %s19, 0
        %s184 = scalar_select %p183, %s19, 0
        %s185 = smul.addr %s184, 72
        %s186 = smul.addr %s182, 72
        %s187 = sadd.s32 %s185, %s186
        %s188 = smul.addr %s187, 4
        %s189 = scalar_lea.vmem %s0, %s188
      $region24: #{down_crfb.2} parent=19 // pred_fallthru
        _
    $region20: #{down_crfb.2} parent=5 // pred_fallthru
      _
    %p190 = scmp.le.s32.totalorder 1, %s11
    %p191 = scmp.lt.s32.totalorder %s11, 3
    %p192 = pnand %p190, %p191
    %p193 = pneg %p192
    // Predicated region
    $region25: #{down_crfb.2} parent=5 // pred_check
      _
    $region26: #{down_crfb.2} parent=5 // pred_check_branch
      %195 = sbr.rel (%p192) target = $region28
    $region27: #{down_crfb.2} parent=5 // pred_region
      %s196 = ssub.s32 %s11, 1
      %p197 = scmp.lt.s32.totalorder %s20, 1
      %s198 = scalar_select %p197, %s20, 1
      %p199 = scmp.lt.s32.totalorder %s21, 0
      %s200 = scalar_select %p199, %s21, 0
      %s201 = smul.addr %s200, 72
      %s202 = smul.addr %s198, 72
      %s203 = sadd.s32 %s201, %s202
      %s204 = smul.addr %s203, 4
      %s205 = scalar_lea.vmem %s0, %s204
      %p206 = pneg %p51
      %p207 = pneg %p48
      %p208 = pneg %p72
      %p209 = pneg %p69
      %p210 = pneg %p100
      %p211 = pneg %p97
      %s212 = smul.u32 8, %s21
      %p213 = scmp.lt.s32.totalorder %s20, 1
      %s214 = scalar_select %p213, %s20, 1
      %p215 = scmp.lt.s32.totalorder %s212, 7
      %s216 = scalar_select %p215, %s212, 7
      %s217 = smul.addr %s214, 8
      %s218 = sadd.s32 %s216, %s217
      %s219 = smul.addr %s218, 8
      %s220 = scalar_lea.vmem %s2, %s219
      %p221 = pneg %p128
      %p222 = pneg %p125
      %s223 = smul.u32 8, %s21
      %p224 = scmp.lt.s32.totalorder %s20, 1
      %s225 = scalar_select %p224, %s20, 1
      %p226 = scmp.lt.s32.totalorder %s223, 7
      %s227 = scalar_select %p226, %s223, 7
      %s228 = smul.addr %s225, 8
      %s229 = sadd.s32 %s227, %s228
      %s230 = smul.addr %s229, 8
      %s231 = scalar_lea.vmem %s3, %s230
      %p232 = pneg %p156
      %p233 = pneg %p153
      %p234 = scmp.lt.s32.totalorder %s20, 1
      %s235 = scalar_select %p234, %s20, 1
      %p236 = scmp.lt.s32.totalorder %s21, 0
      %s237 = scalar_select %p236, %s21, 0
      %s238 = sadd.s32 %s237, %s235
      %s239 = smul.addr %s238, 2
      %s240 = scalar_lea.vmem %s4, %s239
      %p241 = scmp.lt.s32.totalorder %s20, 1
      %s242 = scalar_select %p241, %s20, 1
      %p243 = scmp.lt.s32.totalorder %s21, 0
      %s244 = scalar_select %p243, %s21, 0
      %s245 = smul.addr %s244, 72
      %s246 = smul.addr %s242, 72
      %s247 = sadd.s32 %s245, %s246
      %s248 = smul.addr %s247, 4
      %s249 = scalar_lea.vmem %s0, %s248
      %s250 = smul.u32 8, %s21
      %p251 = scmp.lt.s32.totalorder %s20, 1
      %s252 = scalar_select %p251, %s20, 1
      %p253 = scmp.lt.s32.totalorder %s250, 7
      %s254 = scalar_select %p253, %s250, 7
      %s255 = smul.addr %s252, 8
      %s256 = sadd.s32 %s254, %s255
      %s257 = smul.addr %s256, 8
      %s258 = scalar_lea.vmem %s2, %s257
      %s259 = smul.u32 8, %s21
      %s260 = smul.u32 8, %s21
      %p261 = scmp.lt.s32.totalorder %s20, 1
      %s262 = scalar_select %p261, %s20, 1
      %p263 = scmp.lt.s32.totalorder %s260, 7
      %s264 = scalar_select %p263, %s260, 7
      %s265 = smul.addr %s262, 8
      %s266 = sadd.s32 %s264, %s265
      %s267 = smul.addr %s266, 8
      %s268 = scalar_lea.vmem %s3, %s267
      %s269 = smul.u32 8, %s21
      %p270 = scmp.lt.s32.totalorder %s20, 1
      %s271 = scalar_select %p270, %s20, 1
      %p272 = scmp.lt.s32.totalorder %s21, 0
      %s273 = scalar_select %p272, %s21, 0
      %s274 = sadd.s32 %s273, %s271
      %s275 = smul.addr %s274, 2
      %s276 = scalar_lea.vmem %s4, %s275
      %v278 = vld [vmem:[%s249] sm:$0xf]
      %v279 = vld [vmem:[%s249 + $0x4] sm:$0xf]
      %v280 = vld [vmem:[%s249 + $0x8] sm:$0xf]
      %v281 = vld [vmem:[%s249 + $0xc] sm:$0xf]
      %v282 = vld [vmem:[%s249 + $0x10] sm:$0xf]
      %v283 = vld [vmem:[%s249 + $0x14] sm:$0xf]
      %v284 = vld [vmem:[%s249 + $0x18] sm:$0xf]
      %v285 = vld [vmem:[%s249 + $0x1c] sm:$0xf]
      %v286 = vld [vmem:[%s249 + $0x20] sm:$0xf]
      %v287 = vld [vmem:[%s249 + $0x24] sm:$0xf]
      %v288 = vld [vmem:[%s249 + $0x28] sm:$0xf]
      %v289 = vld [vmem:[%s249 + $0x2c] sm:$0xf]
      %v290 = vld [vmem:[%s249 + $0x30] sm:$0xf]
      %v291 = vld [vmem:[%s249 + $0x34] sm:$0xf]
      %v292 = vld [vmem:[%s249 + $0x38] sm:$0xf]
      %v293 = vld [vmem:[%s249 + $0x3c] sm:$0xf]
      %v294 = vld [vmem:[%s249 + $0x40] sm:$0xf]
      %v295 = vld [vmem:[%s249 + $0x44] sm:$0xf]
      %v296 = vld [vmem:[%s249 + $0x48] sm:$0xf]
      %v297 = vld [vmem:[%s249 + $0x4c] sm:$0xf]
      %v298 = vld [vmem:[%s249 + $0x50] sm:$0xf]
      %v299 = vld [vmem:[%s249 + $0x54] sm:$0xf]
      %v300 = vld [vmem:[%s249 + $0x58] sm:$0xf]
      %v301 = vld [vmem:[%s249 + $0x5c] sm:$0xf]
      %v302 = vld [vmem:[%s249 + $0x60] sm:$0xf]
      %v303 = vld [vmem:[%s249 + $0x64] sm:$0xf]
      %v304 = vld [vmem:[%s249 + $0x68] sm:$0xf]
      %v305 = vld [vmem:[%s249 + $0x6c] sm:$0xf]
      %v306 = vld [vmem:[%s249 + $0x70] sm:$0xf]
      %v307 = vld [vmem:[%s249 + $0x74] sm:$0xf]
      %v308 = vld [vmem:[%s249 + $0x78] sm:$0xf]
      %v309 = vld [vmem:[%s249 + $0x7c] sm:$0xf]
      %v310 = vld [vmem:[%s249 + $0x80] sm:$0xf]
      %v311 = vld [vmem:[%s249 + $0x84] sm:$0xf]
      %v312 = vld [vmem:[%s249 + $0x88] sm:$0xf]
      %v313 = vld [vmem:[%s249 + $0x8c] sm:$0xf]
      %v314 = vld [vmem:[%s249 + $0x90] sm:$0xf]
      %v315 = vld [vmem:[%s249 + $0x94] sm:$0xf]
      %v316 = vld [vmem:[%s249 + $0x98] sm:$0xf]
      %v317 = vld [vmem:[%s249 + $0x9c] sm:$0xf]
      %v318 = vld [vmem:[%s249 + $0xa0] sm:$0xf]
      %v319 = vld [vmem:[%s249 + $0xa4] sm:$0xf]
      %v320 = vld [vmem:[%s249 + $0xa8] sm:$0xf]
      %v321 = vld [vmem:[%s249 + $0xac] sm:$0xf]
      %v322 = vld [vmem:[%s249 + $0xb0] sm:$0xf]
      %v323 = vld [vmem:[%s249 + $0xb4] sm:$0xf]
      %v324 = vld [vmem:[%s249 + $0xb8] sm:$0xf]
      %v325 = vld [vmem:[%s249 + $0xbc] sm:$0xf]
      %v326 = vld [vmem:[%s249 + $0xc0] sm:$0xf]
      %v327 = vld [vmem:[%s249 + $0xc4] sm:$0xf]
      %v328 = vld [vmem:[%s249 + $0xc8] sm:$0xf]
      %v329 = vld [vmem:[%s249 + $0xcc] sm:$0xf]
      %v330 = vld [vmem:[%s249 + $0xd0] sm:$0xf]
      %v331 = vld [vmem:[%s249 + $0xd4] sm:$0xf]
      %v332 = vld [vmem:[%s249 + $0xd8] sm:$0xf]
      %v333 = vld [vmem:[%s249 + $0xdc] sm:$0xf]
      %v334 = vld [vmem:[%s249 + $0xe0] sm:$0xf]
      %v335 = vld [vmem:[%s249 + $0xe4] sm:$0xf]
      %v336 = vld [vmem:[%s249 + $0xe8] sm:$0xf]
      %v337 = vld [vmem:[%s249 + $0xec] sm:$0xf]
      %v338 = vld [vmem:[%s249 + $0xf0] sm:$0xf]
      %v339 = vld [vmem:[%s249 + $0xf4] sm:$0xf]
      %v340 = vld [vmem:[%s249 + $0xf8] sm:$0xf]
      %v341 = vld [vmem:[%s249 + $0xfc] sm:$0xf]
      %s342 = scalar_lea.vmem %s249, 16
      %v343 = vld [vmem:[%s342] sm:$0xf]
      %v344 = vld [vmem:[%s342 + $0x4] sm:$0xf]
      %v345 = vld [vmem:[%s342 + $0x8] sm:$0xf]
      %v346 = vld [vmem:[%s342 + $0xc] sm:$0xf]
      %v347 = vld [vmem:[%s342 + $0x10] sm:$0xf]
      %v348 = vld [vmem:[%s342 + $0x14] sm:$0xf]
      %v349 = vld [vmem:[%s342 + $0x18] sm:$0xf]
      %v350 = vld [vmem:[%s342 + $0x1c] sm:$0xf]
      %v351 = vld [vmem:[%s342 + $0x20] sm:$0xf]
      %v352 = vld [vmem:[%s342 + $0x24] sm:$0xf]
      %v353 = vld [vmem:[%s342 + $0x28] sm:$0xf]
      %v354 = vld [vmem:[%s342 + $0x2c] sm:$0xf]
      %v355 = vld [vmem:[%s342 + $0x30] sm:$0xf]
      %v356 = vld [vmem:[%s342 + $0x34] sm:$0xf]
      %v357 = vld [vmem:[%s342 + $0x38] sm:$0xf]
      %v358 = vld [vmem:[%s342 + $0x3c] sm:$0xf]
      %v359 = vld [vmem:[%s342 + $0x40] sm:$0xf]
      %v360 = vld [vmem:[%s342 + $0x44] sm:$0xf]
      %v361 = vld [vmem:[%s342 + $0x48] sm:$0xf]
      %v362 = vld [vmem:[%s342 + $0x4c] sm:$0xf]
      %v363 = vld [vmem:[%s342 + $0x50] sm:$0xf]
      %v364 = vld [vmem:[%s342 + $0x54] sm:$0xf]
      %v365 = vld [vmem:[%s342 + $0x58] sm:$0xf]
      %v366 = vld [vmem:[%s342 + $0x5c] sm:$0xf]
      %v367 = vld [vmem:[%s342 + $0x60] sm:$0xf]
      %v368 = vld [vmem:[%s342 + $0x64] sm:$0xf]
      %v369 = vld [vmem:[%s342 + $0x68] sm:$0xf]
      %v370 = vld [vmem:[%s342 + $0x6c] sm:$0xf]
      %v371 = vld [vmem:[%s342 + $0x70] sm:$0xf]
      %v372 = vld [vmem:[%s342 + $0x74] sm:$0xf]
      %v373 = vld [vmem:[%s342 + $0x78] sm:$0xf]
      %v374 = vld [vmem:[%s342 + $0x7c] sm:$0xf]
      %v375 = vld [vmem:[%s342 + $0x80] sm:$0xf]
      %v376 = vld [vmem:[%s342 + $0x84] sm:$0xf]
      %v377 = vld [vmem:[%s342 + $0x88] sm:$0xf]
      %v378 = vld [vmem:[%s342 + $0x8c] sm:$0xf]
      %v379 = vld [vmem:[%s342 + $0x90] sm:$0xf]
      %v380 = vld [vmem:[%s342 + $0x94] sm:$0xf]
      %v381 = vld [vmem:[%s342 + $0x98] sm:$0xf]
      %v382 = vld [vmem:[%s342 + $0x9c] sm:$0xf]
      %v383 = vld [vmem:[%s342 + $0xa0] sm:$0xf]
      %v384 = vld [vmem:[%s342 + $0xa4] sm:$0xf]
      %v385 = vld [vmem:[%s342 + $0xa8] sm:$0xf]
      %v386 = vld [vmem:[%s342 + $0xac] sm:$0xf]
      %v387 = vld [vmem:[%s342 + $0xb0] sm:$0xf]
      %v388 = vld [vmem:[%s342 + $0xb4] sm:$0xf]
      %v389 = vld [vmem:[%s342 + $0xb8] sm:$0xf]
      %v390 = vld [vmem:[%s342 + $0xbc] sm:$0xf]
      %v391 = vld [vmem:[%s342 + $0xc0] sm:$0xf]
      %v392 = vld [vmem:[%s342 + $0xc4] sm:$0xf]
      %v393 = vld [vmem:[%s342 + $0xc8] sm:$0xf]
      %v394 = vld [vmem:[%s342 + $0xcc] sm:$0xf]
      %v395 = vld [vmem:[%s342 + $0xd0] sm:$0xf]
      %v396 = vld [vmem:[%s342 + $0xd4] sm:$0xf]
      %v397 = vld [vmem:[%s342 + $0xd8] sm:$0xf]
      %v398 = vld [vmem:[%s342 + $0xdc] sm:$0xf]
      %v399 = vld [vmem:[%s342 + $0xe0] sm:$0xf]
      %v400 = vld [vmem:[%s342 + $0xe4] sm:$0xf]
      %v401 = vld [vmem:[%s342 + $0xe8] sm:$0xf]
      %v402 = vld [vmem:[%s342 + $0xec] sm:$0xf]
      %v403 = vld [vmem:[%s342 + $0xf0] sm:$0xf]
      %v404 = vld [vmem:[%s342 + $0xf4] sm:$0xf]
      %v405 = vld [vmem:[%s342 + $0xf8] sm:$0xf]
      %v406 = vld [vmem:[%s342 + $0xfc] sm:$0xf]
      %s407 = scalar_lea.vmem %s249, 32
      %v408 = vld [vmem:[%s407] sm:$0xf]
      %v409 = vld [vmem:[%s407 + $0x4] sm:$0xf]
      %v410 = vld [vmem:[%s407 + $0x8] sm:$0xf]
      %v411 = vld [vmem:[%s407 + $0xc] sm:$0xf]
      %v412 = vld [vmem:[%s407 + $0x10] sm:$0xf]
      %v413 = vld [vmem:[%s407 + $0x14] sm:$0xf]
      %v414 = vld [vmem:[%s407 + $0x18] sm:$0xf]
      %v415 = vld [vmem:[%s407 + $0x1c] sm:$0xf]
      %v416 = vld [vmem:[%s407 + $0x20] sm:$0xf]
      %v417 = vld [vmem:[%s407 + $0x24] sm:$0xf]
      %v418 = vld [vmem:[%s407 + $0x28] sm:$0xf]
      %v419 = vld [vmem:[%s407 + $0x2c] sm:$0xf]
      %v420 = vld [vmem:[%s407 + $0x30] sm:$0xf]
      %v421 = vld [vmem:[%s407 + $0x34] sm:$0xf]
      %v422 = vld [vmem:[%s407 + $0x38] sm:$0xf]
      %v423 = vld [vmem:[%s407 + $0x3c] sm:$0xf]
      %v424 = vld [vmem:[%s407 + $0x40] sm:$0xf]
      %v425 = vld [vmem:[%s407 + $0x44] sm:$0xf]
      %v426 = vld [vmem:[%s407 + $0x48] sm:$0xf]
      %v427 = vld [vmem:[%s407 + $0x4c] sm:$0xf]
      %v428 = vld [vmem:[%s407 + $0x50] sm:$0xf]
      %v429 = vld [vmem:[%s407 + $0x54] sm:$0xf]
      %v430 = vld [vmem:[%s407 + $0x58] sm:$0xf]
      %v431 = vld [vmem:[%s407 + $0x5c] sm:$0xf]
      %v432 = vld [vmem:[%s407 + $0x60] sm:$0xf]
      %v433 = vld [vmem:[%s407 + $0x64] sm:$0xf]
      %v434 = vld [vmem:[%s407 + $0x68] sm:$0xf]
      %v435 = vld [vmem:[%s407 + $0x6c] sm:$0xf]
      %v436 = vld [vmem:[%s407 + $0x70] sm:$0xf]
      %v437 = vld [vmem:[%s407 + $0x74] sm:$0xf]
      %v438 = vld [vmem:[%s407 + $0x78] sm:$0xf]
      %v439 = vld [vmem:[%s407 + $0x7c] sm:$0xf]
      %v440 = vld [vmem:[%s407 + $0x80] sm:$0xf]
      %v441 = vld [vmem:[%s407 + $0x84] sm:$0xf]
      %v442 = vld [vmem:[%s407 + $0x88] sm:$0xf]
      %v443 = vld [vmem:[%s407 + $0x8c] sm:$0xf]
      %v444 = vld [vmem:[%s407 + $0x90] sm:$0xf]
      %v445 = vld [vmem:[%s407 + $0x94] sm:$0xf]
      %v446 = vld [vmem:[%s407 + $0x98] sm:$0xf]
      %v447 = vld [vmem:[%s407 + $0x9c] sm:$0xf]
      %v448 = vld [vmem:[%s407 + $0xa0] sm:$0xf]
      %v449 = vld [vmem:[%s407 + $0xa4] sm:$0xf]
      %v450 = vld [vmem:[%s407 + $0xa8] sm:$0xf]
      %v451 = vld [vmem:[%s407 + $0xac] sm:$0xf]
      %v452 = vld [vmem:[%s407 + $0xb0] sm:$0xf]
      %v453 = vld [vmem:[%s407 + $0xb4] sm:$0xf]
      %v454 = vld [vmem:[%s407 + $0xb8] sm:$0xf]
      %v455 = vld [vmem:[%s407 + $0xbc] sm:$0xf]
      %v456 = vld [vmem:[%s407 + $0xc0] sm:$0xf]
      %v457 = vld [vmem:[%s407 + $0xc4] sm:$0xf]
      %v458 = vld [vmem:[%s407 + $0xc8] sm:$0xf]
      %v459 = vld [vmem:[%s407 + $0xcc] sm:$0xf]
      %v460 = vld [vmem:[%s407 + $0xd0] sm:$0xf]
      %v461 = vld [vmem:[%s407 + $0xd4] sm:$0xf]
      %v462 = vld [vmem:[%s407 + $0xd8] sm:$0xf]
      %v463 = vld [vmem:[%s407 + $0xdc] sm:$0xf]
      %v464 = vld [vmem:[%s407 + $0xe0] sm:$0xf]
      %v465 = vld [vmem:[%s407 + $0xe4] sm:$0xf]
      %v466 = vld [vmem:[%s407 + $0xe8] sm:$0xf]
      %v467 = vld [vmem:[%s407 + $0xec] sm:$0xf]
      %v468 = vld [vmem:[%s407 + $0xf0] sm:$0xf]
      %v469 = vld [vmem:[%s407 + $0xf4] sm:$0xf]
      %v470 = vld [vmem:[%s407 + $0xf8] sm:$0xf]
      %v471 = vld [vmem:[%s407 + $0xfc] sm:$0xf]
      %v472 = vld [vmem:[%s1] sm:$0x3]
      %s473 = scalar_lea.vmem %s1, 6
      %v474 = vld [vmem:[%s473] sm:$0x3]
      %v539 = vunpack.c.l.b16 %v343
      %v540 = vunpack.c.l.b16 %v344
      %v541 = vunpack.c.l.b16 %v345
      %v542 = vunpack.c.l.b16 %v346
      %v543 = vunpack.c.l.b16 %v347
      %v544 = vunpack.c.l.b16 %v348
      %v545 = vunpack.c.l.b16 %v349
      %v546 = vunpack.c.l.b16 %v350
      %v547 = vunpack.c.l.b16 %v351
      %v548 = vunpack.c.l.b16 %v352
      %v549 = vunpack.c.l.b16 %v353
      %v550 = vunpack.c.l.b16 %v354
      %v551 = vunpack.c.l.b16 %v355
      %v552 = vunpack.c.l.b16 %v356
      %v553 = vunpack.c.l.b16 %v357
      %v554 = vunpack.c.l.b16 %v358
      %v555 = vunpack.c.l.b16 %v359
      %v556 = vunpack.c.l.b16 %v360
      %v557 = vunpack.c.l.b16 %v361
      %v558 = vunpack.c.l.b16 %v362
      %v559 = vunpack.c.l.b16 %v363
      %v560 = vunpack.c.l.b16 %v364
      %v561 = vunpack.c.l.b16 %v365
      %v562 = vunpack.c.l.b16 %v366
      %v563 = vunpack.c.l.b16 %v367
      %v564 = vunpack.c.l.b16 %v368
      %v565 = vunpack.c.l.b16 %v369
      %v566 = vunpack.c.l.b16 %v370
      %v567 = vunpack.c.l.b16 %v371
      %v568 = vunpack.c.l.b16 %v372
      %v569 = vunpack.c.l.b16 %v373
      %v570 = vunpack.c.l.b16 %v374
      %v571 = vunpack.c.l.b16 %v375
      %v572 = vunpack.c.l.b16 %v376
      %v573 = vunpack.c.l.b16 %v377
      %v574 = vunpack.c.l.b16 %v378
      %v575 = vunpack.c.l.b16 %v379
      %v576 = vunpack.c.l.b16 %v380
      %v577 = vunpack.c.l.b16 %v381
      %v578 = vunpack.c.l.b16 %v382
      %v579 = vunpack.c.l.b16 %v383
      %v580 = vunpack.c.l.b16 %v384
      %v581 = vunpack.c.l.b16 %v385
      %v582 = vunpack.c.l.b16 %v386
      %v583 = vunpack.c.l.b16 %v387
      %v584 = vunpack.c.l.b16 %v388
      %v585 = vunpack.c.l.b16 %v389
      %v586 = vunpack.c.l.b16 %v390
      %v587 = vunpack.c.l.b16 %v391
      %v588 = vunpack.c.l.b16 %v392
      %v589 = vunpack.c.l.b16 %v393
      %v590 = vunpack.c.l.b16 %v394
      %v591 = vunpack.c.l.b16 %v395
      %v592 = vunpack.c.l.b16 %v396
      %v593 = vunpack.c.l.b16 %v397
      %v594 = vunpack.c.l.b16 %v398
      %v595 = vunpack.c.l.b16 %v399
      %v596 = vunpack.c.l.b16 %v400
      %v597 = vunpack.c.l.b16 %v401
      %v598 = vunpack.c.l.b16 %v402
      %v599 = vunpack.c.l.b16 %v403
      %v600 = vunpack.c.l.b16 %v404
      %v601 = vunpack.c.l.b16 %v405
      %v602 = vunpack.c.l.b16 %v406
      %v603 = vpack.c.b16 %v540, %v539
      %v604 = vpack.c.b16 %v542, %v541
      %v605 = vpack.c.b16 %v544, %v543
      %v606 = vpack.c.b16 %v546, %v545
      %v607 = vpack.c.b16 %v548, %v547
      %v608 = vpack.c.b16 %v550, %v549
      %v609 = vpack.c.b16 %v552, %v551
      %v610 = vpack.c.b16 %v554, %v553
      %v611 = vpack.c.b16 %v556, %v555
      %v612 = vpack.c.b16 %v558, %v557
      %v613 = vpack.c.b16 %v560, %v559
      %v614 = vpack.c.b16 %v562, %v561
      %v615 = vpack.c.b16 %v564, %v563
      %v616 = vpack.c.b16 %v566, %v565
      %v617 = vpack.c.b16 %v568, %v567
      %v618 = vpack.c.b16 %v570, %v569
      %v619 = vpack.c.b16 %v572, %v571
      %v620 = vpack.c.b16 %v574, %v573
      %v621 = vpack.c.b16 %v576, %v575
      %v622 = vpack.c.b16 %v578, %v577
      %v623 = vpack.c.b16 %v580, %v579
      %v624 = vpack.c.b16 %v582, %v581
      %v625 = vpack.c.b16 %v584, %v583
      %v626 = vpack.c.b16 %v586, %v585
      %v627 = vpack.c.b16 %v588, %v587
      %v628 = vpack.c.b16 %v590, %v589
      %v629 = vpack.c.b16 %v592, %v591
      %v630 = vpack.c.b16 %v594, %v593
      %v631 = vpack.c.b16 %v596, %v595
      %v632 = vpack.c.b16 %v598, %v597
      %v633 = vpack.c.b16 %v600, %v599
      %v634 = vpack.c.b16 %v602, %v601
      %vm635 = vcmask 31744
      %v637 = vsel %vm635, %v603, 0
      %v640 = vsel %vm635, %v604, 0
      %v643 = vsel %vm635, %v605, 0
      %v646 = vsel %vm635, %v606, 0
      %v649 = vsel %vm635, %v607, 0
      %v652 = vsel %vm635, %v608, 0
      %v655 = vsel %vm635, %v609, 0
      %v658 = vsel %vm635, %v610, 0
      %v661 = vsel %vm635, %v611, 0
      %v664 = vsel %vm635, %v612, 0
      %v667 = vsel %vm635, %v613, 0
      %v670 = vsel %vm635, %v614, 0
      %v673 = vsel %vm635, %v615, 0
      %v676 = vsel %vm635, %v616, 0
      %v679 = vsel %vm635, %v617, 0
      %v682 = vsel %vm635, %v618, 0
      %v685 = vsel %vm635, %v619, 0
      %v688 = vsel %vm635, %v620, 0
      %v691 = vsel %vm635, %v621, 0
      %v694 = vsel %vm635, %v622, 0
      %v697 = vsel %vm635, %v623, 0
      %v700 = vsel %vm635, %v624, 0
      %v703 = vsel %vm635, %v625, 0
      %v706 = vsel %vm635, %v626, 0
      %v709 = vsel %vm635, %v627, 0
      %v712 = vsel %vm635, %v628, 0
      %v715 = vsel %vm635, %v629, 0
      %v718 = vsel %vm635, %v630, 0
      %v721 = vsel %vm635, %v631, 0
      %v724 = vsel %vm635, %v632, 0
      %v727 = vsel %vm635, %v633, 0
      %v730 = vsel %vm635, %v634, 0
      %vm732 = vcmask 1041408
      %v734 = vsel %vm732, %v474, 0
      %736 = vmatprep.subr.bf16.mxu0 0
      %737 = vmatpush1.bf16.msra.mxu0 0
      %738 = vmatprep.subr.bf16.mxu0 0
      %739 = vmatpush1.bf16.msra.mxu0 0
      %740 = vmatprep.subr.bf16.mxu0 0
      %741 = vmatpush1.bf16.msra.mxu0 0
      %742 = vmatprep.subr.bf16.mxu0 0
      %743 = vmatpush1.bf16.msra.mxu0 0
      %744 = vmatprep.subr.bf16.mxu0 0
      %745 = vmatpush1.bf16.msra.mxu0 0
      %746 = vmatprep.subr.bf16.mxu0 0
      %747 = vmatpush1.bf16.msra.mxu0 0
      %748 = vmatprep.subr.bf16.mxu0 0
      %749 = vmatpush1.bf16.msra.mxu0 0
      %750 = vmatprep.subr.bf16.mxu0 0
      %751 = vmatpush1.bf16.msra.mxu0 %v734
      %752 = vmatprep.subr.bf16.mxu0 0
      %753 = vmatpush2.bf16.msra.mxu0 0
      %754 = vmatprep.subr.bf16.mxu0 0
      %755 = vmatpush2.bf16.msra.mxu0 0
      %756 = vmatprep.subr.bf16.mxu0 0
      %757 = vmatpush2.bf16.msra.mxu0 0
      %758 = vmatprep.subr.bf16.mxu0 0
      %759 = vmatpush2.bf16.msra.mxu0 0
      %760 = vmatprep.subr.bf16.mxu0 0
      %761 = vmatpush2.bf16.msra.mxu0 0
      %762 = vmatprep.subr.bf16.mxu0 0
      %763 = vmatpush2.bf16.msra.mxu0 0
      %764 = vmatprep.subr.bf16.mxu0 0
      %765 = vmatpush2.bf16.msra.mxu0 0
      %766 = vmatprep.subr.bf16.mxu0 0
      %767 = vmatpush2.bf16.msra.mxu0 0
      %768 = vmatprep.mubr.bf16.mxu0 0
      %769 = vmatmul.mubr.bf16.gmra.mxu0 %v637
      %v770 = vpop.f32.mrf.mxu0
      %v771 = vadd.f32 0.0, %v770
      %v772 = vpop.f32.mrf.mxu0
      %v773 = vpop.f32.mrf.mxu0
      %v774 = vadd.f32 0.0, %v773
      %v775 = vpop.f32.mrf.mxu0
      %776 = vmatprep.mubr.bf16.mxu0 0
      %777 = vmatmul.mubr.bf16.gmra.mxu0 %v640
      %v778 = vpop.f32.mrf.mxu0
      %v779 = vadd.f32 0.0, %v778
      %v780 = vpop.f32.mrf.mxu0
      %v781 = vpop.f32.mrf.mxu0
      %v782 = vadd.f32 0.0, %v781
      %v783 = vpop.f32.mrf.mxu0
      %784 = vmatprep.mubr.bf16.mxu0 0
      %785 = vmatmul.mubr.bf16.gmra.mxu0 %v643
      %v786 = vpop.f32.mrf.mxu0
      %v787 = vadd.f32 0.0, %v786
      %v788 = vpop.f32.mrf.mxu0
      %v789 = vpop.f32.mrf.mxu0
      %v790 = vadd.f32 0.0, %v789
      %v791 = vpop.f32.mrf.mxu0
      %792 = vmatprep.mubr.bf16.mxu0 0
      %793 = vmatmul.mubr.bf16.gmra.mxu0 %v646
      %v794 = vpop.f32.mrf.mxu0
      %v795 = vadd.f32 0.0, %v794
      %v796 = vpop.f32.mrf.mxu0
      %v797 = vpop.f32.mrf.mxu0
      %v798 = vadd.f32 0.0, %v797
      %v799 = vpop.f32.mrf.mxu0
      %800 = vmatprep.mubr.bf16.mxu0 0
      %801 = vmatmul.mubr.bf16.gmra.mxu0 %v649
      %v802 = vpop.f32.mrf.mxu0
      %v803 = vadd.f32 0.0, %v802
      %v804 = vpop.f32.mrf.mxu0
      %v805 = vpop.f32.mrf.mxu0
      %v806 = vadd.f32 0.0, %v805
      %v807 = vpop.f32.mrf.mxu0
      %808 = vmatprep.mubr.bf16.mxu0 0
      %809 = vmatmul.mubr.bf16.gmra.mxu0 %v652
      %v810 = vpop.f32.mrf.mxu0
      %v811 = vadd.f32 0.0, %v810
      %v812 = vpop.f32.mrf.mxu0
      %v813 = vpop.f32.mrf.mxu0
      %v814 = vadd.f32 0.0, %v813
      %v815 = vpop.f32.mrf.mxu0
      %816 = vmatprep.mubr.bf16.mxu0 0
      %817 = vmatmul.mubr.bf16.gmra.mxu0 %v655
      %v818 = vpop.f32.mrf.mxu0
      %v819 = vadd.f32 0.0, %v818
      %v820 = vpop.f32.mrf.mxu0
      %v821 = vpop.f32.mrf.mxu0
      %v822 = vadd.f32 0.0, %v821
      %v823 = vpop.f32.mrf.mxu0
      %824 = vmatprep.mubr.bf16.mxu0 0
      %825 = vmatmul.mubr.bf16.gmra.mxu0 %v658
      %v826 = vpop.f32.mrf.mxu0
      %v827 = vadd.f32 0.0, %v826
      %v828 = vpop.f32.mrf.mxu0
      %v829 = vpop.f32.mrf.mxu0
      %v830 = vadd.f32 0.0, %v829
      %v831 = vpop.f32.mrf.mxu0
      %832 = vmatprep.mubr.bf16.mxu0 0
      %833 = vmatmul.mubr.bf16.gmra.mxu0 %v661
      %v834 = vpop.f32.mrf.mxu0
      %v835 = vadd.f32 0.0, %v834
      %v836 = vpop.f32.mrf.mxu0
      %v837 = vpop.f32.mrf.mxu0
      %v838 = vadd.f32 0.0, %v837
      %v839 = vpop.f32.mrf.mxu0
      %840 = vmatprep.mubr.bf16.mxu0 0
      %841 = vmatmul.mubr.bf16.gmra.mxu0 %v664
      %v842 = vpop.f32.mrf.mxu0
      %v843 = vadd.f32 0.0, %v842
      %v844 = vpop.f32.mrf.mxu0
      %v845 = vpop.f32.mrf.mxu0
      %v846 = vadd.f32 0.0, %v845
      %v847 = vpop.f32.mrf.mxu0
      %848 = vmatprep.mubr.bf16.mxu0 0
      %849 = vmatmul.mubr.bf16.gmra.mxu0 %v667
      %v850 = vpop.f32.mrf.mxu0
      %v851 = vadd.f32 0.0, %v850
      %v852 = vpop.f32.mrf.mxu0
      %v853 = vpop.f32.mrf.mxu0
      %v854 = vadd.f32 0.0, %v853
      %v855 = vpop.f32.mrf.mxu0
      %856 = vmatprep.mubr.bf16.mxu0 0
      %857 = vmatmul.mubr.bf16.gmra.mxu0 %v670
      %v858 = vpop.f32.mrf.mxu0
      %v859 = vadd.f32 0.0, %v858
      %v860 = vpop.f32.mrf.mxu0
      %v861 = vpop.f32.mrf.mxu0
      %v862 = vadd.f32 0.0, %v861
      %v863 = vpop.f32.mrf.mxu0
      %864 = vmatprep.mubr.bf16.mxu0 0
      %865 = vmatmul.mubr.bf16.gmra.mxu0 %v673
      %v866 = vpop.f32.mrf.mxu0
      %v867 = vadd.f32 0.0, %v866
      %v868 = vpop.f32.mrf.mxu0
      %v869 = vpop.f32.mrf.mxu0
      %v870 = vadd.f32 0.0, %v869
      %v871 = vpop.f32.mrf.mxu0
      %872 = vmatprep.mubr.bf16.mxu0 0
      %873 = vmatmul.mubr.bf16.gmra.mxu0 %v676
      %v874 = vpop.f32.mrf.mxu0
      %v875 = vadd.f32 0.0, %v874
      %v876 = vpop.f32.mrf.mxu0
      %v877 = vpop.f32.mrf.mxu0
      %v878 = vadd.f32 0.0, %v877
      %v879 = vpop.f32.mrf.mxu0
      %880 = vmatprep.mubr.bf16.mxu0 0
      %881 = vmatmul.mubr.bf16.gmra.mxu0 %v679
      %v882 = vpop.f32.mrf.mxu0
      %v883 = vadd.f32 0.0, %v882
      %v884 = vpop.f32.mrf.mxu0
      %v885 = vpop.f32.mrf.mxu0
      %v886 = vadd.f32 0.0, %v885
      %v887 = vpop.f32.mrf.mxu0
      %888 = vmatprep.mubr.bf16.mxu0 0
      %889 = vmatmul.mubr.bf16.gmra.mxu0 %v682
      %v890 = vpop.f32.mrf.mxu0
      %v891 = vadd.f32 0.0, %v890
      %v892 = vpop.f32.mrf.mxu0
      %v893 = vpop.f32.mrf.mxu0
      %v894 = vadd.f32 0.0, %v893
      %v895 = vpop.f32.mrf.mxu0
      %896 = vmatprep.mubr.bf16.mxu0 0
      %897 = vmatmul.mubr.bf16.gmra.mxu0 %v685
      %v898 = vpop.f32.mrf.mxu0
      %v899 = vadd.f32 0.0, %v898
      %v900 = vpop.f32.mrf.mxu0
      %v901 = vpop.f32.mrf.mxu0
      %v902 = vadd.f32 0.0, %v901
      %v903 = vpop.f32.mrf.mxu0
      %904 = vmatprep.mubr.bf16.mxu0 0
      %905 = vmatmul.mubr.bf16.gmra.mxu0 %v688
      %v906 = vpop.f32.mrf.mxu0
      %v907 = vadd.f32 0.0, %v906
      %v908 = vpop.f32.mrf.mxu0
      %v909 = vpop.f32.mrf.mxu0
      %v910 = vadd.f32 0.0, %v909
      %v911 = vpop.f32.mrf.mxu0
      %912 = vmatprep.mubr.bf16.mxu0 0
      %913 = vmatmul.mubr.bf16.gmra.mxu0 %v691
      %v914 = vpop.f32.mrf.mxu0
      %v915 = vadd.f32 0.0, %v914
      %v916 = vpop.f32.mrf.mxu0
      %v917 = vpop.f32.mrf.mxu0
      %v918 = vadd.f32 0.0, %v917
      %v919 = vpop.f32.mrf.mxu0
      %920 = vmatprep.mubr.bf16.mxu0 0
      %921 = vmatmul.mubr.bf16.gmra.mxu0 %v694
      %v922 = vpop.f32.mrf.mxu0
      %v923 = vadd.f32 0.0, %v922
      %v924 = vpop.f32.mrf.mxu0
      %v925 = vpop.f32.mrf.mxu0
      %v926 = vadd.f32 0.0, %v925
      %v927 = vpop.f32.mrf.mxu0
      %928 = vmatprep.mubr.bf16.mxu0 0
      %929 = vmatmul.mubr.bf16.gmra.mxu0 %v697
      %v930 = vpop.f32.mrf.mxu0
      %v931 = vadd.f32 0.0, %v930
      %v932 = vpop.f32.mrf.mxu0
      %v933 = vpop.f32.mrf.mxu0
      %v934 = vadd.f32 0.0, %v933
      %v935 = vpop.f32.mrf.mxu0
      %936 = vmatprep.mubr.bf16.mxu0 0
      %937 = vmatmul.mubr.bf16.gmra.mxu0 %v700
      %v938 = vpop.f32.mrf.mxu0
      %v939 = vadd.f32 0.0, %v938
      %v940 = vpop.f32.mrf.mxu0
      %v941 = vpop.f32.mrf.mxu0
      %v942 = vadd.f32 0.0, %v941
      %v943 = vpop.f32.mrf.mxu0
      %944 = vmatprep.mubr.bf16.mxu0 0
      %945 = vmatmul.mubr.bf16.gmra.mxu0 %v703
      %v946 = vpop.f32.mrf.mxu0
      %v947 = vadd.f32 0.0, %v946
      %v948 = vpop.f32.mrf.mxu0
      %v949 = vpop.f32.mrf.mxu0
      %v950 = vadd.f32 0.0, %v949
      %v951 = vpop.f32.mrf.mxu0
      %952 = vmatprep.mubr.bf16.mxu0 0
      %953 = vmatmul.mubr.bf16.gmra.mxu0 %v706
      %v954 = vpop.f32.mrf.mxu0
      %v955 = vadd.f32 0.0, %v954
      %v956 = vpop.f32.mrf.mxu0
      %v957 = vpop.f32.mrf.mxu0
      %v958 = vadd.f32 0.0, %v957
      %v959 = vpop.f32.mrf.mxu0
      %960 = vmatprep.mubr.bf16.mxu0 0
      %961 = vmatmul.mubr.bf16.gmra.mxu0 %v709
      %v962 = vpop.f32.mrf.mxu0
      %v963 = vadd.f32 0.0, %v962
      %v964 = vpop.f32.mrf.mxu0
      %v965 = vpop.f32.mrf.mxu0
      %v966 = vadd.f32 0.0, %v965
      %v967 = vpop.f32.mrf.mxu0
      %968 = vmatprep.mubr.bf16.mxu0 0
      %969 = vmatmul.mubr.bf16.gmra.mxu0 %v712
      %v970 = vpop.f32.mrf.mxu0
      %v971 = vadd.f32 0.0, %v970
      %v972 = vpop.f32.mrf.mxu0
      %v973 = vpop.f32.mrf.mxu0
      %v974 = vadd.f32 0.0, %v973
      %v975 = vpop.f32.mrf.mxu0
      %976 = vmatprep.mubr.bf16.mxu0 0
      %977 = vmatmul.mubr.bf16.gmra.mxu0 %v715
      %v978 = vpop.f32.mrf.mxu0
      %v979 = vadd.f32 0.0, %v978
      %v980 = vpop.f32.mrf.mxu0
      %v981 = vpop.f32.mrf.mxu0
      %v982 = vadd.f32 0.0, %v981
      %v983 = vpop.f32.mrf.mxu0
      %984 = vmatprep.mubr.bf16.mxu0 0
      %985 = vmatmul.mubr.bf16.gmra.mxu0 %v718
      %v986 = vpop.f32.mrf.mxu0
      %v987 = vadd.f32 0.0, %v986
      %v988 = vpop.f32.mrf.mxu0
      %v989 = vpop.f32.mrf.mxu0
      %v990 = vadd.f32 0.0, %v989
      %v991 = vpop.f32.mrf.mxu0
      %992 = vmatprep.mubr.bf16.mxu0 0
      %993 = vmatmul.mubr.bf16.gmra.mxu0 %v721
      %v994 = vpop.f32.mrf.mxu0
      %v995 = vadd.f32 0.0, %v994
      %v996 = vpop.f32.mrf.mxu0
      %v997 = vpop.f32.mrf.mxu0
      %v998 = vadd.f32 0.0, %v997
      %v999 = vpop.f32.mrf.mxu0
      %1000 = vmatprep.mubr.bf16.mxu0 0
      %1001 = vmatmul.mubr.bf16.gmra.mxu0 %v724
      %v1002 = vpop.f32.mrf.mxu0
      %v1003 = vadd.f32 0.0, %v1002
      %v1004 = vpop.f32.mrf.mxu0
      %v1005 = vpop.f32.mrf.mxu0
      %v1006 = vadd.f32 0.0, %v1005
      %v1007 = vpop.f32.mrf.mxu0
      %1008 = vmatprep.mubr.bf16.mxu0 0
      %1009 = vmatmul.mubr.bf16.gmra.mxu0 %v727
      %v1010 = vpop.f32.mrf.mxu0
      %v1011 = vadd.f32 0.0, %v1010
      %v1012 = vpop.f32.mrf.mxu0
      %v1013 = vpop.f32.mrf.mxu0
      %v1014 = vadd.f32 0.0, %v1013
      %v1015 = vpop.f32.mrf.mxu0
      %1016 = vmatprep.mubr.bf16.mxu0 0
      %1017 = vmatmul.mubr.bf16.gmra.mxu0 %v730
      %v1018 = vpop.f32.mrf.mxu0
      %v1019 = vadd.f32 0.0, %v1018
      %v1020 = vpop.f32.mrf.mxu0
      %v1021 = vpop.f32.mrf.mxu0
      %v1022 = vadd.f32 0.0, %v1021
      %v1023 = vpop.f32.mrf.mxu0
      %1024 = vdwg.mxu0
      %v1089 = vunpack.c.l.b16 %v278
      %v1090 = vunpack.c.l.b16 %v279
      %v1091 = vunpack.c.l.b16 %v280
      %v1092 = vunpack.c.l.b16 %v281
      %v1093 = vunpack.c.l.b16 %v282
      %v1094 = vunpack.c.l.b16 %v283
      %v1095 = vunpack.c.l.b16 %v284
      %v1096 = vunpack.c.l.b16 %v285
      %v1097 = vunpack.c.l.b16 %v286
      %v1098 = vunpack.c.l.b16 %v287
      %v1099 = vunpack.c.l.b16 %v288
      %v1100 = vunpack.c.l.b16 %v289
      %v1101 = vunpack.c.l.b16 %v290
      %v1102 = vunpack.c.l.b16 %v291
      %v1103 = vunpack.c.l.b16 %v292
      %v1104 = vunpack.c.l.b16 %v293
      %v1105 = vunpack.c.l.b16 %v294
      %v1106 = vunpack.c.l.b16 %v295
      %v1107 = vunpack.c.l.b16 %v296
      %v1108 = vunpack.c.l.b16 %v297
      %v1109 = vunpack.c.l.b16 %v298
      %v1110 = vunpack.c.l.b16 %v299
      %v1111 = vunpack.c.l.b16 %v300
      %v1112 = vunpack.c.l.b16 %v301
      %v1113 = vunpack.c.l.b16 %v302
      %v1114 = vunpack.c.l.b16 %v303
      %v1115 = vunpack.c.l.b16 %v304
      %v1116 = vunpack.c.l.b16 %v305
      %v1117 = vunpack.c.l.b16 %v306
      %v1118 = vunpack.c.l.b16 %v307
      %v1119 = vunpack.c.l.b16 %v308
      %v1120 = vunpack.c.l.b16 %v309
      %v1121 = vunpack.c.l.b16 %v310
      %v1122 = vunpack.c.l.b16 %v311
      %v1123 = vunpack.c.l.b16 %v312
      %v1124 = vunpack.c.l.b16 %v313
      %v1125 = vunpack.c.l.b16 %v314
      %v1126 = vunpack.c.l.b16 %v315
      %v1127 = vunpack.c.l.b16 %v316
      %v1128 = vunpack.c.l.b16 %v317
      %v1129 = vunpack.c.l.b16 %v318
      %v1130 = vunpack.c.l.b16 %v319
      %v1131 = vunpack.c.l.b16 %v320
      %v1132 = vunpack.c.l.b16 %v321
      %v1133 = vunpack.c.l.b16 %v322
      %v1134 = vunpack.c.l.b16 %v323
      %v1135 = vunpack.c.l.b16 %v324
      %v1136 = vunpack.c.l.b16 %v325
      %v1137 = vunpack.c.l.b16 %v326
      %v1138 = vunpack.c.l.b16 %v327
      %v1139 = vunpack.c.l.b16 %v328
      %v1140 = vunpack.c.l.b16 %v329
      %v1141 = vunpack.c.l.b16 %v330
      %v1142 = vunpack.c.l.b16 %v331
      %v1143 = vunpack.c.l.b16 %v332
      %v1144 = vunpack.c.l.b16 %v333
      %v1145 = vunpack.c.l.b16 %v334
      %v1146 = vunpack.c.l.b16 %v335
      %v1147 = vunpack.c.l.b16 %v336
      %v1148 = vunpack.c.l.b16 %v337
      %v1149 = vunpack.c.l.b16 %v338
      %v1150 = vunpack.c.l.b16 %v339
      %v1151 = vunpack.c.l.b16 %v340
      %v1152 = vunpack.c.l.b16 %v341
      %v1153 = vpack.c.b16 %v1090, %v1089
      %v1154 = vpack.c.b16 %v1092, %v1091
      %v1155 = vpack.c.b16 %v1094, %v1093
      %v1156 = vpack.c.b16 %v1096, %v1095
      %v1157 = vpack.c.b16 %v1098, %v1097
      %v1158 = vpack.c.b16 %v1100, %v1099
      %v1159 = vpack.c.b16 %v1102, %v1101
      %v1160 = vpack.c.b16 %v1104, %v1103
      %v1161 = vpack.c.b16 %v1106, %v1105
      %v1162 = vpack.c.b16 %v1108, %v1107
      %v1163 = vpack.c.b16 %v1110, %v1109
      %v1164 = vpack.c.b16 %v1112, %v1111
      %v1165 = vpack.c.b16 %v1114, %v1113
      %v1166 = vpack.c.b16 %v1116, %v1115
      %v1167 = vpack.c.b16 %v1118, %v1117
      %v1168 = vpack.c.b16 %v1120, %v1119
      %v1169 = vpack.c.b16 %v1122, %v1121
      %v1170 = vpack.c.b16 %v1124, %v1123
      %v1171 = vpack.c.b16 %v1126, %v1125
      %v1172 = vpack.c.b16 %v1128, %v1127
      %v1173 = vpack.c.b16 %v1130, %v1129
      %v1174 = vpack.c.b16 %v1132, %v1131
      %v1175 = vpack.c.b16 %v1134, %v1133
      %v1176 = vpack.c.b16 %v1136, %v1135
      %v1177 = vpack.c.b16 %v1138, %v1137
      %v1178 = vpack.c.b16 %v1140, %v1139
      %v1179 = vpack.c.b16 %v1142, %v1141
      %v1180 = vpack.c.b16 %v1144, %v1143
      %v1181 = vpack.c.b16 %v1146, %v1145
      %v1182 = vpack.c.b16 %v1148, %v1147
      %v1183 = vpack.c.b16 %v1150, %v1149
      %v1184 = vpack.c.b16 %v1152, %v1151
      %v1186 = vsel %vm635, %v1153, 0
      %v1189 = vsel %vm635, %v1154, 0
      %v1192 = vsel %vm635, %v1155, 0
      %v1195 = vsel %vm635, %v1156, 0
      %v1198 = vsel %vm635, %v1157, 0
      %v1201 = vsel %vm635, %v1158, 0
      %v1204 = vsel %vm635, %v1159, 0
      %v1207 = vsel %vm635, %v1160, 0
      %v1210 = vsel %vm635, %v1161, 0
      %v1213 = vsel %vm635, %v1162, 0
      %v1216 = vsel %vm635, %v1163, 0
      %v1219 = vsel %vm635, %v1164, 0
      %v1222 = vsel %vm635, %v1165, 0
      %v1225 = vsel %vm635, %v1166, 0
      %v1228 = vsel %vm635, %v1167, 0
      %v1231 = vsel %vm635, %v1168, 0
      %v1234 = vsel %vm635, %v1169, 0
      %v1237 = vsel %vm635, %v1170, 0
      %v1240 = vsel %vm635, %v1171, 0
      %v1243 = vsel %vm635, %v1172, 0
      %v1246 = vsel %vm635, %v1173, 0
      %v1249 = vsel %vm635, %v1174, 0
      %v1252 = vsel %vm635, %v1175, 0
      %v1255 = vsel %vm635, %v1176, 0
      %v1258 = vsel %vm635, %v1177, 0
      %v1261 = vsel %vm635, %v1178, 0
      %v1264 = vsel %vm635, %v1179, 0
      %v1267 = vsel %vm635, %v1180, 0
      %v1270 = vsel %vm635, %v1181, 0
      %v1273 = vsel %vm635, %v1182, 0
      %v1276 = vsel %vm635, %v1183, 0
      %v1279 = vsel %vm635, %v1184, 0
      %v1282 = vsel %vm732, %v472, 0
      %1284 = vmatprep.subr.bf16.mxu0 0
      %1285 = vmatpush1.bf16.msra.mxu0 0
      %1286 = vmatprep.subr.bf16.mxu0 0
      %1287 = vmatpush1.bf16.msra.mxu0 0
      %1288 = vmatprep.subr.bf16.mxu0 0
      %1289 = vmatpush1.bf16.msra.mxu0 0
      %1290 = vmatprep.subr.bf16.mxu0 0
      %1291 = vmatpush1.bf16.msra.mxu0 0
      %1292 = vmatprep.subr.bf16.mxu0 0
      %1293 = vmatpush1.bf16.msra.mxu0 0
      %1294 = vmatprep.subr.bf16.mxu0 0
      %1295 = vmatpush1.bf16.msra.mxu0 0
      %1296 = vmatprep.subr.bf16.mxu0 0
      %1297 = vmatpush1.bf16.msra.mxu0 0
      %1298 = vmatprep.subr.bf16.mxu0 0
      %1299 = vmatpush1.bf16.msra.mxu0 %v1282
      %1300 = vmatprep.subr.bf16.mxu0 0
      %1301 = vmatpush2.bf16.msra.mxu0 0
      %1302 = vmatprep.subr.bf16.mxu0 0
      %1303 = vmatpush2.bf16.msra.mxu0 0
      %1304 = vmatprep.subr.bf16.mxu0 0
      %1305 = vmatpush2.bf16.msra.mxu0 0
      %1306 = vmatprep.subr.bf16.mxu0 0
      %1307 = vmatpush2.bf16.msra.mxu0 0
      %1308 = vmatprep.subr.bf16.mxu0 0
      %1309 = vmatpush2.bf16.msra.mxu0 0
      %1310 = vmatprep.subr.bf16.mxu0 0
      %1311 = vmatpush2.bf16.msra.mxu0 0
      %1312 = vmatprep.subr.bf16.mxu0 0
      %1313 = vmatpush2.bf16.msra.mxu0 0
      %1314 = vmatprep.subr.bf16.mxu0 0
      %1315 = vmatpush2.bf16.msra.mxu0 0
      %1316 = vmatprep.mubr.bf16.mxu0 0
      %1317 = vmatmul.mubr.bf16.gmra.mxu0 %v1186
      %v1318 = vpop.f32.mrf.mxu0
      %v1319 = vadd.f32 %v771, %v1318
      %v1320 = vpop.f32.mrf.mxu0
      %v1321 = vpop.f32.mrf.mxu0
      %v1322 = vadd.f32 %v774, %v1321
      %v1323 = vpop.f32.mrf.mxu0
      %1324 = vmatprep.mubr.bf16.mxu0 0
      %1325 = vmatmul.mubr.bf16.gmra.mxu0 %v1189
      %v1326 = vpop.f32.mrf.mxu0
      %v1327 = vadd.f32 %v779, %v1326
      %v1328 = vpop.f32.mrf.mxu0
      %v1329 = vpop.f32.mrf.mxu0
      %v1330 = vadd.f32 %v782, %v1329
      %v1331 = vpop.f32.mrf.mxu0
      %1332 = vmatprep.mubr.bf16.mxu0 0
      %1333 = vmatmul.mubr.bf16.gmra.mxu0 %v1192
      %v1334 = vpop.f32.mrf.mxu0
      %v1335 = vadd.f32 %v787, %v1334
      %v1336 = vpop.f32.mrf.mxu0
      %v1337 = vpop.f32.mrf.mxu0
      %v1338 = vadd.f32 %v790, %v1337
      %v1339 = vpop.f32.mrf.mxu0
      %1340 = vmatprep.mubr.bf16.mxu0 0
      %1341 = vmatmul.mubr.bf16.gmra.mxu0 %v1195
      %v1342 = vpop.f32.mrf.mxu0
      %v1343 = vadd.f32 %v795, %v1342
      %v1344 = vpop.f32.mrf.mxu0
      %v1345 = vpop.f32.mrf.mxu0
      %v1346 = vadd.f32 %v798, %v1345
      %v1347 = vpop.f32.mrf.mxu0
      %1348 = vmatprep.mubr.bf16.mxu0 0
      %1349 = vmatmul.mubr.bf16.gmra.mxu0 %v1198
      %v1350 = vpop.f32.mrf.mxu0
      %v1351 = vadd.f32 %v803, %v1350
      %v1352 = vpop.f32.mrf.mxu0
      %v1353 = vpop.f32.mrf.mxu0
      %v1354 = vadd.f32 %v806, %v1353
      %v1355 = vpop.f32.mrf.mxu0
      %1356 = vmatprep.mubr.bf16.mxu0 0
      %1357 = vmatmul.mubr.bf16.gmra.mxu0 %v1201
      %v1358 = vpop.f32.mrf.mxu0
      %v1359 = vadd.f32 %v811, %v1358
      %v1360 = vpop.f32.mrf.mxu0
      %v1361 = vpop.f32.mrf.mxu0
      %v1362 = vadd.f32 %v814, %v1361
      %v1363 = vpop.f32.mrf.mxu0
      %1364 = vmatprep.mubr.bf16.mxu0 0
      %1365 = vmatmul.mubr.bf16.gmra.mxu0 %v1204
      %v1366 = vpop.f32.mrf.mxu0
      %v1367 = vadd.f32 %v819, %v1366
      %v1368 = vpop.f32.mrf.mxu0
      %v1369 = vpop.f32.mrf.mxu0
      %v1370 = vadd.f32 %v822, %v1369
      %v1371 = vpop.f32.mrf.mxu0
      %1372 = vmatprep.mubr.bf16.mxu0 0
      %1373 = vmatmul.mubr.bf16.gmra.mxu0 %v1207
      %v1374 = vpop.f32.mrf.mxu0
      %v1375 = vadd.f32 %v827, %v1374
      %v1376 = vpop.f32.mrf.mxu0
      %v1377 = vpop.f32.mrf.mxu0
      %v1378 = vadd.f32 %v830, %v1377
      %v1379 = vpop.f32.mrf.mxu0
      %1380 = vmatprep.mubr.bf16.mxu0 0
      %1381 = vmatmul.mubr.bf16.gmra.mxu0 %v1210
      %v1382 = vpop.f32.mrf.mxu0
      %v1383 = vadd.f32 %v835, %v1382
      %v1384 = vpop.f32.mrf.mxu0
      %v1385 = vpop.f32.mrf.mxu0
      %v1386 = vadd.f32 %v838, %v1385
      %v1387 = vpop.f32.mrf.mxu0
      %1388 = vmatprep.mubr.bf16.mxu0 0
      %1389 = vmatmul.mubr.bf16.gmra.mxu0 %v1213
      %v1390 = vpop.f32.mrf.mxu0
      %v1391 = vadd.f32 %v843, %v1390
      %v1392 = vpop.f32.mrf.mxu0
      %v1393 = vpop.f32.mrf.mxu0
      %v1394 = vadd.f32 %v846, %v1393
      %v1395 = vpop.f32.mrf.mxu0
      %1396 = vmatprep.mubr.bf16.mxu0 0
      %1397 = vmatmul.mubr.bf16.gmra.mxu0 %v1216
      %v1398 = vpop.f32.mrf.mxu0
      %v1399 = vadd.f32 %v851, %v1398
      %v1400 = vpop.f32.mrf.mxu0
      %v1401 = vpop.f32.mrf.mxu0
      %v1402 = vadd.f32 %v854, %v1401
      %v1403 = vpop.f32.mrf.mxu0
      %1404 = vmatprep.mubr.bf16.mxu0 0
      %1405 = vmatmul.mubr.bf16.gmra.mxu0 %v1219
      %v1406 = vpop.f32.mrf.mxu0
      %v1407 = vadd.f32 %v859, %v1406
      %v1408 = vpop.f32.mrf.mxu0
      %v1409 = vpop.f32.mrf.mxu0
      %v1410 = vadd.f32 %v862, %v1409
      %v1411 = vpop.f32.mrf.mxu0
      %1412 = vmatprep.mubr.bf16.mxu0 0
      %1413 = vmatmul.mubr.bf16.gmra.mxu0 %v1222
      %v1414 = vpop.f32.mrf.mxu0
      %v1415 = vadd.f32 %v867, %v1414
      %v1416 = vpop.f32.mrf.mxu0
      %v1417 = vpop.f32.mrf.mxu0
      %v1418 = vadd.f32 %v870, %v1417
      %v1419 = vpop.f32.mrf.mxu0
      %1420 = vmatprep.mubr.bf16.mxu0 0
      %1421 = vmatmul.mubr.bf16.gmra.mxu0 %v1225
      %v1422 = vpop.f32.mrf.mxu0
      %v1423 = vadd.f32 %v875, %v1422
      %v1424 = vpop.f32.mrf.mxu0
      %v1425 = vpop.f32.mrf.mxu0
      %v1426 = vadd.f32 %v878, %v1425
      %v1427 = vpop.f32.mrf.mxu0
      %1428 = vmatprep.mubr.bf16.mxu0 0
      %1429 = vmatmul.mubr.bf16.gmra.mxu0 %v1228
      %v1430 = vpop.f32.mrf.mxu0
      %v1431 = vadd.f32 %v883, %v1430
      %v1432 = vpop.f32.mrf.mxu0
      %v1433 = vpop.f32.mrf.mxu0
      %v1434 = vadd.f32 %v886, %v1433
      %v1435 = vpop.f32.mrf.mxu0
      %1436 = vmatprep.mubr.bf16.mxu0 0
      %1437 = vmatmul.mubr.bf16.gmra.mxu0 %v1231
      %v1438 = vpop.f32.mrf.mxu0
      %v1439 = vadd.f32 %v891, %v1438
      %v1440 = vpop.f32.mrf.mxu0
      %v1441 = vpop.f32.mrf.mxu0
      %v1442 = vadd.f32 %v894, %v1441
      %v1443 = vpop.f32.mrf.mxu0
      %1444 = vmatprep.mubr.bf16.mxu0 0
      %1445 = vmatmul.mubr.bf16.gmra.mxu0 %v1234
      %v1446 = vpop.f32.mrf.mxu0
      %v1447 = vadd.f32 %v899, %v1446
      %v1448 = vpop.f32.mrf.mxu0
      %v1449 = vpop.f32.mrf.mxu0
      %v1450 = vadd.f32 %v902, %v1449
      %v1451 = vpop.f32.mrf.mxu0
      %1452 = vmatprep.mubr.bf16.mxu0 0
      %1453 = vmatmul.mubr.bf16.gmra.mxu0 %v1237
      %v1454 = vpop.f32.mrf.mxu0
      %v1455 = vadd.f32 %v907, %v1454
      %v1456 = vpop.f32.mrf.mxu0
      %v1457 = vpop.f32.mrf.mxu0
      %v1458 = vadd.f32 %v910, %v1457
      %v1459 = vpop.f32.mrf.mxu0
      %1460 = vmatprep.mubr.bf16.mxu0 0
      %1461 = vmatmul.mubr.bf16.gmra.mxu0 %v1240
      %v1462 = vpop.f32.mrf.mxu0
      %v1463 = vadd.f32 %v915, %v1462
      %v1464 = vpop.f32.mrf.mxu0
      %v1465 = vpop.f32.mrf.mxu0
      %v1466 = vadd.f32 %v918, %v1465
      %v1467 = vpop.f32.mrf.mxu0
      %1468 = vmatprep.mubr.bf16.mxu0 0
      %1469 = vmatmul.mubr.bf16.gmra.mxu0 %v1243
      %v1470 = vpop.f32.mrf.mxu0
      %v1471 = vadd.f32 %v923, %v1470
      %v1472 = vpop.f32.mrf.mxu0
      %v1473 = vpop.f32.mrf.mxu0
      %v1474 = vadd.f32 %v926, %v1473
      %v1475 = vpop.f32.mrf.mxu0
      %1476 = vmatprep.mubr.bf16.mxu0 0
      %1477 = vmatmul.mubr.bf16.gmra.mxu0 %v1246
      %v1478 = vpop.f32.mrf.mxu0
      %v1479 = vadd.f32 %v931, %v1478
      %v1480 = vpop.f32.mrf.mxu0
      %v1481 = vpop.f32.mrf.mxu0
      %v1482 = vadd.f32 %v934, %v1481
      %v1483 = vpop.f32.mrf.mxu0
      %1484 = vmatprep.mubr.bf16.mxu0 0
      %1485 = vmatmul.mubr.bf16.gmra.mxu0 %v1249
      %v1486 = vpop.f32.mrf.mxu0
      %v1487 = vadd.f32 %v939, %v1486
      %v1488 = vpop.f32.mrf.mxu0
      %v1489 = vpop.f32.mrf.mxu0
      %v1490 = vadd.f32 %v942, %v1489
      %v1491 = vpop.f32.mrf.mxu0
      %1492 = vmatprep.mubr.bf16.mxu0 0
      %1493 = vmatmul.mubr.bf16.gmra.mxu0 %v1252
      %v1494 = vpop.f32.mrf.mxu0
      %v1495 = vadd.f32 %v947, %v1494
      %v1496 = vpop.f32.mrf.mxu0
      %v1497 = vpop.f32.mrf.mxu0
      %v1498 = vadd.f32 %v950, %v1497
      %v1499 = vpop.f32.mrf.mxu0
      %1500 = vmatprep.mubr.bf16.mxu0 0
      %1501 = vmatmul.mubr.bf16.gmra.mxu0 %v1255
      %v1502 = vpop.f32.mrf.mxu0
      %v1503 = vadd.f32 %v955, %v1502
      %v1504 = vpop.f32.mrf.mxu0
      %v1505 = vpop.f32.mrf.mxu0
      %v1506 = vadd.f32 %v958, %v1505
      %v1507 = vpop.f32.mrf.mxu0
      %1508 = vmatprep.mubr.bf16.mxu0 0
      %1509 = vmatmul.mubr.bf16.gmra.mxu0 %v1258
      %v1510 = vpop.f32.mrf.mxu0
      %v1511 = vadd.f32 %v963, %v1510
      %v1512 = vpop.f32.mrf.mxu0
      %v1513 = vpop.f32.mrf.mxu0
      %v1514 = vadd.f32 %v966, %v1513
      %v1515 = vpop.f32.mrf.mxu0
      %1516 = vmatprep.mubr.bf16.mxu0 0
      %1517 = vmatmul.mubr.bf16.gmra.mxu0 %v1261
      %v1518 = vpop.f32.mrf.mxu0
      %v1519 = vadd.f32 %v971, %v1518
      %v1520 = vpop.f32.mrf.mxu0
      %v1521 = vpop.f32.mrf.mxu0
      %v1522 = vadd.f32 %v974, %v1521
      %v1523 = vpop.f32.mrf.mxu0
      %1524 = vmatprep.mubr.bf16.mxu0 0
      %1525 = vmatmul.mubr.bf16.gmra.mxu0 %v1264
      %v1526 = vpop.f32.mrf.mxu0
      %v1527 = vadd.f32 %v979, %v1526
      %v1528 = vpop.f32.mrf.mxu0
      %v1529 = vpop.f32.mrf.mxu0
      %v1530 = vadd.f32 %v982, %v1529
      %v1531 = vpop.f32.mrf.mxu0
      %1532 = vmatprep.mubr.bf16.mxu0 0
      %1533 = vmatmul.mubr.bf16.gmra.mxu0 %v1267
      %v1534 = vpop.f32.mrf.mxu0
      %v1535 = vadd.f32 %v987, %v1534
      %v1536 = vpop.f32.mrf.mxu0
      %v1537 = vpop.f32.mrf.mxu0
      %v1538 = vadd.f32 %v990, %v1537
      %v1539 = vpop.f32.mrf.mxu0
      %1540 = vmatprep.mubr.bf16.mxu0 0
      %1541 = vmatmul.mubr.bf16.gmra.mxu0 %v1270
      %v1542 = vpop.f32.mrf.mxu0
      %v1543 = vadd.f32 %v995, %v1542
      %v1544 = vpop.f32.mrf.mxu0
      %v1545 = vpop.f32.mrf.mxu0
      %v1546 = vadd.f32 %v998, %v1545
      %v1547 = vpop.f32.mrf.mxu0
      %1548 = vmatprep.mubr.bf16.mxu0 0
      %1549 = vmatmul.mubr.bf16.gmra.mxu0 %v1273
      %v1550 = vpop.f32.mrf.mxu0
      %v1551 = vadd.f32 %v1003, %v1550
      %v1552 = vpop.f32.mrf.mxu0
      %v1553 = vpop.f32.mrf.mxu0
      %v1554 = vadd.f32 %v1006, %v1553
      %v1555 = vpop.f32.mrf.mxu0
      %1556 = vmatprep.mubr.bf16.mxu0 0
      %1557 = vmatmul.mubr.bf16.gmra.mxu0 %v1276
      %v1558 = vpop.f32.mrf.mxu0
      %v1559 = vadd.f32 %v1011, %v1558
      %v1560 = vpop.f32.mrf.mxu0
      %v1561 = vpop.f32.mrf.mxu0
      %v1562 = vadd.f32 %v1014, %v1561
      %v1563 = vpop.f32.mrf.mxu0
      %1564 = vmatprep.mubr.bf16.mxu0 0
      %1565 = vmatmul.mubr.bf16.gmra.mxu0 %v1279
      %v1566 = vpop.f32.mrf.mxu0
      %v1567 = vadd.f32 %v1019, %v1566
      %v1568 = vpop.f32.mrf.mxu0
      %v1569 = vpop.f32.mrf.mxu0
      %v1570 = vadd.f32 %v1022, %v1569
      %v1571 = vpop.f32.mrf.mxu0
      %1572 = vdwg.mxu0
      %s1573 = scalar_lea.vmem %s1, 12
      %v1574 = vld [vmem:[%s1573] sm:$0x3]
      %v1639 = vunpack.c.l.b16 %v408
      %v1640 = vunpack.c.l.b16 %v409
      %v1641 = vunpack.c.l.b16 %v410
      %v1642 = vunpack.c.l.b16 %v411
      %v1643 = vunpack.c.l.b16 %v412
      %v1644 = vunpack.c.l.b16 %v413
      %v1645 = vunpack.c.l.b16 %v414
      %v1646 = vunpack.c.l.b16 %v415
      %v1647 = vunpack.c.l.b16 %v416
      %v1648 = vunpack.c.l.b16 %v417
      %v1649 = vunpack.c.l.b16 %v418
      %v1650 = vunpack.c.l.b16 %v419
      %v1651 = vunpack.c.l.b16 %v420
      %v1652 = vunpack.c.l.b16 %v421
      %v1653 = vunpack.c.l.b16 %v422
      %v1654 = vunpack.c.l.b16 %v423
      %v1655 = vunpack.c.l.b16 %v424
      %v1656 = vunpack.c.l.b16 %v425
      %v1657 = vunpack.c.l.b16 %v426
      %v1658 = vunpack.c.l.b16 %v427
      %v1659 = vunpack.c.l.b16 %v428
      %v1660 = vunpack.c.l.b16 %v429
      %v1661 = vunpack.c.l.b16 %v430
      %v1662 = vunpack.c.l.b16 %v431
      %v1663 = vunpack.c.l.b16 %v432
      %v1664 = vunpack.c.l.b16 %v433
      %v1665 = vunpack.c.l.b16 %v434
      %v1666 = vunpack.c.l.b16 %v435
      %v1667 = vunpack.c.l.b16 %v436
      %v1668 = vunpack.c.l.b16 %v437
      %v1669 = vunpack.c.l.b16 %v438
      %v1670 = vunpack.c.l.b16 %v439
      %v1671 = vunpack.c.l.b16 %v440
      %v1672 = vunpack.c.l.b16 %v441
      %v1673 = vunpack.c.l.b16 %v442
      %v1674 = vunpack.c.l.b16 %v443
      %v1675 = vunpack.c.l.b16 %v444
      %v1676 = vunpack.c.l.b16 %v445
      %v1677 = vunpack.c.l.b16 %v446
      %v1678 = vunpack.c.l.b16 %v447
      %v1679 = vunpack.c.l.b16 %v448
      %v1680 = vunpack.c.l.b16 %v449
      %v1681 = vunpack.c.l.b16 %v450
      %v1682 = vunpack.c.l.b16 %v451
      %v1683 = vunpack.c.l.b16 %v452
      %v1684 = vunpack.c.l.b16 %v453
      %v1685 = vunpack.c.l.b16 %v454
      %v1686 = vunpack.c.l.b16 %v455
      %v1687 = vunpack.c.l.b16 %v456
      %v1688 = vunpack.c.l.b16 %v457
      %v1689 = vunpack.c.l.b16 %v458
      %v1690 = vunpack.c.l.b16 %v459
      %v1691 = vunpack.c.l.b16 %v460
      %v1692 = vunpack.c.l.b16 %v461
      %v1693 = vunpack.c.l.b16 %v462
      %v1694 = vunpack.c.l.b16 %v463
      %v1695 = vunpack.c.l.b16 %v464
      %v1696 = vunpack.c.l.b16 %v465
      %v1697 = vunpack.c.l.b16 %v466
      %v1698 = vunpack.c.l.b16 %v467
      %v1699 = vunpack.c.l.b16 %v468
      %v1700 = vunpack.c.l.b16 %v469
      %v1701 = vunpack.c.l.b16 %v470
      %v1702 = vunpack.c.l.b16 %v471
      %v1703 = vpack.c.b16 %v1640, %v1639
      %v1704 = vpack.c.b16 %v1642, %v1641
      %v1705 = vpack.c.b16 %v1644, %v1643
      %v1706 = vpack.c.b16 %v1646, %v1645
      %v1707 = vpack.c.b16 %v1648, %v1647
      %v1708 = vpack.c.b16 %v1650, %v1649
      %v1709 = vpack.c.b16 %v1652, %v1651
      %v1710 = vpack.c.b16 %v1654, %v1653
      %v1711 = vpack.c.b16 %v1656, %v1655
      %v1712 = vpack.c.b16 %v1658, %v1657
      %v1713 = vpack.c.b16 %v1660, %v1659
      %v1714 = vpack.c.b16 %v1662, %v1661
      %v1715 = vpack.c.b16 %v1664, %v1663
      %v1716 = vpack.c.b16 %v1666, %v1665
      %v1717 = vpack.c.b16 %v1668, %v1667
      %v1718 = vpack.c.b16 %v1670, %v1669
      %v1719 = vpack.c.b16 %v1672, %v1671
      %v1720 = vpack.c.b16 %v1674, %v1673
      %v1721 = vpack.c.b16 %v1676, %v1675
      %v1722 = vpack.c.b16 %v1678, %v1677
      %v1723 = vpack.c.b16 %v1680, %v1679
      %v1724 = vpack.c.b16 %v1682, %v1681
      %v1725 = vpack.c.b16 %v1684, %v1683
      %v1726 = vpack.c.b16 %v1686, %v1685
      %v1727 = vpack.c.b16 %v1688, %v1687
      %v1728 = vpack.c.b16 %v1690, %v1689
      %v1729 = vpack.c.b16 %v1692, %v1691
      %v1730 = vpack.c.b16 %v1694, %v1693
      %v1731 = vpack.c.b16 %v1696, %v1695
      %v1732 = vpack.c.b16 %v1698, %v1697
      %v1733 = vpack.c.b16 %v1700, %v1699
      %v1734 = vpack.c.b16 %v1702, %v1701
      %v1736 = vsel %vm635, %v1703, 0
      %v1739 = vsel %vm635, %v1704, 0
      %v1742 = vsel %vm635, %v1705, 0
      %v1745 = vsel %vm635, %v1706, 0
      %v1748 = vsel %vm635, %v1707, 0
      %v1751 = vsel %vm635, %v1708, 0
      %v1754 = vsel %vm635, %v1709, 0
      %v1757 = vsel %vm635, %v1710, 0
      %v1760 = vsel %vm635, %v1711, 0
      %v1763 = vsel %vm635, %v1712, 0
      %v1766 = vsel %vm635, %v1713, 0
      %v1769 = vsel %vm635, %v1714, 0
      %v1772 = vsel %vm635, %v1715, 0
      %v1775 = vsel %vm635, %v1716, 0
      %v1778 = vsel %vm635, %v1717, 0
      %v1781 = vsel %vm635, %v1718, 0
      %v1784 = vsel %vm635, %v1719, 0
      %v1787 = vsel %vm635, %v1720, 0
      %v1790 = vsel %vm635, %v1721, 0
      %v1793 = vsel %vm635, %v1722, 0
      %v1796 = vsel %vm635, %v1723, 0
      %v1799 = vsel %vm635, %v1724, 0
      %v1802 = vsel %vm635, %v1725, 0
      %v1805 = vsel %vm635, %v1726, 0
      %v1808 = vsel %vm635, %v1727, 0
      %v1811 = vsel %vm635, %v1728, 0
      %v1814 = vsel %vm635, %v1729, 0
      %v1817 = vsel %vm635, %v1730, 0
      %v1820 = vsel %vm635, %v1731, 0
      %v1823 = vsel %vm635, %v1732, 0
      %v1826 = vsel %vm635, %v1733, 0
      %v1829 = vsel %vm635, %v1734, 0
      %v1832 = vsel %vm732, %v1574, 0
      %1834 = vmatprep.subr.bf16.mxu0 0
      %1835 = vmatpush1.bf16.msra.mxu0 0
      %1836 = vmatprep.subr.bf16.mxu0 0
      %1837 = vmatpush1.bf16.msra.mxu0 0
      %1838 = vmatprep.subr.bf16.mxu0 0
      %1839 = vmatpush1.bf16.msra.mxu0 0
      %1840 = vmatprep.subr.bf16.mxu0 0
      %1841 = vmatpush1.bf16.msra.mxu0 0
      %1842 = vmatprep.subr.bf16.mxu0 0
      %1843 = vmatpush1.bf16.msra.mxu0 0
      %1844 = vmatprep.subr.bf16.mxu0 0
      %1845 = vmatpush1.bf16.msra.mxu0 0
      %1846 = vmatprep.subr.bf16.mxu0 0
      %1847 = vmatpush1.bf16.msra.mxu0 0
      %1848 = vmatprep.subr.bf16.mxu0 0
      %1849 = vmatpush1.bf16.msra.mxu0 %v1832
      %1850 = vmatprep.subr.bf16.mxu0 0
      %1851 = vmatpush2.bf16.msra.mxu0 0
      %1852 = vmatprep.subr.bf16.mxu0 0
      %1853 = vmatpush2.bf16.msra.mxu0 0
      %1854 = vmatprep.subr.bf16.mxu0 0
      %1855 = vmatpush2.bf16.msra.mxu0 0
      %1856 = vmatprep.subr.bf16.mxu0 0
      %1857 = vmatpush2.bf16.msra.mxu0 0
      %1858 = vmatprep.subr.bf16.mxu0 0
      %1859 = vmatpush2.bf16.msra.mxu0 0
      %1860 = vmatprep.subr.bf16.mxu0 0
      %1861 = vmatpush2.bf16.msra.mxu0 0
      %1862 = vmatprep.subr.bf16.mxu0 0
      %1863 = vmatpush2.bf16.msra.mxu0 0
      %1864 = vmatprep.subr.bf16.mxu0 0
      %1865 = vmatpush2.bf16.msra.mxu0 0
      %1866 = vmatprep.mubr.bf16.mxu0 0
      %1867 = vmatmul.mubr.bf16.gmra.mxu0 %v1736
      %v1868 = vpop.f32.mrf.mxu0
      %v1869 = vadd.f32 0.0, %v1868
      %v1870 = vpop.f32.mrf.mxu0
      %v1871 = vpop.f32.mrf.mxu0
      %v1872 = vadd.f32 0.0, %v1871
      %v1873 = vpop.f32.mrf.mxu0
      %1874 = vmatprep.mubr.bf16.mxu0 0
      %1875 = vmatmul.mubr.bf16.gmra.mxu0 %v1739
      %v1876 = vpop.f32.mrf.mxu0
      %v1877 = vadd.f32 0.0, %v1876
      %v1878 = vpop.f32.mrf.mxu0
      %v1879 = vpop.f32.mrf.mxu0
      %v1880 = vadd.f32 0.0, %v1879
      %v1881 = vpop.f32.mrf.mxu0
      %1882 = vmatprep.mubr.bf16.mxu0 0
      %1883 = vmatmul.mubr.bf16.gmra.mxu0 %v1742
      %v1884 = vpop.f32.mrf.mxu0
      %v1885 = vadd.f32 0.0, %v1884
      %v1886 = vpop.f32.mrf.mxu0
      %v1887 = vpop.f32.mrf.mxu0
      %v1888 = vadd.f32 0.0, %v1887
      %v1889 = vpop.f32.mrf.mxu0
      %1890 = vmatprep.mubr.bf16.mxu0 0
      %1891 = vmatmul.mubr.bf16.gmra.mxu0 %v1745
      %v1892 = vpop.f32.mrf.mxu0
      %v1893 = vadd.f32 0.0, %v1892
      %v1894 = vpop.f32.mrf.mxu0
      %v1895 = vpop.f32.mrf.mxu0
      %v1896 = vadd.f32 0.0, %v1895
      %v1897 = vpop.f32.mrf.mxu0
      %1898 = vmatprep.mubr.bf16.mxu0 0
      %1899 = vmatmul.mubr.bf16.gmra.mxu0 %v1748
      %v1900 = vpop.f32.mrf.mxu0
      %v1901 = vadd.f32 0.0, %v1900
      %v1902 = vpop.f32.mrf.mxu0
      %v1903 = vpop.f32.mrf.mxu0
      %v1904 = vadd.f32 0.0, %v1903
      %v1905 = vpop.f32.mrf.mxu0
      %1906 = vmatprep.mubr.bf16.mxu0 0
      %1907 = vmatmul.mubr.bf16.gmra.mxu0 %v1751
      %v1908 = vpop.f32.mrf.mxu0
      %v1909 = vadd.f32 0.0, %v1908
      %v1910 = vpop.f32.mrf.mxu0
      %v1911 = vpop.f32.mrf.mxu0
      %v1912 = vadd.f32 0.0, %v1911
      %v1913 = vpop.f32.mrf.mxu0
      %1914 = vmatprep.mubr.bf16.mxu0 0
      %1915 = vmatmul.mubr.bf16.gmra.mxu0 %v1754
      %v1916 = vpop.f32.mrf.mxu0
      %v1917 = vadd.f32 0.0, %v1916
      %v1918 = vpop.f32.mrf.mxu0
      %v1919 = vpop.f32.mrf.mxu0
      %v1920 = vadd.f32 0.0, %v1919
      %v1921 = vpop.f32.mrf.mxu0
      %1922 = vmatprep.mubr.bf16.mxu0 0
      %1923 = vmatmul.mubr.bf16.gmra.mxu0 %v1757
      %v1924 = vpop.f32.mrf.mxu0
      %v1925 = vadd.f32 0.0, %v1924
      %v1926 = vpop.f32.mrf.mxu0
      %v1927 = vpop.f32.mrf.mxu0
      %v1928 = vadd.f32 0.0, %v1927
      %v1929 = vpop.f32.mrf.mxu0
      %1930 = vmatprep.mubr.bf16.mxu0 0
      %1931 = vmatmul.mubr.bf16.gmra.mxu0 %v1760
      %v1932 = vpop.f32.mrf.mxu0
      %v1933 = vadd.f32 0.0, %v1932
      %v1934 = vpop.f32.mrf.mxu0
      %v1935 = vpop.f32.mrf.mxu0
      %v1936 = vadd.f32 0.0, %v1935
      %v1937 = vpop.f32.mrf.mxu0
      %1938 = vmatprep.mubr.bf16.mxu0 0
      %1939 = vmatmul.mubr.bf16.gmra.mxu0 %v1763
      %v1940 = vpop.f32.mrf.mxu0
      %v1941 = vadd.f32 0.0, %v1940
      %v1942 = vpop.f32.mrf.mxu0
      %v1943 = vpop.f32.mrf.mxu0
      %v1944 = vadd.f32 0.0, %v1943
      %v1945 = vpop.f32.mrf.mxu0
      %1946 = vmatprep.mubr.bf16.mxu0 0
      %1947 = vmatmul.mubr.bf16.gmra.mxu0 %v1766
      %v1948 = vpop.f32.mrf.mxu0
      %v1949 = vadd.f32 0.0, %v1948
      %v1950 = vpop.f32.mrf.mxu0
      %v1951 = vpop.f32.mrf.mxu0
      %v1952 = vadd.f32 0.0, %v1951
      %v1953 = vpop.f32.mrf.mxu0
      %1954 = vmatprep.mubr.bf16.mxu0 0
      %1955 = vmatmul.mubr.bf16.gmra.mxu0 %v1769
      %v1956 = vpop.f32.mrf.mxu0
      %v1957 = vadd.f32 0.0, %v1956
      %v1958 = vpop.f32.mrf.mxu0
      %v1959 = vpop.f32.mrf.mxu0
      %v1960 = vadd.f32 0.0, %v1959
      %v1961 = vpop.f32.mrf.mxu0
      %1962 = vmatprep.mubr.bf16.mxu0 0
      %1963 = vmatmul.mubr.bf16.gmra.mxu0 %v1772
      %v1964 = vpop.f32.mrf.mxu0
      %v1965 = vadd.f32 0.0, %v1964
      %v1966 = vpop.f32.mrf.mxu0
      %v1967 = vpop.f32.mrf.mxu0
      %v1968 = vadd.f32 0.0, %v1967
      %v1969 = vpop.f32.mrf.mxu0
      %1970 = vmatprep.mubr.bf16.mxu0 0
      %1971 = vmatmul.mubr.bf16.gmra.mxu0 %v1775
      %v1972 = vpop.f32.mrf.mxu0
      %v1973 = vadd.f32 0.0, %v1972
      %v1974 = vpop.f32.mrf.mxu0
      %v1975 = vpop.f32.mrf.mxu0
      %v1976 = vadd.f32 0.0, %v1975
      %v1977 = vpop.f32.mrf.mxu0
      %1978 = vmatprep.mubr.bf16.mxu0 0
      %1979 = vmatmul.mubr.bf16.gmra.mxu0 %v1778
      %v1980 = vpop.f32.mrf.mxu0
      %v1981 = vadd.f32 0.0, %v1980
      %v1982 = vpop.f32.mrf.mxu0
      %v1983 = vpop.f32.mrf.mxu0
      %v1984 = vadd.f32 0.0, %v1983
      %v1985 = vpop.f32.mrf.mxu0
      %1986 = vmatprep.mubr.bf16.mxu0 0
      %1987 = vmatmul.mubr.bf16.gmra.mxu0 %v1781
      %v1988 = vpop.f32.mrf.mxu0
      %v1989 = vadd.f32 0.0, %v1988
      %v1990 = vpop.f32.mrf.mxu0
      %v1991 = vpop.f32.mrf.mxu0
      %v1992 = vadd.f32 0.0, %v1991
      %v1993 = vpop.f32.mrf.mxu0
      %1994 = vmatprep.mubr.bf16.mxu0 0
      %1995 = vmatmul.mubr.bf16.gmra.mxu0 %v1784
      %v1996 = vpop.f32.mrf.mxu0
      %v1997 = vadd.f32 0.0, %v1996
      %v1998 = vpop.f32.mrf.mxu0
      %v1999 = vpop.f32.mrf.mxu0
      %v2000 = vadd.f32 0.0, %v1999
      %v2001 = vpop.f32.mrf.mxu0
      %2002 = vmatprep.mubr.bf16.mxu0 0
      %2003 = vmatmul.mubr.bf16.gmra.mxu0 %v1787
      %v2004 = vpop.f32.mrf.mxu0
      %v2005 = vadd.f32 0.0, %v2004
      %v2006 = vpop.f32.mrf.mxu0
      %v2007 = vpop.f32.mrf.mxu0
      %v2008 = vadd.f32 0.0, %v2007
      %v2009 = vpop.f32.mrf.mxu0
      %2010 = vmatprep.mubr.bf16.mxu0 0
      %2011 = vmatmul.mubr.bf16.gmra.mxu0 %v1790
      %v2012 = vpop.f32.mrf.mxu0
      %v2013 = vadd.f32 0.0, %v2012
      %v2014 = vpop.f32.mrf.mxu0
      %v2015 = vpop.f32.mrf.mxu0
      %v2016 = vadd.f32 0.0, %v2015
      %v2017 = vpop.f32.mrf.mxu0
      %2018 = vmatprep.mubr.bf16.mxu0 0
      %2019 = vmatmul.mubr.bf16.gmra.mxu0 %v1793
      %v2020 = vpop.f32.mrf.mxu0
      %v2021 = vadd.f32 0.0, %v2020
      %v2022 = vpop.f32.mrf.mxu0
      %v2023 = vpop.f32.mrf.mxu0
      %v2024 = vadd.f32 0.0, %v2023
      %v2025 = vpop.f32.mrf.mxu0
      %2026 = vmatprep.mubr.bf16.mxu0 0
      %2027 = vmatmul.mubr.bf16.gmra.mxu0 %v1796
      %v2028 = vpop.f32.mrf.mxu0
      %v2029 = vadd.f32 0.0, %v2028
      %v2030 = vpop.f32.mrf.mxu0
      %v2031 = vpop.f32.mrf.mxu0
      %v2032 = vadd.f32 0.0, %v2031
      %v2033 = vpop.f32.mrf.mxu0
      %2034 = vmatprep.mubr.bf16.mxu0 0
      %2035 = vmatmul.mubr.bf16.gmra.mxu0 %v1799
      %v2036 = vpop.f32.mrf.mxu0
      %v2037 = vadd.f32 0.0, %v2036
      %v2038 = vpop.f32.mrf.mxu0
      %v2039 = vpop.f32.mrf.mxu0
      %v2040 = vadd.f32 0.0, %v2039
      %v2041 = vpop.f32.mrf.mxu0
      %2042 = vmatprep.mubr.bf16.mxu0 0
      %2043 = vmatmul.mubr.bf16.gmra.mxu0 %v1802
      %v2044 = vpop.f32.mrf.mxu0
      %v2045 = vadd.f32 0.0, %v2044
      %v2046 = vpop.f32.mrf.mxu0
      %v2047 = vpop.f32.mrf.mxu0
      %v2048 = vadd.f32 0.0, %v2047
      %v2049 = vpop.f32.mrf.mxu0
      %2050 = vmatprep.mubr.bf16.mxu0 0
      %2051 = vmatmul.mubr.bf16.gmra.mxu0 %v1805
      %v2052 = vpop.f32.mrf.mxu0
      %v2053 = vadd.f32 0.0, %v2052
      %v2054 = vpop.f32.mrf.mxu0
      %v2055 = vpop.f32.mrf.mxu0
      %v2056 = vadd.f32 0.0, %v2055
      %v2057 = vpop.f32.mrf.mxu0
      %2058 = vmatprep.mubr.bf16.mxu0 0
      %2059 = vmatmul.mubr.bf16.gmra.mxu0 %v1808
      %v2060 = vpop.f32.mrf.mxu0
      %v2061 = vadd.f32 0.0, %v2060
      %v2062 = vpop.f32.mrf.mxu0
      %v2063 = vpop.f32.mrf.mxu0
      %v2064 = vadd.f32 0.0, %v2063
      %v2065 = vpop.f32.mrf.mxu0
      %2066 = vmatprep.mubr.bf16.mxu0 0
      %2067 = vmatmul.mubr.bf16.gmra.mxu0 %v1811
      %v2068 = vpop.f32.mrf.mxu0
      %v2069 = vadd.f32 0.0, %v2068
      %v2070 = vpop.f32.mrf.mxu0
      %v2071 = vpop.f32.mrf.mxu0
      %v2072 = vadd.f32 0.0, %v2071
      %v2073 = vpop.f32.mrf.mxu0
      %2074 = vmatprep.mubr.bf16.mxu0 0
      %2075 = vmatmul.mubr.bf16.gmra.mxu0 %v1814
      %v2076 = vpop.f32.mrf.mxu0
      %v2077 = vadd.f32 0.0, %v2076
      %v2078 = vpop.f32.mrf.mxu0
      %v2079 = vpop.f32.mrf.mxu0
      %v2080 = vadd.f32 0.0, %v2079
      %v2081 = vpop.f32.mrf.mxu0
      %2082 = vmatprep.mubr.bf16.mxu0 0
      %2083 = vmatmul.mubr.bf16.gmra.mxu0 %v1817
      %v2084 = vpop.f32.mrf.mxu0
      %v2085 = vadd.f32 0.0, %v2084
      %v2086 = vpop.f32.mrf.mxu0
      %v2087 = vpop.f32.mrf.mxu0
      %v2088 = vadd.f32 0.0, %v2087
      %v2089 = vpop.f32.mrf.mxu0
      %2090 = vmatprep.mubr.bf16.mxu0 0
      %2091 = vmatmul.mubr.bf16.gmra.mxu0 %v1820
      %v2092 = vpop.f32.mrf.mxu0
      %v2093 = vadd.f32 0.0, %v2092
      %v2094 = vpop.f32.mrf.mxu0
      %v2095 = vpop.f32.mrf.mxu0
      %v2096 = vadd.f32 0.0, %v2095
      %v2097 = vpop.f32.mrf.mxu0
      %2098 = vmatprep.mubr.bf16.mxu0 0
      %2099 = vmatmul.mubr.bf16.gmra.mxu0 %v1823
      %v2100 = vpop.f32.mrf.mxu0
      %v2101 = vadd.f32 0.0, %v2100
      %v2102 = vpop.f32.mrf.mxu0
      %v2103 = vpop.f32.mrf.mxu0
      %v2104 = vadd.f32 0.0, %v2103
      %v2105 = vpop.f32.mrf.mxu0
      %2106 = vmatprep.mubr.bf16.mxu0 0
      %2107 = vmatmul.mubr.bf16.gmra.mxu0 %v1826
      %v2108 = vpop.f32.mrf.mxu0
      %v2109 = vadd.f32 0.0, %v2108
      %v2110 = vpop.f32.mrf.mxu0
      %v2111 = vpop.f32.mrf.mxu0
      %v2112 = vadd.f32 0.0, %v2111
      %v2113 = vpop.f32.mrf.mxu0
      %2114 = vmatprep.mubr.bf16.mxu0 0
      %2115 = vmatmul.mubr.bf16.gmra.mxu0 %v1829
      %v2116 = vpop.f32.mrf.mxu0
      %v2117 = vadd.f32 0.0, %v2116
      %v2118 = vpop.f32.mrf.mxu0
      %v2119 = vpop.f32.mrf.mxu0
      %v2120 = vadd.f32 0.0, %v2119
      %v2121 = vpop.f32.mrf.mxu0
      %2122 = vdwg.mxu0
      %v2123 = vadd.f32 %v1319, %v1869
      %v2124 = vadd.f32 %v1322, %v1872
      %v2125 = vadd.f32 %v1327, %v1877
      %v2126 = vadd.f32 %v1330, %v1880
      %v2127 = vadd.f32 %v1335, %v1885
      %v2128 = vadd.f32 %v1338, %v1888
      %v2129 = vadd.f32 %v1343, %v1893
      %v2130 = vadd.f32 %v1346, %v1896
      %v2131 = vadd.f32 %v1351, %v1901
      %v2132 = vadd.f32 %v1354, %v1904
      %v2133 = vadd.f32 %v1359, %v1909
      %v2134 = vadd.f32 %v1362, %v1912
      %v2135 = vadd.f32 %v1367, %v1917
      %v2136 = vadd.f32 %v1370, %v1920
      %v2137 = vadd.f32 %v1375, %v1925
      %v2138 = vadd.f32 %v1378, %v1928
      %v2139 = vadd.f32 %v1383, %v1933
      %v2140 = vadd.f32 %v1386, %v1936
      %v2141 = vadd.f32 %v1391, %v1941
      %v2142 = vadd.f32 %v1394, %v1944
      %v2143 = vadd.f32 %v1399, %v1949
      %v2144 = vadd.f32 %v1402, %v1952
      %v2145 = vadd.f32 %v1407, %v1957
      %v2146 = vadd.f32 %v1410, %v1960
      %v2147 = vadd.f32 %v1415, %v1965
      %v2148 = vadd.f32 %v1418, %v1968
      %v2149 = vadd.f32 %v1423, %v1973
      %v2150 = vadd.f32 %v1426, %v1976
      %v2151 = vadd.f32 %v1431, %v1981
      %v2152 = vadd.f32 %v1434, %v1984
      %v2153 = vadd.f32 %v1439, %v1989
      %v2154 = vadd.f32 %v1442, %v1992
      %v2155 = vadd.f32 %v1447, %v1997
      %v2156 = vadd.f32 %v1450, %v2000
      %v2157 = vadd.f32 %v1455, %v2005
      %v2158 = vadd.f32 %v1458, %v2008
      %v2159 = vadd.f32 %v1463, %v2013
      %v2160 = vadd.f32 %v1466, %v2016
      %v2161 = vadd.f32 %v1471, %v2021
      %v2162 = vadd.f32 %v1474, %v2024
      %v2163 = vadd.f32 %v1479, %v2029
      %v2164 = vadd.f32 %v1482, %v2032
      %v2165 = vadd.f32 %v1487, %v2037
      %v2166 = vadd.f32 %v1490, %v2040
      %v2167 = vadd.f32 %v1495, %v2045
      %v2168 = vadd.f32 %v1498, %v2048
      %v2169 = vadd.f32 %v1503, %v2053
      %v2170 = vadd.f32 %v1506, %v2056
      %v2171 = vadd.f32 %v1511, %v2061
      %v2172 = vadd.f32 %v1514, %v2064
      %v2173 = vadd.f32 %v1519, %v2069
      %v2174 = vadd.f32 %v1522, %v2072
      %v2175 = vadd.f32 %v1527, %v2077
      %v2176 = vadd.f32 %v1530, %v2080
      %v2177 = vadd.f32 %v1535, %v2085
      %v2178 = vadd.f32 %v1538, %v2088
      %v2179 = vadd.f32 %v1543, %v2093
      %v2180 = vadd.f32 %v1546, %v2096
      %v2181 = vadd.f32 %v1551, %v2101
      %v2182 = vadd.f32 %v1554, %v2104
      %v2183 = vadd.f32 %v1559, %v2109
      %v2184 = vadd.f32 %v1562, %v2112
      %v2185 = vadd.f32 %v1567, %v2117
      %v2186 = vadd.f32 %v1570, %v2120
      %s2187 = scalar_lea.vmem %s1, 2
      %v2188 = vld [vmem:[%s2187] sm:$0x3]
      %s2189 = scalar_lea.vmem %s1, 8
      %v2190 = vld [vmem:[%s2189] sm:$0x3]
      %v2192 = vsel %vm732, %v2190, 0
      %2194 = vmatprep.subr.bf16.mxu0 0
      %2195 = vmatpush1.bf16.msra.mxu0 0
      %2196 = vmatprep.subr.bf16.mxu0 0
      %2197 = vmatpush1.bf16.msra.mxu0 0
      %2198 = vmatprep.subr.bf16.mxu0 0
      %2199 = vmatpush1.bf16.msra.mxu0 0
      %2200 = vmatprep.subr.bf16.mxu0 0
      %2201 = vmatpush1.bf16.msra.mxu0 0
      %2202 = vmatprep.subr.bf16.mxu0 0
      %2203 = vmatpush1.bf16.msra.mxu0 0
      %2204 = vmatprep.subr.bf16.mxu0 0
      %2205 = vmatpush1.bf16.msra.mxu0 0
      %2206 = vmatprep.subr.bf16.mxu0 0
      %2207 = vmatpush1.bf16.msra.mxu0 0
      %2208 = vmatprep.subr.bf16.mxu0 0
      %2209 = vmatpush1.bf16.msra.mxu0 %v2192
      %2210 = vmatprep.subr.bf16.mxu0 0
      %2211 = vmatpush2.bf16.msra.mxu0 0
      %2212 = vmatprep.subr.bf16.mxu0 0
      %2213 = vmatpush2.bf16.msra.mxu0 0
      %2214 = vmatprep.subr.bf16.mxu0 0
      %2215 = vmatpush2.bf16.msra.mxu0 0
      %2216 = vmatprep.subr.bf16.mxu0 0
      %2217 = vmatpush2.bf16.msra.mxu0 0
      %2218 = vmatprep.subr.bf16.mxu0 0
      %2219 = vmatpush2.bf16.msra.mxu0 0
      %2220 = vmatprep.subr.bf16.mxu0 0
      %2221 = vmatpush2.bf16.msra.mxu0 0
      %2222 = vmatprep.subr.bf16.mxu0 0
      %2223 = vmatpush2.bf16.msra.mxu0 0
      %2224 = vmatprep.subr.bf16.mxu0 0
      %2225 = vmatpush2.bf16.msra.mxu0 0
      %2226 = vmatprep.mubr.bf16.mxu0 0
      %2227 = vmatmul.mubr.bf16.gmra.mxu0 %v637
      %v2228 = vpop.f32.mrf.mxu0
      %v2229 = vadd.f32 0.0, %v2228
      %v2230 = vpop.f32.mrf.mxu0
      %v2231 = vpop.f32.mrf.mxu0
      %v2232 = vadd.f32 0.0, %v2231
      %v2233 = vpop.f32.mrf.mxu0
      %2234 = vmatprep.mubr.bf16.mxu0 0
      %2235 = vmatmul.mubr.bf16.gmra.mxu0 %v640
      %v2236 = vpop.f32.mrf.mxu0
      %v2237 = vadd.f32 0.0, %v2236
      %v2238 = vpop.f32.mrf.mxu0
      %v2239 = vpop.f32.mrf.mxu0
      %v2240 = vadd.f32 0.0, %v2239
      %v2241 = vpop.f32.mrf.mxu0
      %2242 = vmatprep.mubr.bf16.mxu0 0
      %2243 = vmatmul.mubr.bf16.gmra.mxu0 %v643
      %v2244 = vpop.f32.mrf.mxu0
      %v2245 = vadd.f32 0.0, %v2244
      %v2246 = vpop.f32.mrf.mxu0
      %v2247 = vpop.f32.mrf.mxu0
      %v2248 = vadd.f32 0.0, %v2247
      %v2249 = vpop.f32.mrf.mxu0
      %2250 = vmatprep.mubr.bf16.mxu0 0
      %2251 = vmatmul.mubr.bf16.gmra.mxu0 %v646
      %v2252 = vpop.f32.mrf.mxu0
      %v2253 = vadd.f32 0.0, %v2252
      %v2254 = vpop.f32.mrf.mxu0
      %v2255 = vpop.f32.mrf.mxu0
      %v2256 = vadd.f32 0.0, %v2255
      %v2257 = vpop.f32.mrf.mxu0
      %2258 = vmatprep.mubr.bf16.mxu0 0
      %2259 = vmatmul.mubr.bf16.gmra.mxu0 %v649
      %v2260 = vpop.f32.mrf.mxu0
      %v2261 = vadd.f32 0.0, %v2260
      %v2262 = vpop.f32.mrf.mxu0
      %v2263 = vpop.f32.mrf.mxu0
      %v2264 = vadd.f32 0.0, %v2263
      %v2265 = vpop.f32.mrf.mxu0
      %2266 = vmatprep.mubr.bf16.mxu0 0
      %2267 = vmatmul.mubr.bf16.gmra.mxu0 %v652
      %v2268 = vpop.f32.mrf.mxu0
      %v2269 = vadd.f32 0.0, %v2268
      %v2270 = vpop.f32.mrf.mxu0
      %v2271 = vpop.f32.mrf.mxu0
      %v2272 = vadd.f32 0.0, %v2271
      %v2273 = vpop.f32.mrf.mxu0
      %2274 = vmatprep.mubr.bf16.mxu0 0
      %2275 = vmatmul.mubr.bf16.gmra.mxu0 %v655
      %v2276 = vpop.f32.mrf.mxu0
      %v2277 = vadd.f32 0.0, %v2276
      %v2278 = vpop.f32.mrf.mxu0
      %v2279 = vpop.f32.mrf.mxu0
      %v2280 = vadd.f32 0.0, %v2279
      %v2281 = vpop.f32.mrf.mxu0
      %2282 = vmatprep.mubr.bf16.mxu0 0
      %2283 = vmatmul.mubr.bf16.gmra.mxu0 %v658
      %v2284 = vpop.f32.mrf.mxu0
      %v2285 = vadd.f32 0.0, %v2284
      %v2286 = vpop.f32.mrf.mxu0
      %v2287 = vpop.f32.mrf.mxu0
      %v2288 = vadd.f32 0.0, %v2287
      %v2289 = vpop.f32.mrf.mxu0
      %2290 = vmatprep.mubr.bf16.mxu0 0
      %2291 = vmatmul.mubr.bf16.gmra.mxu0 %v661
      %v2292 = vpop.f32.mrf.mxu0
      %v2293 = vadd.f32 0.0, %v2292
      %v2294 = vpop.f32.mrf.mxu0
      %v2295 = vpop.f32.mrf.mxu0
      %v2296 = vadd.f32 0.0, %v2295
      %v2297 = vpop.f32.mrf.mxu0
      %2298 = vmatprep.mubr.bf16.mxu0 0
      %2299 = vmatmul.mubr.bf16.gmra.mxu0 %v664
      %v2300 = vpop.f32.mrf.mxu0
      %v2301 = vadd.f32 0.0, %v2300
      %v2302 = vpop.f32.mrf.mxu0
      %v2303 = vpop.f32.mrf.mxu0
      %v2304 = vadd.f32 0.0, %v2303
      %v2305 = vpop.f32.mrf.mxu0
      %2306 = vmatprep.mubr.bf16.mxu0 0
      %2307 = vmatmul.mubr.bf16.gmra.mxu0 %v667
      %v2308 = vpop.f32.mrf.mxu0
      %v2309 = vadd.f32 0.0, %v2308
      %v2310 = vpop.f32.mrf.mxu0
      %v2311 = vpop.f32.mrf.mxu0
      %v2312 = vadd.f32 0.0, %v2311
      %v2313 = vpop.f32.mrf.mxu0
      %2314 = vmatprep.mubr.bf16.mxu0 0
      %2315 = vmatmul.mubr.bf16.gmra.mxu0 %v670
      %v2316 = vpop.f32.mrf.mxu0
      %v2317 = vadd.f32 0.0, %v2316
      %v2318 = vpop.f32.mrf.mxu0
      %v2319 = vpop.f32.mrf.mxu0
      %v2320 = vadd.f32 0.0, %v2319
      %v2321 = vpop.f32.mrf.mxu0
      %2322 = vmatprep.mubr.bf16.mxu0 0
      %2323 = vmatmul.mubr.bf16.gmra.mxu0 %v673
      %v2324 = vpop.f32.mrf.mxu0
      %v2325 = vadd.f32 0.0, %v2324
      %v2326 = vpop.f32.mrf.mxu0
      %v2327 = vpop.f32.mrf.mxu0
      %v2328 = vadd.f32 0.0, %v2327
      %v2329 = vpop.f32.mrf.mxu0
      %2330 = vmatprep.mubr.bf16.mxu0 0
      %2331 = vmatmul.mubr.bf16.gmra.mxu0 %v676
      %v2332 = vpop.f32.mrf.mxu0
      %v2333 = vadd.f32 0.0, %v2332
      %v2334 = vpop.f32.mrf.mxu0
      %v2335 = vpop.f32.mrf.mxu0
      %v2336 = vadd.f32 0.0, %v2335
      %v2337 = vpop.f32.mrf.mxu0
      %2338 = vmatprep.mubr.bf16.mxu0 0
      %2339 = vmatmul.mubr.bf16.gmra.mxu0 %v679
      %v2340 = vpop.f32.mrf.mxu0
      %v2341 = vadd.f32 0.0, %v2340
      %v2342 = vpop.f32.mrf.mxu0
      %v2343 = vpop.f32.mrf.mxu0
      %v2344 = vadd.f32 0.0, %v2343
      %v2345 = vpop.f32.mrf.mxu0
      %2346 = vmatprep.mubr.bf16.mxu0 0
      %2347 = vmatmul.mubr.bf16.gmra.mxu0 %v682
      %v2348 = vpop.f32.mrf.mxu0
      %v2349 = vadd.f32 0.0, %v2348
      %v2350 = vpop.f32.mrf.mxu0
      %v2351 = vpop.f32.mrf.mxu0
      %v2352 = vadd.f32 0.0, %v2351
      %v2353 = vpop.f32.mrf.mxu0
      %2354 = vmatprep.mubr.bf16.mxu0 0
      %2355 = vmatmul.mubr.bf16.gmra.mxu0 %v685
      %v2356 = vpop.f32.mrf.mxu0
      %v2357 = vadd.f32 0.0, %v2356
      %v2358 = vpop.f32.mrf.mxu0
      %v2359 = vpop.f32.mrf.mxu0
      %v2360 = vadd.f32 0.0, %v2359
      %v2361 = vpop.f32.mrf.mxu0
      %2362 = vmatprep.mubr.bf16.mxu0 0
      %2363 = vmatmul.mubr.bf16.gmra.mxu0 %v688
      %v2364 = vpop.f32.mrf.mxu0
      %v2365 = vadd.f32 0.0, %v2364
      %v2366 = vpop.f32.mrf.mxu0
      %v2367 = vpop.f32.mrf.mxu0
      %v2368 = vadd.f32 0.0, %v2367
      %v2369 = vpop.f32.mrf.mxu0
      %2370 = vmatprep.mubr.bf16.mxu0 0
      %2371 = vmatmul.mubr.bf16.gmra.mxu0 %v691
      %v2372 = vpop.f32.mrf.mxu0
      %v2373 = vadd.f32 0.0, %v2372
      %v2374 = vpop.f32.mrf.mxu0
      %v2375 = vpop.f32.mrf.mxu0
      %v2376 = vadd.f32 0.0, %v2375
      %v2377 = vpop.f32.mrf.mxu0
      %2378 = vmatprep.mubr.bf16.mxu0 0
      %2379 = vmatmul.mubr.bf16.gmra.mxu0 %v694
      %v2380 = vpop.f32.mrf.mxu0
      %v2381 = vadd.f32 0.0, %v2380
      %v2382 = vpop.f32.mrf.mxu0
      %v2383 = vpop.f32.mrf.mxu0
      %v2384 = vadd.f32 0.0, %v2383
      %v2385 = vpop.f32.mrf.mxu0
      %2386 = vmatprep.mubr.bf16.mxu0 0
      %2387 = vmatmul.mubr.bf16.gmra.mxu0 %v697
      %v2388 = vpop.f32.mrf.mxu0
      %v2389 = vadd.f32 0.0, %v2388
      %v2390 = vpop.f32.mrf.mxu0
      %v2391 = vpop.f32.mrf.mxu0
      %v2392 = vadd.f32 0.0, %v2391
      %v2393 = vpop.f32.mrf.mxu0
      %2394 = vmatprep.mubr.bf16.mxu0 0
      %2395 = vmatmul.mubr.bf16.gmra.mxu0 %v700
      %v2396 = vpop.f32.mrf.mxu0
      %v2397 = vadd.f32 0.0, %v2396
      %v2398 = vpop.f32.mrf.mxu0
      %v2399 = vpop.f32.mrf.mxu0
      %v2400 = vadd.f32 0.0, %v2399
      %v2401 = vpop.f32.mrf.mxu0
      %2402 = vmatprep.mubr.bf16.mxu0 0
      %2403 = vmatmul.mubr.bf16.gmra.mxu0 %v703
      %v2404 = vpop.f32.mrf.mxu0
      %v2405 = vadd.f32 0.0, %v2404
      %v2406 = vpop.f32.mrf.mxu0
      %v2407 = vpop.f32.mrf.mxu0
      %v2408 = vadd.f32 0.0, %v2407
      %v2409 = vpop.f32.mrf.mxu0
      %2410 = vmatprep.mubr.bf16.mxu0 0
      %2411 = vmatmul.mubr.bf16.gmra.mxu0 %v706
      %v2412 = vpop.f32.mrf.mxu0
      %v2413 = vadd.f32 0.0, %v2412
      %v2414 = vpop.f32.mrf.mxu0
      %v2415 = vpop.f32.mrf.mxu0
      %v2416 = vadd.f32 0.0, %v2415
      %v2417 = vpop.f32.mrf.mxu0
      %2418 = vmatprep.mubr.bf16.mxu0 0
      %2419 = vmatmul.mubr.bf16.gmra.mxu0 %v709
      %v2420 = vpop.f32.mrf.mxu0
      %v2421 = vadd.f32 0.0, %v2420
      %v2422 = vpop.f32.mrf.mxu0
      %v2423 = vpop.f32.mrf.mxu0
      %v2424 = vadd.f32 0.0, %v2423
      %v2425 = vpop.f32.mrf.mxu0
      %2426 = vmatprep.mubr.bf16.mxu0 0
      %2427 = vmatmul.mubr.bf16.gmra.mxu0 %v712
      %v2428 = vpop.f32.mrf.mxu0
      %v2429 = vadd.f32 0.0, %v2428
      %v2430 = vpop.f32.mrf.mxu0
      %v2431 = vpop.f32.mrf.mxu0
      %v2432 = vadd.f32 0.0, %v2431
      %v2433 = vpop.f32.mrf.mxu0
      %2434 = vmatprep.mubr.bf16.mxu0 0
      %2435 = vmatmul.mubr.bf16.gmra.mxu0 %v715
      %v2436 = vpop.f32.mrf.mxu0
      %v2437 = vadd.f32 0.0, %v2436
      %v2438 = vpop.f32.mrf.mxu0
      %v2439 = vpop.f32.mrf.mxu0
      %v2440 = vadd.f32 0.0, %v2439
      %v2441 = vpop.f32.mrf.mxu0
      %2442 = vmatprep.mubr.bf16.mxu0 0
      %2443 = vmatmul.mubr.bf16.gmra.mxu0 %v718
      %v2444 = vpop.f32.mrf.mxu0
      %v2445 = vadd.f32 0.0, %v2444
      %v2446 = vpop.f32.mrf.mxu0
      %v2447 = vpop.f32.mrf.mxu0
      %v2448 = vadd.f32 0.0, %v2447
      %v2449 = vpop.f32.mrf.mxu0
      %2450 = vmatprep.mubr.bf16.mxu0 0
      %2451 = vmatmul.mubr.bf16.gmra.mxu0 %v721
      %v2452 = vpop.f32.mrf.mxu0
      %v2453 = vadd.f32 0.0, %v2452
      %v2454 = vpop.f32.mrf.mxu0
      %v2455 = vpop.f32.mrf.mxu0
      %v2456 = vadd.f32 0.0, %v2455
      %v2457 = vpop.f32.mrf.mxu0
      %2458 = vmatprep.mubr.bf16.mxu0 0
      %2459 = vmatmul.mubr.bf16.gmra.mxu0 %v724
      %v2460 = vpop.f32.mrf.mxu0
      %v2461 = vadd.f32 0.0, %v2460
      %v2462 = vpop.f32.mrf.mxu0
      %v2463 = vpop.f32.mrf.mxu0
      %v2464 = vadd.f32 0.0, %v2463
      %v2465 = vpop.f32.mrf.mxu0
      %2466 = vmatprep.mubr.bf16.mxu0 0
      %2467 = vmatmul.mubr.bf16.gmra.mxu0 %v727
      %v2468 = vpop.f32.mrf.mxu0
      %v2469 = vadd.f32 0.0, %v2468
      %v2470 = vpop.f32.mrf.mxu0
      %v2471 = vpop.f32.mrf.mxu0
      %v2472 = vadd.f32 0.0, %v2471
      %v2473 = vpop.f32.mrf.mxu0
      %2474 = vmatprep.mubr.bf16.mxu0 0
      %2475 = vmatmul.mubr.bf16.gmra.mxu0 %v730
      %v2476 = vpop.f32.mrf.mxu0
      %v2477 = vadd.f32 0.0, %v2476
      %v2478 = vpop.f32.mrf.mxu0
      %v2479 = vpop.f32.mrf.mxu0
      %v2480 = vadd.f32 0.0, %v2479
      %v2481 = vpop.f32.mrf.mxu0
      %2482 = vdwg.mxu0
      %v2484 = vsel %vm732, %v2188, 0
      %2486 = vmatprep.subr.bf16.mxu0 0
      %2487 = vmatpush1.bf16.msra.mxu0 0
      %2488 = vmatprep.subr.bf16.mxu0 0
      %2489 = vmatpush1.bf16.msra.mxu0 0
      %2490 = vmatprep.subr.bf16.mxu0 0
      %2491 = vmatpush1.bf16.msra.mxu0 0
      %2492 = vmatprep.subr.bf16.mxu0 0
      %2493 = vmatpush1.bf16.msra.mxu0 0
      %2494 = vmatprep.subr.bf16.mxu0 0
      %2495 = vmatpush1.bf16.msra.mxu0 0
      %2496 = vmatprep.subr.bf16.mxu0 0
      %2497 = vmatpush1.bf16.msra.mxu0 0
      %2498 = vmatprep.subr.bf16.mxu0 0
      %2499 = vmatpush1.bf16.msra.mxu0 0
      %2500 = vmatprep.subr.bf16.mxu0 0
      %2501 = vmatpush1.bf16.msra.mxu0 %v2484
      %2502 = vmatprep.subr.bf16.mxu0 0
      %2503 = vmatpush2.bf16.msra.mxu0 0
      %2504 = vmatprep.subr.bf16.mxu0 0
      %2505 = vmatpush2.bf16.msra.mxu0 0
      %2506 = vmatprep.subr.bf16.mxu0 0
      %2507 = vmatpush2.bf16.msra.mxu0 0
      %2508 = vmatprep.subr.bf16.mxu0 0
      %2509 = vmatpush2.bf16.msra.mxu0 0
      %2510 = vmatprep.subr.bf16.mxu0 0
      %2511 = vmatpush2.bf16.msra.mxu0 0
      %2512 = vmatprep.subr.bf16.mxu0 0
      %2513 = vmatpush2.bf16.msra.mxu0 0
      %2514 = vmatprep.subr.bf16.mxu0 0
      %2515 = vmatpush2.bf16.msra.mxu0 0
      %2516 = vmatprep.subr.bf16.mxu0 0
      %2517 = vmatpush2.bf16.msra.mxu0 0
      %2518 = vmatprep.mubr.bf16.mxu0 0
      %2519 = vmatmul.mubr.bf16.gmra.mxu0 %v1186
      %v2520 = vpop.f32.mrf.mxu0
      %v2521 = vadd.f32 %v2229, %v2520
      %v2522 = vpop.f32.mrf.mxu0
      %v2523 = vpop.f32.mrf.mxu0
      %v2524 = vadd.f32 %v2232, %v2523
      %v2525 = vpop.f32.mrf.mxu0
      %2526 = vmatprep.mubr.bf16.mxu0 0
      %2527 = vmatmul.mubr.bf16.gmra.mxu0 %v1189
      %v2528 = vpop.f32.mrf.mxu0
      %v2529 = vadd.f32 %v2237, %v2528
      %v2530 = vpop.f32.mrf.mxu0
      %v2531 = vpop.f32.mrf.mxu0
      %v2532 = vadd.f32 %v2240, %v2531
      %v2533 = vpop.f32.mrf.mxu0
      %2534 = vmatprep.mubr.bf16.mxu0 0
      %2535 = vmatmul.mubr.bf16.gmra.mxu0 %v1192
      %v2536 = vpop.f32.mrf.mxu0
      %v2537 = vadd.f32 %v2245, %v2536
      %v2538 = vpop.f32.mrf.mxu0
      %v2539 = vpop.f32.mrf.mxu0
      %v2540 = vadd.f32 %v2248, %v2539
      %v2541 = vpop.f32.mrf.mxu0
      %2542 = vmatprep.mubr.bf16.mxu0 0
      %2543 = vmatmul.mubr.bf16.gmra.mxu0 %v1195
      %v2544 = vpop.f32.mrf.mxu0
      %v2545 = vadd.f32 %v2253, %v2544
      %v2546 = vpop.f32.mrf.mxu0
      %v2547 = vpop.f32.mrf.mxu0
      %v2548 = vadd.f32 %v2256, %v2547
      %v2549 = vpop.f32.mrf.mxu0
      %2550 = vmatprep.mubr.bf16.mxu0 0
      %2551 = vmatmul.mubr.bf16.gmra.mxu0 %v1198
      %v2552 = vpop.f32.mrf.mxu0
      %v2553 = vadd.f32 %v2261, %v2552
      %v2554 = vpop.f32.mrf.mxu0
      %v2555 = vpop.f32.mrf.mxu0
      %v2556 = vadd.f32 %v2264, %v2555
      %v2557 = vpop.f32.mrf.mxu0
      %2558 = vmatprep.mubr.bf16.mxu0 0
      %2559 = vmatmul.mubr.bf16.gmra.mxu0 %v1201
      %v2560 = vpop.f32.mrf.mxu0
      %v2561 = vadd.f32 %v2269, %v2560
      %v2562 = vpop.f32.mrf.mxu0
      %v2563 = vpop.f32.mrf.mxu0
      %v2564 = vadd.f32 %v2272, %v2563
      %v2565 = vpop.f32.mrf.mxu0
      %2566 = vmatprep.mubr.bf16.mxu0 0
      %2567 = vmatmul.mubr.bf16.gmra.mxu0 %v1204
      %v2568 = vpop.f32.mrf.mxu0
      %v2569 = vadd.f32 %v2277, %v2568
      %v2570 = vpop.f32.mrf.mxu0
      %v2571 = vpop.f32.mrf.mxu0
      %v2572 = vadd.f32 %v2280, %v2571
      %v2573 = vpop.f32.mrf.mxu0
      %2574 = vmatprep.mubr.bf16.mxu0 0
      %2575 = vmatmul.mubr.bf16.gmra.mxu0 %v1207
      %v2576 = vpop.f32.mrf.mxu0
      %v2577 = vadd.f32 %v2285, %v2576
      %v2578 = vpop.f32.mrf.mxu0
      %v2579 = vpop.f32.mrf.mxu0
      %v2580 = vadd.f32 %v2288, %v2579
      %v2581 = vpop.f32.mrf.mxu0
      %2582 = vmatprep.mubr.bf16.mxu0 0
      %2583 = vmatmul.mubr.bf16.gmra.mxu0 %v1210
      %v2584 = vpop.f32.mrf.mxu0
      %v2585 = vadd.f32 %v2293, %v2584
      %v2586 = vpop.f32.mrf.mxu0
      %v2587 = vpop.f32.mrf.mxu0
      %v2588 = vadd.f32 %v2296, %v2587
      %v2589 = vpop.f32.mrf.mxu0
      %2590 = vmatprep.mubr.bf16.mxu0 0
      %2591 = vmatmul.mubr.bf16.gmra.mxu0 %v1213
      %v2592 = vpop.f32.mrf.mxu0
      %v2593 = vadd.f32 %v2301, %v2592
      %v2594 = vpop.f32.mrf.mxu0
      %v2595 = vpop.f32.mrf.mxu0
      %v2596 = vadd.f32 %v2304, %v2595
      %v2597 = vpop.f32.mrf.mxu0
      %2598 = vmatprep.mubr.bf16.mxu0 0
      %2599 = vmatmul.mubr.bf16.gmra.mxu0 %v1216
      %v2600 = vpop.f32.mrf.mxu0
      %v2601 = vadd.f32 %v2309, %v2600
      %v2602 = vpop.f32.mrf.mxu0
      %v2603 = vpop.f32.mrf.mxu0
      %v2604 = vadd.f32 %v2312, %v2603
      %v2605 = vpop.f32.mrf.mxu0
      %2606 = vmatprep.mubr.bf16.mxu0 0
      %2607 = vmatmul.mubr.bf16.gmra.mxu0 %v1219
      %v2608 = vpop.f32.mrf.mxu0
      %v2609 = vadd.f32 %v2317, %v2608
      %v2610 = vpop.f32.mrf.mxu0
      %v2611 = vpop.f32.mrf.mxu0
      %v2612 = vadd.f32 %v2320, %v2611
      %v2613 = vpop.f32.mrf.mxu0
      %2614 = vmatprep.mubr.bf16.mxu0 0
      %2615 = vmatmul.mubr.bf16.gmra.mxu0 %v1222
      %v2616 = vpop.f32.mrf.mxu0
      %v2617 = vadd.f32 %v2325, %v2616
      %v2618 = vpop.f32.mrf.mxu0
      %v2619 = vpop.f32.mrf.mxu0
      %v2620 = vadd.f32 %v2328, %v2619
      %v2621 = vpop.f32.mrf.mxu0
      %2622 = vmatprep.mubr.bf16.mxu0 0
      %2623 = vmatmul.mubr.bf16.gmra.mxu0 %v1225
      %v2624 = vpop.f32.mrf.mxu0
      %v2625 = vadd.f32 %v2333, %v2624
      %v2626 = vpop.f32.mrf.mxu0
      %v2627 = vpop.f32.mrf.mxu0
      %v2628 = vadd.f32 %v2336, %v2627
      %v2629 = vpop.f32.mrf.mxu0
      %2630 = vmatprep.mubr.bf16.mxu0 0
      %2631 = vmatmul.mubr.bf16.gmra.mxu0 %v1228
      %v2632 = vpop.f32.mrf.mxu0
      %v2633 = vadd.f32 %v2341, %v2632
      %v2634 = vpop.f32.mrf.mxu0
      %v2635 = vpop.f32.mrf.mxu0
      %v2636 = vadd.f32 %v2344, %v2635
      %v2637 = vpop.f32.mrf.mxu0
      %2638 = vmatprep.mubr.bf16.mxu0 0
      %2639 = vmatmul.mubr.bf16.gmra.mxu0 %v1231
      %v2640 = vpop.f32.mrf.mxu0
      %v2641 = vadd.f32 %v2349, %v2640
      %v2642 = vpop.f32.mrf.mxu0
      %v2643 = vpop.f32.mrf.mxu0
      %v2644 = vadd.f32 %v2352, %v2643
      %v2645 = vpop.f32.mrf.mxu0
      %2646 = vmatprep.mubr.bf16.mxu0 0
      %2647 = vmatmul.mubr.bf16.gmra.mxu0 %v1234
      %v2648 = vpop.f32.mrf.mxu0
      %v2649 = vadd.f32 %v2357, %v2648
      %v2650 = vpop.f32.mrf.mxu0
      %v2651 = vpop.f32.mrf.mxu0
      %v2652 = vadd.f32 %v2360, %v2651
      %v2653 = vpop.f32.mrf.mxu0
      %2654 = vmatprep.mubr.bf16.mxu0 0
      %2655 = vmatmul.mubr.bf16.gmra.mxu0 %v1237
      %v2656 = vpop.f32.mrf.mxu0
      %v2657 = vadd.f32 %v2365, %v2656
      %v2658 = vpop.f32.mrf.mxu0
      %v2659 = vpop.f32.mrf.mxu0
      %v2660 = vadd.f32 %v2368, %v2659
      %v2661 = vpop.f32.mrf.mxu0
      %2662 = vmatprep.mubr.bf16.mxu0 0
      %2663 = vmatmul.mubr.bf16.gmra.mxu0 %v1240
      %v2664 = vpop.f32.mrf.mxu0
      %v2665 = vadd.f32 %v2373, %v2664
      %v2666 = vpop.f32.mrf.mxu0
      %v2667 = vpop.f32.mrf.mxu0
      %v2668 = vadd.f32 %v2376, %v2667
      %v2669 = vpop.f32.mrf.mxu0
      %2670 = vmatprep.mubr.bf16.mxu0 0
      %2671 = vmatmul.mubr.bf16.gmra.mxu0 %v1243
      %v2672 = vpop.f32.mrf.mxu0
      %v2673 = vadd.f32 %v2381, %v2672
      %v2674 = vpop.f32.mrf.mxu0
      %v2675 = vpop.f32.mrf.mxu0
      %v2676 = vadd.f32 %v2384, %v2675
      %v2677 = vpop.f32.mrf.mxu0
      %2678 = vmatprep.mubr.bf16.mxu0 0
      %2679 = vmatmul.mubr.bf16.gmra.mxu0 %v1246
      %v2680 = vpop.f32.mrf.mxu0
      %v2681 = vadd.f32 %v2389, %v2680
      %v2682 = vpop.f32.mrf.mxu0
      %v2683 = vpop.f32.mrf.mxu0
      %v2684 = vadd.f32 %v2392, %v2683
      %v2685 = vpop.f32.mrf.mxu0
      %2686 = vmatprep.mubr.bf16.mxu0 0
      %2687 = vmatmul.mubr.bf16.gmra.mxu0 %v1249
      %v2688 = vpop.f32.mrf.mxu0
      %v2689 = vadd.f32 %v2397, %v2688
      %v2690 = vpop.f32.mrf.mxu0
      %v2691 = vpop.f32.mrf.mxu0
      %v2692 = vadd.f32 %v2400, %v2691
      %v2693 = vpop.f32.mrf.mxu0
      %2694 = vmatprep.mubr.bf16.mxu0 0
      %2695 = vmatmul.mubr.bf16.gmra.mxu0 %v1252
      %v2696 = vpop.f32.mrf.mxu0
      %v2697 = vadd.f32 %v2405, %v2696
      %v2698 = vpop.f32.mrf.mxu0
      %v2699 = vpop.f32.mrf.mxu0
      %v2700 = vadd.f32 %v2408, %v2699
      %v2701 = vpop.f32.mrf.mxu0
      %2702 = vmatprep.mubr.bf16.mxu0 0
      %2703 = vmatmul.mubr.bf16.gmra.mxu0 %v1255
      %v2704 = vpop.f32.mrf.mxu0
      %v2705 = vadd.f32 %v2413, %v2704
      %v2706 = vpop.f32.mrf.mxu0
      %v2707 = vpop.f32.mrf.mxu0
      %v2708 = vadd.f32 %v2416, %v2707
      %v2709 = vpop.f32.mrf.mxu0
      %2710 = vmatprep.mubr.bf16.mxu0 0
      %2711 = vmatmul.mubr.bf16.gmra.mxu0 %v1258
      %v2712 = vpop.f32.mrf.mxu0
      %v2713 = vadd.f32 %v2421, %v2712
      %v2714 = vpop.f32.mrf.mxu0
      %v2715 = vpop.f32.mrf.mxu0
      %v2716 = vadd.f32 %v2424, %v2715
      %v2717 = vpop.f32.mrf.mxu0
      %2718 = vmatprep.mubr.bf16.mxu0 0
      %2719 = vmatmul.mubr.bf16.gmra.mxu0 %v1261
      %v2720 = vpop.f32.mrf.mxu0
      %v2721 = vadd.f32 %v2429, %v2720
      %v2722 = vpop.f32.mrf.mxu0
      %v2723 = vpop.f32.mrf.mxu0
      %v2724 = vadd.f32 %v2432, %v2723
      %v2725 = vpop.f32.mrf.mxu0
      %2726 = vmatprep.mubr.bf16.mxu0 0
      %2727 = vmatmul.mubr.bf16.gmra.mxu0 %v1264
      %v2728 = vpop.f32.mrf.mxu0
      %v2729 = vadd.f32 %v2437, %v2728
      %v2730 = vpop.f32.mrf.mxu0
      %v2731 = vpop.f32.mrf.mxu0
      %v2732 = vadd.f32 %v2440, %v2731
      %v2733 = vpop.f32.mrf.mxu0
      %2734 = vmatprep.mubr.bf16.mxu0 0
      %2735 = vmatmul.mubr.bf16.gmra.mxu0 %v1267
      %v2736 = vpop.f32.mrf.mxu0
      %v2737 = vadd.f32 %v2445, %v2736
      %v2738 = vpop.f32.mrf.mxu0
      %v2739 = vpop.f32.mrf.mxu0
      %v2740 = vadd.f32 %v2448, %v2739
      %v2741 = vpop.f32.mrf.mxu0
      %2742 = vmatprep.mubr.bf16.mxu0 0
      %2743 = vmatmul.mubr.bf16.gmra.mxu0 %v1270
      %v2744 = vpop.f32.mrf.mxu0
      %v2745 = vadd.f32 %v2453, %v2744
      %v2746 = vpop.f32.mrf.mxu0
      %v2747 = vpop.f32.mrf.mxu0
      %v2748 = vadd.f32 %v2456, %v2747
      %v2749 = vpop.f32.mrf.mxu0
      %2750 = vmatprep.mubr.bf16.mxu0 0
      %2751 = vmatmul.mubr.bf16.gmra.mxu0 %v1273
      %v2752 = vpop.f32.mrf.mxu0
      %v2753 = vadd.f32 %v2461, %v2752
      %v2754 = vpop.f32.mrf.mxu0
      %v2755 = vpop.f32.mrf.mxu0
      %v2756 = vadd.f32 %v2464, %v2755
      %v2757 = vpop.f32.mrf.mxu0
      %2758 = vmatprep.mubr.bf16.mxu0 0
      %2759 = vmatmul.mubr.bf16.gmra.mxu0 %v1276
      %v2760 = vpop.f32.mrf.mxu0
      %v2761 = vadd.f32 %v2469, %v2760
      %v2762 = vpop.f32.mrf.mxu0
      %v2763 = vpop.f32.mrf.mxu0
      %v2764 = vadd.f32 %v2472, %v2763
      %v2765 = vpop.f32.mrf.mxu0
      %2766 = vmatprep.mubr.bf16.mxu0 0
      %2767 = vmatmul.mubr.bf16.gmra.mxu0 %v1279
      %v2768 = vpop.f32.mrf.mxu0
      %v2769 = vadd.f32 %v2477, %v2768
      %v2770 = vpop.f32.mrf.mxu0
      %v2771 = vpop.f32.mrf.mxu0
      %v2772 = vadd.f32 %v2480, %v2771
      %v2773 = vpop.f32.mrf.mxu0
      %2774 = vdwg.mxu0
      %s2775 = scalar_lea.vmem %s1, 14
      %v2776 = vld [vmem:[%s2775] sm:$0x3]
      %v2778 = vsel %vm732, %v2776, 0
      %2780 = vmatprep.subr.bf16.mxu0 0
      %2781 = vmatpush1.bf16.msra.mxu0 0
      %2782 = vmatprep.subr.bf16.mxu0 0
      %2783 = vmatpush1.bf16.msra.mxu0 0
      %2784 = vmatprep.subr.bf16.mxu0 0
      %2785 = vmatpush1.bf16.msra.mxu0 0
      %2786 = vmatprep.subr.bf16.mxu0 0
      %2787 = vmatpush1.bf16.msra.mxu0 0
      %2788 = vmatprep.subr.bf16.mxu0 0
      %2789 = vmatpush1.bf16.msra.mxu0 0
      %2790 = vmatprep.subr.bf16.mxu0 0
      %2791 = vmatpush1.bf16.msra.mxu0 0
      %2792 = vmatprep.subr.bf16.mxu0 0
      %2793 = vmatpush1.bf16.msra.mxu0 0
      %2794 = vmatprep.subr.bf16.mxu0 0
      %2795 = vmatpush1.bf16.msra.mxu0 %v2778
      %2796 = vmatprep.subr.bf16.mxu0 0
      %2797 = vmatpush2.bf16.msra.mxu0 0
      %2798 = vmatprep.subr.bf16.mxu0 0
      %2799 = vmatpush2.bf16.msra.mxu0 0
      %2800 = vmatprep.subr.bf16.mxu0 0
      %2801 = vmatpush2.bf16.msra.mxu0 0
      %2802 = vmatprep.subr.bf16.mxu0 0
      %2803 = vmatpush2.bf16.msra.mxu0 0
      %2804 = vmatprep.subr.bf16.mxu0 0
      %2805 = vmatpush2.bf16.msra.mxu0 0
      %2806 = vmatprep.subr.bf16.mxu0 0
      %2807 = vmatpush2.bf16.msra.mxu0 0
      %2808 = vmatprep.subr.bf16.mxu0 0
      %2809 = vmatpush2.bf16.msra.mxu0 0
      %2810 = vmatprep.subr.bf16.mxu0 0
      %2811 = vmatpush2.bf16.msra.mxu0 0
      %2812 = vmatprep.mubr.bf16.mxu0 0
      %2813 = vmatmul.mubr.bf16.gmra.mxu0 %v1736
      %v2814 = vpop.f32.mrf.mxu0
      %v2815 = vadd.f32 0.0, %v2814
      %v2816 = vpop.f32.mrf.mxu0
      %v2817 = vpop.f32.mrf.mxu0
      %v2818 = vadd.f32 0.0, %v2817
      %v2819 = vpop.f32.mrf.mxu0
      %2820 = vmatprep.mubr.bf16.mxu0 0
      %2821 = vmatmul.mubr.bf16.gmra.mxu0 %v1739
      %v2822 = vpop.f32.mrf.mxu0
      %v2823 = vadd.f32 0.0, %v2822
      %v2824 = vpop.f32.mrf.mxu0
      %v2825 = vpop.f32.mrf.mxu0
      %v2826 = vadd.f32 0.0, %v2825
      %v2827 = vpop.f32.mrf.mxu0
      %2828 = vmatprep.mubr.bf16.mxu0 0
      %2829 = vmatmul.mubr.bf16.gmra.mxu0 %v1742
      %v2830 = vpop.f32.mrf.mxu0
      %v2831 = vadd.f32 0.0, %v2830
      %v2832 = vpop.f32.mrf.mxu0
      %v2833 = vpop.f32.mrf.mxu0
      %v2834 = vadd.f32 0.0, %v2833
      %v2835 = vpop.f32.mrf.mxu0
      %2836 = vmatprep.mubr.bf16.mxu0 0
      %2837 = vmatmul.mubr.bf16.gmra.mxu0 %v1745
      %v2838 = vpop.f32.mrf.mxu0
      %v2839 = vadd.f32 0.0, %v2838
      %v2840 = vpop.f32.mrf.mxu0
      %v2841 = vpop.f32.mrf.mxu0
      %v2842 = vadd.f32 0.0, %v2841
      %v2843 = vpop.f32.mrf.mxu0
      %2844 = vmatprep.mubr.bf16.mxu0 0
      %2845 = vmatmul.mubr.bf16.gmra.mxu0 %v1748
      %v2846 = vpop.f32.mrf.mxu0
      %v2847 = vadd.f32 0.0, %v2846
      %v2848 = vpop.f32.mrf.mxu0
      %v2849 = vpop.f32.mrf.mxu0
      %v2850 = vadd.f32 0.0, %v2849
      %v2851 = vpop.f32.mrf.mxu0
      %2852 = vmatprep.mubr.bf16.mxu0 0
      %2853 = vmatmul.mubr.bf16.gmra.mxu0 %v1751
      %v2854 = vpop.f32.mrf.mxu0
      %v2855 = vadd.f32 0.0, %v2854
      %v2856 = vpop.f32.mrf.mxu0
      %v2857 = vpop.f32.mrf.mxu0
      %v2858 = vadd.f32 0.0, %v2857
      %v2859 = vpop.f32.mrf.mxu0
      %2860 = vmatprep.mubr.bf16.mxu0 0
      %2861 = vmatmul.mubr.bf16.gmra.mxu0 %v1754
      %v2862 = vpop.f32.mrf.mxu0
      %v2863 = vadd.f32 0.0, %v2862
      %v2864 = vpop.f32.mrf.mxu0
      %v2865 = vpop.f32.mrf.mxu0
      %v2866 = vadd.f32 0.0, %v2865
      %v2867 = vpop.f32.mrf.mxu0
      %2868 = vmatprep.mubr.bf16.mxu0 0
      %2869 = vmatmul.mubr.bf16.gmra.mxu0 %v1757
      %v2870 = vpop.f32.mrf.mxu0
      %v2871 = vadd.f32 0.0, %v2870
      %v2872 = vpop.f32.mrf.mxu0
      %v2873 = vpop.f32.mrf.mxu0
      %v2874 = vadd.f32 0.0, %v2873
      %v2875 = vpop.f32.mrf.mxu0
      %2876 = vmatprep.mubr.bf16.mxu0 0
      %2877 = vmatmul.mubr.bf16.gmra.mxu0 %v1760
      %v2878 = vpop.f32.mrf.mxu0
      %v2879 = vadd.f32 0.0, %v2878
      %v2880 = vpop.f32.mrf.mxu0
      %v2881 = vpop.f32.mrf.mxu0
      %v2882 = vadd.f32 0.0, %v2881
      %v2883 = vpop.f32.mrf.mxu0
      %2884 = vmatprep.mubr.bf16.mxu0 0
      %2885 = vmatmul.mubr.bf16.gmra.mxu0 %v1763
      %v2886 = vpop.f32.mrf.mxu0
      %v2887 = vadd.f32 0.0, %v2886
      %v2888 = vpop.f32.mrf.mxu0
      %v2889 = vpop.f32.mrf.mxu0
      %v2890 = vadd.f32 0.0, %v2889
      %v2891 = vpop.f32.mrf.mxu0
      %2892 = vmatprep.mubr.bf16.mxu0 0
      %2893 = vmatmul.mubr.bf16.gmra.mxu0 %v1766
      %v2894 = vpop.f32.mrf.mxu0
      %v2895 = vadd.f32 0.0, %v2894
      %v2896 = vpop.f32.mrf.mxu0
      %v2897 = vpop.f32.mrf.mxu0
      %v2898 = vadd.f32 0.0, %v2897
      %v2899 = vpop.f32.mrf.mxu0
      %2900 = vmatprep.mubr.bf16.mxu0 0
      %2901 = vmatmul.mubr.bf16.gmra.mxu0 %v1769
      %v2902 = vpop.f32.mrf.mxu0
      %v2903 = vadd.f32 0.0, %v2902
      %v2904 = vpop.f32.mrf.mxu0
      %v2905 = vpop.f32.mrf.mxu0
      %v2906 = vadd.f32 0.0, %v2905
      %v2907 = vpop.f32.mrf.mxu0
      %2908 = vmatprep.mubr.bf16.mxu0 0
      %2909 = vmatmul.mubr.bf16.gmra.mxu0 %v1772
      %v2910 = vpop.f32.mrf.mxu0
      %v2911 = vadd.f32 0.0, %v2910
      %v2912 = vpop.f32.mrf.mxu0
      %v2913 = vpop.f32.mrf.mxu0
      %v2914 = vadd.f32 0.0, %v2913
      %v2915 = vpop.f32.mrf.mxu0
      %2916 = vmatprep.mubr.bf16.mxu0 0
      %2917 = vmatmul.mubr.bf16.gmra.mxu0 %v1775
      %v2918 = vpop.f32.mrf.mxu0
      %v2919 = vadd.f32 0.0, %v2918
      %v2920 = vpop.f32.mrf.mxu0
      %v2921 = vpop.f32.mrf.mxu0
      %v2922 = vadd.f32 0.0, %v2921
      %v2923 = vpop.f32.mrf.mxu0
      %2924 = vmatprep.mubr.bf16.mxu0 0
      %2925 = vmatmul.mubr.bf16.gmra.mxu0 %v1778
      %v2926 = vpop.f32.mrf.mxu0
      %v2927 = vadd.f32 0.0, %v2926
      %v2928 = vpop.f32.mrf.mxu0
      %v2929 = vpop.f32.mrf.mxu0
      %v2930 = vadd.f32 0.0, %v2929
      %v2931 = vpop.f32.mrf.mxu0
      %2932 = vmatprep.mubr.bf16.mxu0 0
      %2933 = vmatmul.mubr.bf16.gmra.mxu0 %v1781
      %v2934 = vpop.f32.mrf.mxu0
      %v2935 = vadd.f32 0.0, %v2934
      %v2936 = vpop.f32.mrf.mxu0
      %v2937 = vpop.f32.mrf.mxu0
      %v2938 = vadd.f32 0.0, %v2937
      %v2939 = vpop.f32.mrf.mxu0
      %2940 = vmatprep.mubr.bf16.mxu0 0
      %2941 = vmatmul.mubr.bf16.gmra.mxu0 %v1784
      %v2942 = vpop.f32.mrf.mxu0
      %v2943 = vadd.f32 0.0, %v2942
      %v2944 = vpop.f32.mrf.mxu0
      %v2945 = vpop.f32.mrf.mxu0
      %v2946 = vadd.f32 0.0, %v2945
      %v2947 = vpop.f32.mrf.mxu0
      %2948 = vmatprep.mubr.bf16.mxu0 0
      %2949 = vmatmul.mubr.bf16.gmra.mxu0 %v1787
      %v2950 = vpop.f32.mrf.mxu0
      %v2951 = vadd.f32 0.0, %v2950
      %v2952 = vpop.f32.mrf.mxu0
      %v2953 = vpop.f32.mrf.mxu0
      %v2954 = vadd.f32 0.0, %v2953
      %v2955 = vpop.f32.mrf.mxu0
      %2956 = vmatprep.mubr.bf16.mxu0 0
      %2957 = vmatmul.mubr.bf16.gmra.mxu0 %v1790
      %v2958 = vpop.f32.mrf.mxu0
      %v2959 = vadd.f32 0.0, %v2958
      %v2960 = vpop.f32.mrf.mxu0
      %v2961 = vpop.f32.mrf.mxu0
      %v2962 = vadd.f32 0.0, %v2961
      %v2963 = vpop.f32.mrf.mxu0
      %2964 = vmatprep.mubr.bf16.mxu0 0
      %2965 = vmatmul.mubr.bf16.gmra.mxu0 %v1793
      %v2966 = vpop.f32.mrf.mxu0
      %v2967 = vadd.f32 0.0, %v2966
      %v2968 = vpop.f32.mrf.mxu0
      %v2969 = vpop.f32.mrf.mxu0
      %v2970 = vadd.f32 0.0, %v2969
      %v2971 = vpop.f32.mrf.mxu0
      %2972 = vmatprep.mubr.bf16.mxu0 0
      %2973 = vmatmul.mubr.bf16.gmra.mxu0 %v1796
      %v2974 = vpop.f32.mrf.mxu0
      %v2975 = vadd.f32 0.0, %v2974
      %v2976 = vpop.f32.mrf.mxu0
      %v2977 = vpop.f32.mrf.mxu0
      %v2978 = vadd.f32 0.0, %v2977
      %v2979 = vpop.f32.mrf.mxu0
      %2980 = vmatprep.mubr.bf16.mxu0 0
      %2981 = vmatmul.mubr.bf16.gmra.mxu0 %v1799
      %v2982 = vpop.f32.mrf.mxu0
      %v2983 = vadd.f32 0.0, %v2982
      %v2984 = vpop.f32.mrf.mxu0
      %v2985 = vpop.f32.mrf.mxu0
      %v2986 = vadd.f32 0.0, %v2985
      %v2987 = vpop.f32.mrf.mxu0
      %2988 = vmatprep.mubr.bf16.mxu0 0
      %2989 = vmatmul.mubr.bf16.gmra.mxu0 %v1802
      %v2990 = vpop.f32.mrf.mxu0
      %v2991 = vadd.f32 0.0, %v2990
      %v2992 = vpop.f32.mrf.mxu0
      %v2993 = vpop.f32.mrf.mxu0
      %v2994 = vadd.f32 0.0, %v2993
      %v2995 = vpop.f32.mrf.mxu0
      %2996 = vmatprep.mubr.bf16.mxu0 0
      %2997 = vmatmul.mubr.bf16.gmra.mxu0 %v1805
      %v2998 = vpop.f32.mrf.mxu0
      %v2999 = vadd.f32 0.0, %v2998
      %v3000 = vpop.f32.mrf.mxu0
      %v3001 = vpop.f32.mrf.mxu0
      %v3002 = vadd.f32 0.0, %v3001
      %v3003 = vpop.f32.mrf.mxu0
      %3004 = vmatprep.mubr.bf16.mxu0 0
      %3005 = vmatmul.mubr.bf16.gmra.mxu0 %v1808
      %v3006 = vpop.f32.mrf.mxu0
      %v3007 = vadd.f32 0.0, %v3006
      %v3008 = vpop.f32.mrf.mxu0
      %v3009 = vpop.f32.mrf.mxu0
      %v3010 = vadd.f32 0.0, %v3009
      %v3011 = vpop.f32.mrf.mxu0
      %3012 = vmatprep.mubr.bf16.mxu0 0
      %3013 = vmatmul.mubr.bf16.gmra.mxu0 %v1811
      %v3014 = vpop.f32.mrf.mxu0
      %v3015 = vadd.f32 0.0, %v3014
      %v3016 = vpop.f32.mrf.mxu0
      %v3017 = vpop.f32.mrf.mxu0
      %v3018 = vadd.f32 0.0, %v3017
      %v3019 = vpop.f32.mrf.mxu0
      %3020 = vmatprep.mubr.bf16.mxu0 0
      %3021 = vmatmul.mubr.bf16.gmra.mxu0 %v1814
      %v3022 = vpop.f32.mrf.mxu0
      %v3023 = vadd.f32 0.0, %v3022
      %v3024 = vpop.f32.mrf.mxu0
      %v3025 = vpop.f32.mrf.mxu0
      %v3026 = vadd.f32 0.0, %v3025
      %v3027 = vpop.f32.mrf.mxu0
      %3028 = vmatprep.mubr.bf16.mxu0 0
      %3029 = vmatmul.mubr.bf16.gmra.mxu0 %v1817
      %v3030 = vpop.f32.mrf.mxu0
      %v3031 = vadd.f32 0.0, %v3030
      %v3032 = vpop.f32.mrf.mxu0
      %v3033 = vpop.f32.mrf.mxu0
      %v3034 = vadd.f32 0.0, %v3033
      %v3035 = vpop.f32.mrf.mxu0
      %3036 = vmatprep.mubr.bf16.mxu0 0
      %3037 = vmatmul.mubr.bf16.gmra.mxu0 %v1820
      %v3038 = vpop.f32.mrf.mxu0
      %v3039 = vadd.f32 0.0, %v3038
      %v3040 = vpop.f32.mrf.mxu0
      %v3041 = vpop.f32.mrf.mxu0
      %v3042 = vadd.f32 0.0, %v3041
      %v3043 = vpop.f32.mrf.mxu0
      %3044 = vmatprep.mubr.bf16.mxu0 0
      %3045 = vmatmul.mubr.bf16.gmra.mxu0 %v1823
      %v3046 = vpop.f32.mrf.mxu0
      %v3047 = vadd.f32 0.0, %v3046
      %v3048 = vpop.f32.mrf.mxu0
      %v3049 = vpop.f32.mrf.mxu0
      %v3050 = vadd.f32 0.0, %v3049
      %v3051 = vpop.f32.mrf.mxu0
      %3052 = vmatprep.mubr.bf16.mxu0 0
      %3053 = vmatmul.mubr.bf16.gmra.mxu0 %v1826
      %v3054 = vpop.f32.mrf.mxu0
      %v3055 = vadd.f32 0.0, %v3054
      %v3056 = vpop.f32.mrf.mxu0
      %v3057 = vpop.f32.mrf.mxu0
      %v3058 = vadd.f32 0.0, %v3057
      %v3059 = vpop.f32.mrf.mxu0
      %3060 = vmatprep.mubr.bf16.mxu0 0
      %3061 = vmatmul.mubr.bf16.gmra.mxu0 %v1829
      %v3062 = vpop.f32.mrf.mxu0
      %v3063 = vadd.f32 0.0, %v3062
      %v3064 = vpop.f32.mrf.mxu0
      %v3065 = vpop.f32.mrf.mxu0
      %v3066 = vadd.f32 0.0, %v3065
      %v3067 = vpop.f32.mrf.mxu0
      %3068 = vdwg.mxu0
      %v3069 = vadd.f32 %v2521, %v2815
      %v3070 = vadd.f32 %v2524, %v2818
      %v3071 = vadd.f32 %v2529, %v2823
      %v3072 = vadd.f32 %v2532, %v2826
      %v3073 = vadd.f32 %v2537, %v2831
      %v3074 = vadd.f32 %v2540, %v2834
      %v3075 = vadd.f32 %v2545, %v2839
      %v3076 = vadd.f32 %v2548, %v2842
      %v3077 = vadd.f32 %v2553, %v2847
      %v3078 = vadd.f32 %v2556, %v2850
      %v3079 = vadd.f32 %v2561, %v2855
      %v3080 = vadd.f32 %v2564, %v2858
      %v3081 = vadd.f32 %v2569, %v2863
      %v3082 = vadd.f32 %v2572, %v2866
      %v3083 = vadd.f32 %v2577, %v2871
      %v3084 = vadd.f32 %v2580, %v2874
      %v3085 = vadd.f32 %v2585, %v2879
      %v3086 = vadd.f32 %v2588, %v2882
      %v3087 = vadd.f32 %v2593, %v2887
      %v3088 = vadd.f32 %v2596, %v2890
      %v3089 = vadd.f32 %v2601, %v2895
      %v3090 = vadd.f32 %v2604, %v2898
      %v3091 = vadd.f32 %v2609, %v2903
      %v3092 = vadd.f32 %v2612, %v2906
      %v3093 = vadd.f32 %v2617, %v2911
      %v3094 = vadd.f32 %v2620, %v2914
      %v3095 = vadd.f32 %v2625, %v2919
      %v3096 = vadd.f32 %v2628, %v2922
      %v3097 = vadd.f32 %v2633, %v2927
      %v3098 = vadd.f32 %v2636, %v2930
      %v3099 = vadd.f32 %v2641, %v2935
      %v3100 = vadd.f32 %v2644, %v2938
      %v3101 = vadd.f32 %v2649, %v2943
      %v3102 = vadd.f32 %v2652, %v2946
      %v3103 = vadd.f32 %v2657, %v2951
      %v3104 = vadd.f32 %v2660, %v2954
      %v3105 = vadd.f32 %v2665, %v2959
      %v3106 = vadd.f32 %v2668, %v2962
      %v3107 = vadd.f32 %v2673, %v2967
      %v3108 = vadd.f32 %v2676, %v2970
      %v3109 = vadd.f32 %v2681, %v2975
      %v3110 = vadd.f32 %v2684, %v2978
      %v3111 = vadd.f32 %v2689, %v2983
      %v3112 = vadd.f32 %v2692, %v2986
      %v3113 = vadd.f32 %v2697, %v2991
      %v3114 = vadd.f32 %v2700, %v2994
      %v3115 = vadd.f32 %v2705, %v2999
      %v3116 = vadd.f32 %v2708, %v3002
      %v3117 = vadd.f32 %v2713, %v3007
      %v3118 = vadd.f32 %v2716, %v3010
      %v3119 = vadd.f32 %v2721, %v3015
      %v3120 = vadd.f32 %v2724, %v3018
      %v3121 = vadd.f32 %v2729, %v3023
      %v3122 = vadd.f32 %v2732, %v3026
      %v3123 = vadd.f32 %v2737, %v3031
      %v3124 = vadd.f32 %v2740, %v3034
      %v3125 = vadd.f32 %v2745, %v3039
      %v3126 = vadd.f32 %v2748, %v3042
      %v3127 = vadd.f32 %v2753, %v3047
      %v3128 = vadd.f32 %v2756, %v3050
      %v3129 = vadd.f32 %v2761, %v3055
      %v3130 = vadd.f32 %v2764, %v3058
      %v3131 = vadd.f32 %v2769, %v3063
      %v3132 = vadd.f32 %v2772, %v3066
      %v3133 = vrot.slane %v3069, 1
      %v3134 = vrot.slane %v3070, 1
      %v3135 = vrot.slane %v3071, 1
      %v3136 = vrot.slane %v3072, 1
      %v3137 = vrot.slane %v3073, 1
      %v3138 = vrot.slane %v3074, 1
      %v3139 = vrot.slane %v3075, 1
      %v3140 = vrot.slane %v3076, 1
      %v3141 = vrot.slane %v3077, 1
      %v3142 = vrot.slane %v3078, 1
      %v3143 = vrot.slane %v3079, 1
      %v3144 = vrot.slane %v3080, 1
      %v3145 = vrot.slane %v3081, 1
      %v3146 = vrot.slane %v3082, 1
      %v3147 = vrot.slane %v3083, 1
      %v3148 = vrot.slane %v3084, 1
      %v3149 = vrot.slane %v3085, 1
      %v3150 = vrot.slane %v3086, 1
      %v3151 = vrot.slane %v3087, 1
      %v3152 = vrot.slane %v3088, 1
      %v3153 = vrot.slane %v3089, 1
      %v3154 = vrot.slane %v3090, 1
      %v3155 = vrot.slane %v3091, 1
      %v3156 = vrot.slane %v3092, 1
      %v3157 = vrot.slane %v3093, 1
      %v3158 = vrot.slane %v3094, 1
      %v3159 = vrot.slane %v3095, 1
      %v3160 = vrot.slane %v3096, 1
      %v3161 = vrot.slane %v3097, 1
      %v3162 = vrot.slane %v3098, 1
      %v3163 = vrot.slane %v3099, 1
      %v3164 = vrot.slane %v3100, 1
      %v3165 = vrot.slane %v3101, 1
      %v3166 = vrot.slane %v3102, 1
      %v3167 = vrot.slane %v3103, 1
      %v3168 = vrot.slane %v3104, 1
      %v3169 = vrot.slane %v3105, 1
      %v3170 = vrot.slane %v3106, 1
      %v3171 = vrot.slane %v3107, 1
      %v3172 = vrot.slane %v3108, 1
      %v3173 = vrot.slane %v3109, 1
      %v3174 = vrot.slane %v3110, 1
      %v3175 = vrot.slane %v3111, 1
      %v3176 = vrot.slane %v3112, 1
      %v3177 = vrot.slane %v3113, 1
      %v3178 = vrot.slane %v3114, 1
      %v3179 = vrot.slane %v3115, 1
      %v3180 = vrot.slane %v3116, 1
      %v3181 = vrot.slane %v3117, 1
      %v3182 = vrot.slane %v3118, 1
      %v3183 = vrot.slane %v3119, 1
      %v3184 = vrot.slane %v3120, 1
      %v3185 = vrot.slane %v3121, 1
      %v3186 = vrot.slane %v3122, 1
      %v3187 = vrot.slane %v3123, 1
      %v3188 = vrot.slane %v3124, 1
      %v3189 = vrot.slane %v3125, 1
      %v3190 = vrot.slane %v3126, 1
      %v3191 = vrot.slane %v3127, 1
      %v3192 = vrot.slane %v3128, 1
      %v3193 = vrot.slane %v3129, 1
      %v3194 = vrot.slane %v3130, 1
      %v3195 = vrot.slane %v3131, 1
      %v3196 = vrot.slane %v3132, 1
      %v3197 = vlaneseq
      %v3198 = vshrl.u32 %v3197, 7
      %vm3199 = vcmp.lt.s32.totalorder %v3198, 7
      %v3200 = vsel %vm3199, %v3195, %v3196
      %v3201 = vsel %vm3199, %v3194, %v3195
      %v3202 = vsel %vm3199, %v3193, %v3194
      %v3203 = vsel %vm3199, %v3192, %v3193
      %v3204 = vsel %vm3199, %v3191, %v3192
      %v3205 = vsel %vm3199, %v3190, %v3191
      %v3206 = vsel %vm3199, %v3189, %v3190
      %v3207 = vsel %vm3199, %v3188, %v3189
      %v3208 = vsel %vm3199, %v3187, %v3188
      %v3209 = vsel %vm3199, %v3186, %v3187
      %v3210 = vsel %vm3199, %v3185, %v3186
      %v3211 = vsel %vm3199, %v3184, %v3185
      %v3212 = vsel %vm3199, %v3183, %v3184
      %v3213 = vsel %vm3199, %v3182, %v3183
      %v3214 = vsel %vm3199, %v3181, %v3182
      %v3215 = vsel %vm3199, %v3180, %v3181
      %v3216 = vsel %vm3199, %v3179, %v3180
      %v3217 = vsel %vm3199, %v3178, %v3179
      %v3218 = vsel %vm3199, %v3177, %v3178
      %v3219 = vsel %vm3199, %v3176, %v3177
      %v3220 = vsel %vm3199, %v3175, %v3176
      %v3221 = vsel %vm3199, %v3174, %v3175
      %v3222 = vsel %vm3199, %v3173, %v3174
      %v3223 = vsel %vm3199, %v3172, %v3173
      %v3224 = vsel %vm3199, %v3171, %v3172
      %v3225 = vsel %vm3199, %v3170, %v3171
      %v3226 = vsel %vm3199, %v3169, %v3170
      %v3227 = vsel %vm3199, %v3168, %v3169
      %v3228 = vsel %vm3199, %v3167, %v3168
      %v3229 = vsel %vm3199, %v3166, %v3167
      %v3230 = vsel %vm3199, %v3165, %v3166
      %v3231 = vsel %vm3199, %v3164, %v3165
      %v3232 = vsel %vm3199, %v3163, %v3164
      %v3233 = vsel %vm3199, %v3162, %v3163
      %v3234 = vsel %vm3199, %v3161, %v3162
      %v3235 = vsel %vm3199, %v3160, %v3161
      %v3236 = vsel %vm3199, %v3159, %v3160
      %v3237 = vsel %vm3199, %v3158, %v3159
      %v3238 = vsel %vm3199, %v3157, %v3158
      %v3239 = vsel %vm3199, %v3156, %v3157
      %v3240 = vsel %vm3199, %v3155, %v3156
      %v3241 = vsel %vm3199, %v3154, %v3155
      %v3242 = vsel %vm3199, %v3153, %v3154
      %v3243 = vsel %vm3199, %v3152, %v3153
      %v3244 = vsel %vm3199, %v3151, %v3152
      %v3245 = vsel %vm3199, %v3150, %v3151
      %v3246 = vsel %vm3199, %v3149, %v3150
      %v3247 = vsel %vm3199, %v3148, %v3149
      %v3248 = vsel %vm3199, %v3147, %v3148
      %v3249 = vsel %vm3199, %v3146, %v3147
      %v3250 = vsel %vm3199, %v3145, %v3146
      %v3251 = vsel %vm3199, %v3144, %v3145
      %v3252 = vsel %vm3199, %v3143, %v3144
      %v3253 = vsel %vm3199, %v3142, %v3143
      %v3254 = vsel %vm3199, %v3141, %v3142
      %v3255 = vsel %vm3199, %v3140, %v3141
      %v3256 = vsel %vm3199, %v3139, %v3140
      %v3257 = vsel %vm3199, %v3138, %v3139
      %v3258 = vsel %vm3199, %v3137, %v3138
      %v3259 = vsel %vm3199, %v3136, %v3137
      %v3260 = vsel %vm3199, %v3135, %v3136
      %v3261 = vsel %vm3199, %v3134, %v3135
      %v3262 = vsel %vm3199, %v3133, %v3134
      %v3263 = vsel %vm3199, %v3196, %v3133
      %v3264 = vadd.f32 %v2123, %v3262
      %v3265 = vadd.f32 %v2124, %v3261
      %v3266 = vadd.f32 %v2125, %v3260
      %v3267 = vadd.f32 %v2126, %v3259
      %v3268 = vadd.f32 %v2127, %v3258
      %v3269 = vadd.f32 %v2128, %v3257
      %v3270 = vadd.f32 %v2129, %v3256
      %v3271 = vadd.f32 %v2130, %v3255
      %v3272 = vadd.f32 %v2131, %v3254
      %v3273 = vadd.f32 %v2132, %v3253
      %v3274 = vadd.f32 %v2133, %v3252
      %v3275 = vadd.f32 %v2134, %v3251
      %v3276 = vadd.f32 %v2135, %v3250
      %v3277 = vadd.f32 %v2136, %v3249
      %v3278 = vadd.f32 %v2137, %v3248
      %v3279 = vadd.f32 %v2138, %v3247
      %v3280 = vadd.f32 %v2139, %v3246
      %v3281 = vadd.f32 %v2140, %v3245
      %v3282 = vadd.f32 %v2141, %v3244
      %v3283 = vadd.f32 %v2142, %v3243
      %v3284 = vadd.f32 %v2143, %v3242
      %v3285 = vadd.f32 %v2144, %v3241
      %v3286 = vadd.f32 %v2145, %v3240
      %v3287 = vadd.f32 %v2146, %v3239
      %v3288 = vadd.f32 %v2147, %v3238
      %v3289 = vadd.f32 %v2148, %v3237
      %v3290 = vadd.f32 %v2149, %v3236
      %v3291 = vadd.f32 %v2150, %v3235
      %v3292 = vadd.f32 %v2151, %v3234
      %v3293 = vadd.f32 %v2152, %v3233
      %v3294 = vadd.f32 %v2153, %v3232
      %v3295 = vadd.f32 %v2154, %v3231
      %v3296 = vadd.f32 %v2155, %v3230
      %v3297 = vadd.f32 %v2156, %v3229
      %v3298 = vadd.f32 %v2157, %v3228
      %v3299 = vadd.f32 %v2158, %v3227
      %v3300 = vadd.f32 %v2159, %v3226
      %v3301 = vadd.f32 %v2160, %v3225
      %v3302 = vadd.f32 %v2161, %v3224
      %v3303 = vadd.f32 %v2162, %v3223
      %v3304 = vadd.f32 %v2163, %v3222
      %v3305 = vadd.f32 %v2164, %v3221
      %v3306 = vadd.f32 %v2165, %v3220
      %v3307 = vadd.f32 %v2166, %v3219
      %v3308 = vadd.f32 %v2167, %v3218
      %v3309 = vadd.f32 %v2168, %v3217
      %v3310 = vadd.f32 %v2169, %v3216
      %v3311 = vadd.f32 %v2170, %v3215
      %v3312 = vadd.f32 %v2171, %v3214
      %v3313 = vadd.f32 %v2172, %v3213
      %v3314 = vadd.f32 %v2173, %v3212
      %v3315 = vadd.f32 %v2174, %v3211
      %v3316 = vadd.f32 %v2175, %v3210
      %v3317 = vadd.f32 %v2176, %v3209
      %v3318 = vadd.f32 %v2177, %v3208
      %v3319 = vadd.f32 %v2178, %v3207
      %v3320 = vadd.f32 %v2179, %v3206
      %v3321 = vadd.f32 %v2180, %v3205
      %v3322 = vadd.f32 %v2181, %v3204
      %v3323 = vadd.f32 %v2182, %v3203
      %v3324 = vadd.f32 %v2183, %v3202
      %v3325 = vadd.f32 %v2184, %v3201
      %v3326 = vadd.f32 %v2185, %v3200
      %v3327 = vadd.f32 %v2186, %v3263
      %s3328 = scalar_lea.vmem %s1, 4
      %v3329 = vld [vmem:[%s3328] sm:$0x3]
      %s3330 = scalar_lea.vmem %s1, 10
      %v3331 = vld [vmem:[%s3330] sm:$0x3]
      %v3333 = vsel %vm732, %v3331, 0
      %3335 = vmatprep.subr.bf16.mxu0 0
      %3336 = vmatpush1.bf16.msra.mxu0 0
      %3337 = vmatprep.subr.bf16.mxu0 0
      %3338 = vmatpush1.bf16.msra.mxu0 0
      %3339 = vmatprep.subr.bf16.mxu0 0
      %3340 = vmatpush1.bf16.msra.mxu0 0
      %3341 = vmatprep.subr.bf16.mxu0 0
      %3342 = vmatpush1.bf16.msra.mxu0 0
      %3343 = vmatprep.subr.bf16.mxu0 0
      %3344 = vmatpush1.bf16.msra.mxu0 0
      %3345 = vmatprep.subr.bf16.mxu0 0
      %3346 = vmatpush1.bf16.msra.mxu0 0
      %3347 = vmatprep.subr.bf16.mxu0 0
      %3348 = vmatpush1.bf16.msra.mxu0 0
      %3349 = vmatprep.subr.bf16.mxu0 0
      %3350 = vmatpush1.bf16.msra.mxu0 %v3333
      %3351 = vmatprep.subr.bf16.mxu0 0
      %3352 = vmatpush2.bf16.msra.mxu0 0
      %3353 = vmatprep.subr.bf16.mxu0 0
      %3354 = vmatpush2.bf16.msra.mxu0 0
      %3355 = vmatprep.subr.bf16.mxu0 0
      %3356 = vmatpush2.bf16.msra.mxu0 0
      %3357 = vmatprep.subr.bf16.mxu0 0
      %3358 = vmatpush2.bf16.msra.mxu0 0
      %3359 = vmatprep.subr.bf16.mxu0 0
      %3360 = vmatpush2.bf16.msra.mxu0 0
      %3361 = vmatprep.subr.bf16.mxu0 0
      %3362 = vmatpush2.bf16.msra.mxu0 0
      %3363 = vmatprep.subr.bf16.mxu0 0
      %3364 = vmatpush2.bf16.msra.mxu0 0
      %3365 = vmatprep.subr.bf16.mxu0 0
      %3366 = vmatpush2.bf16.msra.mxu0 0
      %3367 = vmatprep.mubr.bf16.mxu0 0
      %3368 = vmatmul.mubr.bf16.gmra.mxu0 %v637
      %v3369 = vpop.f32.mrf.mxu0
      %v3370 = vadd.f32 0.0, %v3369
      %v3371 = vpop.f32.mrf.mxu0
      %v3372 = vpop.f32.mrf.mxu0
      %v3373 = vadd.f32 0.0, %v3372
      %v3374 = vpop.f32.mrf.mxu0
      %3375 = vmatprep.mubr.bf16.mxu0 0
      %3376 = vmatmul.mubr.bf16.gmra.mxu0 %v640
      %v3377 = vpop.f32.mrf.mxu0
      %v3378 = vadd.f32 0.0, %v3377
      %v3379 = vpop.f32.mrf.mxu0
      %v3380 = vpop.f32.mrf.mxu0
      %v3381 = vadd.f32 0.0, %v3380
      %v3382 = vpop.f32.mrf.mxu0
      %3383 = vmatprep.mubr.bf16.mxu0 0
      %3384 = vmatmul.mubr.bf16.gmra.mxu0 %v643
      %v3385 = vpop.f32.mrf.mxu0
      %v3386 = vadd.f32 0.0, %v3385
      %v3387 = vpop.f32.mrf.mxu0
      %v3388 = vpop.f32.mrf.mxu0
      %v3389 = vadd.f32 0.0, %v3388
      %v3390 = vpop.f32.mrf.mxu0
      %3391 = vmatprep.mubr.bf16.mxu0 0
      %3392 = vmatmul.mubr.bf16.gmra.mxu0 %v646
      %v3393 = vpop.f32.mrf.mxu0
      %v3394 = vadd.f32 0.0, %v3393
      %v3395 = vpop.f32.mrf.mxu0
      %v3396 = vpop.f32.mrf.mxu0
      %v3397 = vadd.f32 0.0, %v3396
      %v3398 = vpop.f32.mrf.mxu0
      %3399 = vmatprep.mubr.bf16.mxu0 0
      %3400 = vmatmul.mubr.bf16.gmra.mxu0 %v649
      %v3401 = vpop.f32.mrf.mxu0
      %v3402 = vadd.f32 0.0, %v3401
      %v3403 = vpop.f32.mrf.mxu0
      %v3404 = vpop.f32.mrf.mxu0
      %v3405 = vadd.f32 0.0, %v3404
      %v3406 = vpop.f32.mrf.mxu0
      %3407 = vmatprep.mubr.bf16.mxu0 0
      %3408 = vmatmul.mubr.bf16.gmra.mxu0 %v652
      %v3409 = vpop.f32.mrf.mxu0
      %v3410 = vadd.f32 0.0, %v3409
      %v3411 = vpop.f32.mrf.mxu0
      %v3412 = vpop.f32.mrf.mxu0
      %v3413 = vadd.f32 0.0, %v3412
      %v3414 = vpop.f32.mrf.mxu0
      %3415 = vmatprep.mubr.bf16.mxu0 0
      %3416 = vmatmul.mubr.bf16.gmra.mxu0 %v655
      %v3417 = vpop.f32.mrf.mxu0
      %v3418 = vadd.f32 0.0, %v3417
      %v3419 = vpop.f32.mrf.mxu0
      %v3420 = vpop.f32.mrf.mxu0
      %v3421 = vadd.f32 0.0, %v3420
      %v3422 = vpop.f32.mrf.mxu0
      %3423 = vmatprep.mubr.bf16.mxu0 0
      %3424 = vmatmul.mubr.bf16.gmra.mxu0 %v658
      %v3425 = vpop.f32.mrf.mxu0
      %v3426 = vadd.f32 0.0, %v3425
      %v3427 = vpop.f32.mrf.mxu0
      %v3428 = vpop.f32.mrf.mxu0
      %v3429 = vadd.f32 0.0, %v3428
      %v3430 = vpop.f32.mrf.mxu0
      %3431 = vmatprep.mubr.bf16.mxu0 0
      %3432 = vmatmul.mubr.bf16.gmra.mxu0 %v661
      %v3433 = vpop.f32.mrf.mxu0
      %v3434 = vadd.f32 0.0, %v3433
      %v3435 = vpop.f32.mrf.mxu0
      %v3436 = vpop.f32.mrf.mxu0
      %v3437 = vadd.f32 0.0, %v3436
      %v3438 = vpop.f32.mrf.mxu0
      %3439 = vmatprep.mubr.bf16.mxu0 0
      %3440 = vmatmul.mubr.bf16.gmra.mxu0 %v664
      %v3441 = vpop.f32.mrf.mxu0
      %v3442 = vadd.f32 0.0, %v3441
      %v3443 = vpop.f32.mrf.mxu0
      %v3444 = vpop.f32.mrf.mxu0
      %v3445 = vadd.f32 0.0, %v3444
      %v3446 = vpop.f32.mrf.mxu0
      %3447 = vmatprep.mubr.bf16.mxu0 0
      %3448 = vmatmul.mubr.bf16.gmra.mxu0 %v667
      %v3449 = vpop.f32.mrf.mxu0
      %v3450 = vadd.f32 0.0, %v3449
      %v3451 = vpop.f32.mrf.mxu0
      %v3452 = vpop.f32.mrf.mxu0
      %v3453 = vadd.f32 0.0, %v3452
      %v3454 = vpop.f32.mrf.mxu0
      %3455 = vmatprep.mubr.bf16.mxu0 0
      %3456 = vmatmul.mubr.bf16.gmra.mxu0 %v670
      %v3457 = vpop.f32.mrf.mxu0
      %v3458 = vadd.f32 0.0, %v3457
      %v3459 = vpop.f32.mrf.mxu0
      %v3460 = vpop.f32.mrf.mxu0
      %v3461 = vadd.f32 0.0, %v3460
      %v3462 = vpop.f32.mrf.mxu0
      %3463 = vmatprep.mubr.bf16.mxu0 0
      %3464 = vmatmul.mubr.bf16.gmra.mxu0 %v673
      %v3465 = vpop.f32.mrf.mxu0
      %v3466 = vadd.f32 0.0, %v3465
      %v3467 = vpop.f32.mrf.mxu0
      %v3468 = vpop.f32.mrf.mxu0
      %v3469 = vadd.f32 0.0, %v3468
      %v3470 = vpop.f32.mrf.mxu0
      %3471 = vmatprep.mubr.bf16.mxu0 0
      %3472 = vmatmul.mubr.bf16.gmra.mxu0 %v676
      %v3473 = vpop.f32.mrf.mxu0
      %v3474 = vadd.f32 0.0, %v3473
      %v3475 = vpop.f32.mrf.mxu0
      %v3476 = vpop.f32.mrf.mxu0
      %v3477 = vadd.f32 0.0, %v3476
      %v3478 = vpop.f32.mrf.mxu0
      %3479 = vmatprep.mubr.bf16.mxu0 0
      %3480 = vmatmul.mubr.bf16.gmra.mxu0 %v679
      %v3481 = vpop.f32.mrf.mxu0
      %v3482 = vadd.f32 0.0, %v3481
      %v3483 = vpop.f32.mrf.mxu0
      %v3484 = vpop.f32.mrf.mxu0
      %v3485 = vadd.f32 0.0, %v3484
      %v3486 = vpop.f32.mrf.mxu0
      %3487 = vmatprep.mubr.bf16.mxu0 0
      %3488 = vmatmul.mubr.bf16.gmra.mxu0 %v682
      %v3489 = vpop.f32.mrf.mxu0
      %v3490 = vadd.f32 0.0, %v3489
      %v3491 = vpop.f32.mrf.mxu0
      %v3492 = vpop.f32.mrf.mxu0
      %v3493 = vadd.f32 0.0, %v3492
      %v3494 = vpop.f32.mrf.mxu0
      %3495 = vmatprep.mubr.bf16.mxu0 0
      %3496 = vmatmul.mubr.bf16.gmra.mxu0 %v685
      %v3497 = vpop.f32.mrf.mxu0
      %v3498 = vadd.f32 0.0, %v3497
      %v3499 = vpop.f32.mrf.mxu0
      %v3500 = vpop.f32.mrf.mxu0
      %v3501 = vadd.f32 0.0, %v3500
      %v3502 = vpop.f32.mrf.mxu0
      %3503 = vmatprep.mubr.bf16.mxu0 0
      %3504 = vmatmul.mubr.bf16.gmra.mxu0 %v688
      %v3505 = vpop.f32.mrf.mxu0
      %v3506 = vadd.f32 0.0, %v3505
      %v3507 = vpop.f32.mrf.mxu0
      %v3508 = vpop.f32.mrf.mxu0
      %v3509 = vadd.f32 0.0, %v3508
      %v3510 = vpop.f32.mrf.mxu0
      %3511 = vmatprep.mubr.bf16.mxu0 0
      %3512 = vmatmul.mubr.bf16.gmra.mxu0 %v691
      %v3513 = vpop.f32.mrf.mxu0
      %v3514 = vadd.f32 0.0, %v3513
      %v3515 = vpop.f32.mrf.mxu0
      %v3516 = vpop.f32.mrf.mxu0
      %v3517 = vadd.f32 0.0, %v3516
      %v3518 = vpop.f32.mrf.mxu0
      %3519 = vmatprep.mubr.bf16.mxu0 0
      %3520 = vmatmul.mubr.bf16.gmra.mxu0 %v694
      %v3521 = vpop.f32.mrf.mxu0
      %v3522 = vadd.f32 0.0, %v3521
      %v3523 = vpop.f32.mrf.mxu0
      %v3524 = vpop.f32.mrf.mxu0
      %v3525 = vadd.f32 0.0, %v3524
      %v3526 = vpop.f32.mrf.mxu0
      %3527 = vmatprep.mubr.bf16.mxu0 0
      %3528 = vmatmul.mubr.bf16.gmra.mxu0 %v697
      %v3529 = vpop.f32.mrf.mxu0
      %v3530 = vadd.f32 0.0, %v3529
      %v3531 = vpop.f32.mrf.mxu0
      %v3532 = vpop.f32.mrf.mxu0
      %v3533 = vadd.f32 0.0, %v3532
      %v3534 = vpop.f32.mrf.mxu0
      %3535 = vmatprep.mubr.bf16.mxu0 0
      %3536 = vmatmul.mubr.bf16.gmra.mxu0 %v700
      %v3537 = vpop.f32.mrf.mxu0
      %v3538 = vadd.f32 0.0, %v3537
      %v3539 = vpop.f32.mrf.mxu0
      %v3540 = vpop.f32.mrf.mxu0
      %v3541 = vadd.f32 0.0, %v3540
      %v3542 = vpop.f32.mrf.mxu0
      %3543 = vmatprep.mubr.bf16.mxu0 0
      %3544 = vmatmul.mubr.bf16.gmra.mxu0 %v703
      %v3545 = vpop.f32.mrf.mxu0
      %v3546 = vadd.f32 0.0, %v3545
      %v3547 = vpop.f32.mrf.mxu0
      %v3548 = vpop.f32.mrf.mxu0
      %v3549 = vadd.f32 0.0, %v3548
      %v3550 = vpop.f32.mrf.mxu0
      %3551 = vmatprep.mubr.bf16.mxu0 0
      %3552 = vmatmul.mubr.bf16.gmra.mxu0 %v706
      %v3553 = vpop.f32.mrf.mxu0
      %v3554 = vadd.f32 0.0, %v3553
      %v3555 = vpop.f32.mrf.mxu0
      %v3556 = vpop.f32.mrf.mxu0
      %v3557 = vadd.f32 0.0, %v3556
      %v3558 = vpop.f32.mrf.mxu0
      %3559 = vmatprep.mubr.bf16.mxu0 0
      %3560 = vmatmul.mubr.bf16.gmra.mxu0 %v709
      %v3561 = vpop.f32.mrf.mxu0
      %v3562 = vadd.f32 0.0, %v3561
      %v3563 = vpop.f32.mrf.mxu0
      %v3564 = vpop.f32.mrf.mxu0
      %v3565 = vadd.f32 0.0, %v3564
      %v3566 = vpop.f32.mrf.mxu0
      %3567 = vmatprep.mubr.bf16.mxu0 0
      %3568 = vmatmul.mubr.bf16.gmra.mxu0 %v712
      %v3569 = vpop.f32.mrf.mxu0
      %v3570 = vadd.f32 0.0, %v3569
      %v3571 = vpop.f32.mrf.mxu0
      %v3572 = vpop.f32.mrf.mxu0
      %v3573 = vadd.f32 0.0, %v3572
      %v3574 = vpop.f32.mrf.mxu0
      %3575 = vmatprep.mubr.bf16.mxu0 0
      %3576 = vmatmul.mubr.bf16.gmra.mxu0 %v715
      %v3577 = vpop.f32.mrf.mxu0
      %v3578 = vadd.f32 0.0, %v3577
      %v3579 = vpop.f32.mrf.mxu0
      %v3580 = vpop.f32.mrf.mxu0
      %v3581 = vadd.f32 0.0, %v3580
      %v3582 = vpop.f32.mrf.mxu0
      %3583 = vmatprep.mubr.bf16.mxu0 0
      %3584 = vmatmul.mubr.bf16.gmra.mxu0 %v718
      %v3585 = vpop.f32.mrf.mxu0
      %v3586 = vadd.f32 0.0, %v3585
      %v3587 = vpop.f32.mrf.mxu0
      %v3588 = vpop.f32.mrf.mxu0
      %v3589 = vadd.f32 0.0, %v3588
      %v3590 = vpop.f32.mrf.mxu0
      %3591 = vmatprep.mubr.bf16.mxu0 0
      %3592 = vmatmul.mubr.bf16.gmra.mxu0 %v721
      %v3593 = vpop.f32.mrf.mxu0
      %v3594 = vadd.f32 0.0, %v3593
      %v3595 = vpop.f32.mrf.mxu0
      %v3596 = vpop.f32.mrf.mxu0
      %v3597 = vadd.f32 0.0, %v3596
      %v3598 = vpop.f32.mrf.mxu0
      %3599 = vmatprep.mubr.bf16.mxu0 0
      %3600 = vmatmul.mubr.bf16.gmra.mxu0 %v724
      %v3601 = vpop.f32.mrf.mxu0
      %v3602 = vadd.f32 0.0, %v3601
      %v3603 = vpop.f32.mrf.mxu0
      %v3604 = vpop.f32.mrf.mxu0
      %v3605 = vadd.f32 0.0, %v3604
      %v3606 = vpop.f32.mrf.mxu0
      %3607 = vmatprep.mubr.bf16.mxu0 0
      %3608 = vmatmul.mubr.bf16.gmra.mxu0 %v727
      %v3609 = vpop.f32.mrf.mxu0
      %v3610 = vadd.f32 0.0, %v3609
      %v3611 = vpop.f32.mrf.mxu0
      %v3612 = vpop.f32.mrf.mxu0
      %v3613 = vadd.f32 0.0, %v3612
      %v3614 = vpop.f32.mrf.mxu0
      %3615 = vmatprep.mubr.bf16.mxu0 0
      %3616 = vmatmul.mubr.bf16.gmra.mxu0 %v730
      %v3617 = vpop.f32.mrf.mxu0
      %v3618 = vadd.f32 0.0, %v3617
      %v3619 = vpop.f32.mrf.mxu0
      %v3620 = vpop.f32.mrf.mxu0
      %v3621 = vadd.f32 0.0, %v3620
      %v3622 = vpop.f32.mrf.mxu0
      %3623 = vdwg.mxu0
      %v3625 = vsel %vm732, %v3329, 0
      %3627 = vmatprep.subr.bf16.mxu0 0
      %3628 = vmatpush1.bf16.msra.mxu0 0
      %3629 = vmatprep.subr.bf16.mxu0 0
      %3630 = vmatpush1.bf16.msra.mxu0 0
      %3631 = vmatprep.subr.bf16.mxu0 0
      %3632 = vmatpush1.bf16.msra.mxu0 0
      %3633 = vmatprep.subr.bf16.mxu0 0
      %3634 = vmatpush1.bf16.msra.mxu0 0
      %3635 = vmatprep.subr.bf16.mxu0 0
      %3636 = vmatpush1.bf16.msra.mxu0 0
      %3637 = vmatprep.subr.bf16.mxu0 0
      %3638 = vmatpush1.bf16.msra.mxu0 0
      %3639 = vmatprep.subr.bf16.mxu0 0
      %3640 = vmatpush1.bf16.msra.mxu0 0
      %3641 = vmatprep.subr.bf16.mxu0 0
      %3642 = vmatpush1.bf16.msra.mxu0 %v3625
      %3643 = vmatprep.subr.bf16.mxu0 0
      %3644 = vmatpush2.bf16.msra.mxu0 0
      %3645 = vmatprep.subr.bf16.mxu0 0
      %3646 = vmatpush2.bf16.msra.mxu0 0
      %3647 = vmatprep.subr.bf16.mxu0 0
      %3648 = vmatpush2.bf16.msra.mxu0 0
      %3649 = vmatprep.subr.bf16.mxu0 0
      %3650 = vmatpush2.bf16.msra.mxu0 0
      %3651 = vmatprep.subr.bf16.mxu0 0
      %3652 = vmatpush2.bf16.msra.mxu0 0
      %3653 = vmatprep.subr.bf16.mxu0 0
      %3654 = vmatpush2.bf16.msra.mxu0 0
      %3655 = vmatprep.subr.bf16.mxu0 0
      %3656 = vmatpush2.bf16.msra.mxu0 0
      %3657 = vmatprep.subr.bf16.mxu0 0
      %3658 = vmatpush2.bf16.msra.mxu0 0
      %3659 = vmatprep.mubr.bf16.mxu0 0
      %3660 = vmatmul.mubr.bf16.gmra.mxu0 %v1186
      %v3661 = vpop.f32.mrf.mxu0
      %v3662 = vadd.f32 %v3370, %v3661
      %v3663 = vpop.f32.mrf.mxu0
      %v3664 = vpop.f32.mrf.mxu0
      %v3665 = vadd.f32 %v3373, %v3664
      %v3666 = vpop.f32.mrf.mxu0
      %3667 = vmatprep.mubr.bf16.mxu0 0
      %3668 = vmatmul.mubr.bf16.gmra.mxu0 %v1189
      %v3669 = vpop.f32.mrf.mxu0
      %v3670 = vadd.f32 %v3378, %v3669
      %v3671 = vpop.f32.mrf.mxu0
      %v3672 = vpop.f32.mrf.mxu0
      %v3673 = vadd.f32 %v3381, %v3672
      %v3674 = vpop.f32.mrf.mxu0
      %3675 = vmatprep.mubr.bf16.mxu0 0
      %3676 = vmatmul.mubr.bf16.gmra.mxu0 %v1192
      %v3677 = vpop.f32.mrf.mxu0
      %v3678 = vadd.f32 %v3386, %v3677
      %v3679 = vpop.f32.mrf.mxu0
      %v3680 = vpop.f32.mrf.mxu0
      %v3681 = vadd.f32 %v3389, %v3680
      %v3682 = vpop.f32.mrf.mxu0
      %3683 = vmatprep.mubr.bf16.mxu0 0
      %3684 = vmatmul.mubr.bf16.gmra.mxu0 %v1195
      %v3685 = vpop.f32.mrf.mxu0
      %v3686 = vadd.f32 %v3394, %v3685
      %v3687 = vpop.f32.mrf.mxu0
      %v3688 = vpop.f32.mrf.mxu0
      %v3689 = vadd.f32 %v3397, %v3688
      %v3690 = vpop.f32.mrf.mxu0
      %3691 = vmatprep.mubr.bf16.mxu0 0
      %3692 = vmatmul.mubr.bf16.gmra.mxu0 %v1198
      %v3693 = vpop.f32.mrf.mxu0
      %v3694 = vadd.f32 %v3402, %v3693
      %v3695 = vpop.f32.mrf.mxu0
      %v3696 = vpop.f32.mrf.mxu0
      %v3697 = vadd.f32 %v3405, %v3696
      %v3698 = vpop.f32.mrf.mxu0
      %3699 = vmatprep.mubr.bf16.mxu0 0
      %3700 = vmatmul.mubr.bf16.gmra.mxu0 %v1201
      %v3701 = vpop.f32.mrf.mxu0
      %v3702 = vadd.f32 %v3410, %v3701
      %v3703 = vpop.f32.mrf.mxu0
      %v3704 = vpop.f32.mrf.mxu0
      %v3705 = vadd.f32 %v3413, %v3704
      %v3706 = vpop.f32.mrf.mxu0
      %3707 = vmatprep.mubr.bf16.mxu0 0
      %3708 = vmatmul.mubr.bf16.gmra.mxu0 %v1204
      %v3709 = vpop.f32.mrf.mxu0
      %v3710 = vadd.f32 %v3418, %v3709
      %v3711 = vpop.f32.mrf.mxu0
      %v3712 = vpop.f32.mrf.mxu0
      %v3713 = vadd.f32 %v3421, %v3712
      %v3714 = vpop.f32.mrf.mxu0
      %3715 = vmatprep.mubr.bf16.mxu0 0
      %3716 = vmatmul.mubr.bf16.gmra.mxu0 %v1207
      %v3717 = vpop.f32.mrf.mxu0
      %v3718 = vadd.f32 %v3426, %v3717
      %v3719 = vpop.f32.mrf.mxu0
      %v3720 = vpop.f32.mrf.mxu0
      %v3721 = vadd.f32 %v3429, %v3720
      %v3722 = vpop.f32.mrf.mxu0
      %3723 = vmatprep.mubr.bf16.mxu0 0
      %3724 = vmatmul.mubr.bf16.gmra.mxu0 %v1210
      %v3725 = vpop.f32.mrf.mxu0
      %v3726 = vadd.f32 %v3434, %v3725
      %v3727 = vpop.f32.mrf.mxu0
      %v3728 = vpop.f32.mrf.mxu0
      %v3729 = vadd.f32 %v3437, %v3728
      %v3730 = vpop.f32.mrf.mxu0
      %3731 = vmatprep.mubr.bf16.mxu0 0
      %3732 = vmatmul.mubr.bf16.gmra.mxu0 %v1213
      %v3733 = vpop.f32.mrf.mxu0
      %v3734 = vadd.f32 %v3442, %v3733
      %v3735 = vpop.f32.mrf.mxu0
      %v3736 = vpop.f32.mrf.mxu0
      %v3737 = vadd.f32 %v3445, %v3736
      %v3738 = vpop.f32.mrf.mxu0
      %3739 = vmatprep.mubr.bf16.mxu0 0
      %3740 = vmatmul.mubr.bf16.gmra.mxu0 %v1216
      %v3741 = vpop.f32.mrf.mxu0
      %v3742 = vadd.f32 %v3450, %v3741
      %v3743 = vpop.f32.mrf.mxu0
      %v3744 = vpop.f32.mrf.mxu0
      %v3745 = vadd.f32 %v3453, %v3744
      %v3746 = vpop.f32.mrf.mxu0
      %3747 = vmatprep.mubr.bf16.mxu0 0
      %3748 = vmatmul.mubr.bf16.gmra.mxu0 %v1219
      %v3749 = vpop.f32.mrf.mxu0
      %v3750 = vadd.f32 %v3458, %v3749
      %v3751 = vpop.f32.mrf.mxu0
      %v3752 = vpop.f32.mrf.mxu0
      %v3753 = vadd.f32 %v3461, %v3752
      %v3754 = vpop.f32.mrf.mxu0
      %3755 = vmatprep.mubr.bf16.mxu0 0
      %3756 = vmatmul.mubr.bf16.gmra.mxu0 %v1222
      %v3757 = vpop.f32.mrf.mxu0
      %v3758 = vadd.f32 %v3466, %v3757
      %v3759 = vpop.f32.mrf.mxu0
      %v3760 = vpop.f32.mrf.mxu0
      %v3761 = vadd.f32 %v3469, %v3760
      %v3762 = vpop.f32.mrf.mxu0
      %3763 = vmatprep.mubr.bf16.mxu0 0
      %3764 = vmatmul.mubr.bf16.gmra.mxu0 %v1225
      %v3765 = vpop.f32.mrf.mxu0
      %v3766 = vadd.f32 %v3474, %v3765
      %v3767 = vpop.f32.mrf.mxu0
      %v3768 = vpop.f32.mrf.mxu0
      %v3769 = vadd.f32 %v3477, %v3768
      %v3770 = vpop.f32.mrf.mxu0
      %3771 = vmatprep.mubr.bf16.mxu0 0
      %3772 = vmatmul.mubr.bf16.gmra.mxu0 %v1228
      %v3773 = vpop.f32.mrf.mxu0
      %v3774 = vadd.f32 %v3482, %v3773
      %v3775 = vpop.f32.mrf.mxu0
      %v3776 = vpop.f32.mrf.mxu0
      %v3777 = vadd.f32 %v3485, %v3776
      %v3778 = vpop.f32.mrf.mxu0
      %3779 = vmatprep.mubr.bf16.mxu0 0
      %3780 = vmatmul.mubr.bf16.gmra.mxu0 %v1231
      %v3781 = vpop.f32.mrf.mxu0
      %v3782 = vadd.f32 %v3490, %v3781
      %v3783 = vpop.f32.mrf.mxu0
      %v3784 = vpop.f32.mrf.mxu0
      %v3785 = vadd.f32 %v3493, %v3784
      %v3786 = vpop.f32.mrf.mxu0
      %3787 = vmatprep.mubr.bf16.mxu0 0
      %3788 = vmatmul.mubr.bf16.gmra.mxu0 %v1234
      %v3789 = vpop.f32.mrf.mxu0
      %v3790 = vadd.f32 %v3498, %v3789
      %v3791 = vpop.f32.mrf.mxu0
      %v3792 = vpop.f32.mrf.mxu0
      %v3793 = vadd.f32 %v3501, %v3792
      %v3794 = vpop.f32.mrf.mxu0
      %3795 = vmatprep.mubr.bf16.mxu0 0
      %3796 = vmatmul.mubr.bf16.gmra.mxu0 %v1237
      %v3797 = vpop.f32.mrf.mxu0
      %v3798 = vadd.f32 %v3506, %v3797
      %v3799 = vpop.f32.mrf.mxu0
      %v3800 = vpop.f32.mrf.mxu0
      %v3801 = vadd.f32 %v3509, %v3800
      %v3802 = vpop.f32.mrf.mxu0
      %3803 = vmatprep.mubr.bf16.mxu0 0
      %3804 = vmatmul.mubr.bf16.gmra.mxu0 %v1240
      %v3805 = vpop.f32.mrf.mxu0
      %v3806 = vadd.f32 %v3514, %v3805
      %v3807 = vpop.f32.mrf.mxu0
      %v3808 = vpop.f32.mrf.mxu0
      %v3809 = vadd.f32 %v3517, %v3808
      %v3810 = vpop.f32.mrf.mxu0
      %3811 = vmatprep.mubr.bf16.mxu0 0
      %3812 = vmatmul.mubr.bf16.gmra.mxu0 %v1243
      %v3813 = vpop.f32.mrf.mxu0
      %v3814 = vadd.f32 %v3522, %v3813
      %v3815 = vpop.f32.mrf.mxu0
      %v3816 = vpop.f32.mrf.mxu0
      %v3817 = vadd.f32 %v3525, %v3816
      %v3818 = vpop.f32.mrf.mxu0
      %3819 = vmatprep.mubr.bf16.mxu0 0
      %3820 = vmatmul.mubr.bf16.gmra.mxu0 %v1246
      %v3821 = vpop.f32.mrf.mxu0
      %v3822 = vadd.f32 %v3530, %v3821
      %v3823 = vpop.f32.mrf.mxu0
      %v3824 = vpop.f32.mrf.mxu0
      %v3825 = vadd.f32 %v3533, %v3824
      %v3826 = vpop.f32.mrf.mxu0
      %3827 = vmatprep.mubr.bf16.mxu0 0
      %3828 = vmatmul.mubr.bf16.gmra.mxu0 %v1249
      %v3829 = vpop.f32.mrf.mxu0
      %v3830 = vadd.f32 %v3538, %v3829
      %v3831 = vpop.f32.mrf.mxu0
      %v3832 = vpop.f32.mrf.mxu0
      %v3833 = vadd.f32 %v3541, %v3832
      %v3834 = vpop.f32.mrf.mxu0
      %3835 = vmatprep.mubr.bf16.mxu0 0
      %3836 = vmatmul.mubr.bf16.gmra.mxu0 %v1252
      %v3837 = vpop.f32.mrf.mxu0
      %v3838 = vadd.f32 %v3546, %v3837
      %v3839 = vpop.f32.mrf.mxu0
      %v3840 = vpop.f32.mrf.mxu0
      %v3841 = vadd.f32 %v3549, %v3840
      %v3842 = vpop.f32.mrf.mxu0
      %3843 = vmatprep.mubr.bf16.mxu0 0
      %3844 = vmatmul.mubr.bf16.gmra.mxu0 %v1255
      %v3845 = vpop.f32.mrf.mxu0
      %v3846 = vadd.f32 %v3554, %v3845
      %v3847 = vpop.f32.mrf.mxu0
      %v3848 = vpop.f32.mrf.mxu0
      %v3849 = vadd.f32 %v3557, %v3848
      %v3850 = vpop.f32.mrf.mxu0
      %3851 = vmatprep.mubr.bf16.mxu0 0
      %3852 = vmatmul.mubr.bf16.gmra.mxu0 %v1258
      %v3853 = vpop.f32.mrf.mxu0
      %v3854 = vadd.f32 %v3562, %v3853
      %v3855 = vpop.f32.mrf.mxu0
      %v3856 = vpop.f32.mrf.mxu0
      %v3857 = vadd.f32 %v3565, %v3856
      %v3858 = vpop.f32.mrf.mxu0
      %3859 = vmatprep.mubr.bf16.mxu0 0
      %3860 = vmatmul.mubr.bf16.gmra.mxu0 %v1261
      %v3861 = vpop.f32.mrf.mxu0
      %v3862 = vadd.f32 %v3570, %v3861
      %v3863 = vpop.f32.mrf.mxu0
      %v3864 = vpop.f32.mrf.mxu0
      %v3865 = vadd.f32 %v3573, %v3864
      %v3866 = vpop.f32.mrf.mxu0
      %3867 = vmatprep.mubr.bf16.mxu0 0
      %3868 = vmatmul.mubr.bf16.gmra.mxu0 %v1264
      %v3869 = vpop.f32.mrf.mxu0
      %v3870 = vadd.f32 %v3578, %v3869
      %v3871 = vpop.f32.mrf.mxu0
      %v3872 = vpop.f32.mrf.mxu0
      %v3873 = vadd.f32 %v3581, %v3872
      %v3874 = vpop.f32.mrf.mxu0
      %3875 = vmatprep.mubr.bf16.mxu0 0
      %3876 = vmatmul.mubr.bf16.gmra.mxu0 %v1267
      %v3877 = vpop.f32.mrf.mxu0
      %v3878 = vadd.f32 %v3586, %v3877
      %v3879 = vpop.f32.mrf.mxu0
      %v3880 = vpop.f32.mrf.mxu0
      %v3881 = vadd.f32 %v3589, %v3880
      %v3882 = vpop.f32.mrf.mxu0
      %3883 = vmatprep.mubr.bf16.mxu0 0
      %3884 = vmatmul.mubr.bf16.gmra.mxu0 %v1270
      %v3885 = vpop.f32.mrf.mxu0
      %v3886 = vadd.f32 %v3594, %v3885
      %v3887 = vpop.f32.mrf.mxu0
      %v3888 = vpop.f32.mrf.mxu0
      %v3889 = vadd.f32 %v3597, %v3888
      %v3890 = vpop.f32.mrf.mxu0
      %3891 = vmatprep.mubr.bf16.mxu0 0
      %3892 = vmatmul.mubr.bf16.gmra.mxu0 %v1273
      %v3893 = vpop.f32.mrf.mxu0
      %v3894 = vadd.f32 %v3602, %v3893
      %v3895 = vpop.f32.mrf.mxu0
      %v3896 = vpop.f32.mrf.mxu0
      %v3897 = vadd.f32 %v3605, %v3896
      %v3898 = vpop.f32.mrf.mxu0
      %3899 = vmatprep.mubr.bf16.mxu0 0
      %3900 = vmatmul.mubr.bf16.gmra.mxu0 %v1276
      %v3901 = vpop.f32.mrf.mxu0
      %v3902 = vadd.f32 %v3610, %v3901
      %v3903 = vpop.f32.mrf.mxu0
      %v3904 = vpop.f32.mrf.mxu0
      %v3905 = vadd.f32 %v3613, %v3904
      %v3906 = vpop.f32.mrf.mxu0
      %3907 = vmatprep.mubr.bf16.mxu0 0
      %3908 = vmatmul.mubr.bf16.gmra.mxu0 %v1279
      %v3909 = vpop.f32.mrf.mxu0
      %v3910 = vadd.f32 %v3618, %v3909
      %v3911 = vpop.f32.mrf.mxu0
      %v3912 = vpop.f32.mrf.mxu0
      %v3913 = vadd.f32 %v3621, %v3912
      %v3914 = vpop.f32.mrf.mxu0
      %3915 = vdwg.mxu0
      %s3916 = scalar_lea.vmem %s1, 16
      %v3917 = vld [vmem:[%s3916] sm:$0x3]
      %v3919 = vsel %vm732, %v3917, 0
      %3921 = vmatprep.subr.bf16.mxu0 0
      %3922 = vmatpush1.bf16.msra.mxu0 0
      %3923 = vmatprep.subr.bf16.mxu0 0
      %3924 = vmatpush1.bf16.msra.mxu0 0
      %3925 = vmatprep.subr.bf16.mxu0 0
      %3926 = vmatpush1.bf16.msra.mxu0 0
      %3927 = vmatprep.subr.bf16.mxu0 0
      %3928 = vmatpush1.bf16.msra.mxu0 0
      %3929 = vmatprep.subr.bf16.mxu0 0
      %3930 = vmatpush1.bf16.msra.mxu0 0
      %3931 = vmatprep.subr.bf16.mxu0 0
      %3932 = vmatpush1.bf16.msra.mxu0 0
      %3933 = vmatprep.subr.bf16.mxu0 0
      %3934 = vmatpush1.bf16.msra.mxu0 0
      %3935 = vmatprep.subr.bf16.mxu0 0
      %3936 = vmatpush1.bf16.msra.mxu0 %v3919
      %3937 = vmatprep.subr.bf16.mxu0 0
      %3938 = vmatpush2.bf16.msra.mxu0 0
      %3939 = vmatprep.subr.bf16.mxu0 0
      %3940 = vmatpush2.bf16.msra.mxu0 0
      %3941 = vmatprep.subr.bf16.mxu0 0
      %3942 = vmatpush2.bf16.msra.mxu0 0
      %3943 = vmatprep.subr.bf16.mxu0 0
      %3944 = vmatpush2.bf16.msra.mxu0 0
      %3945 = vmatprep.subr.bf16.mxu0 0
      %3946 = vmatpush2.bf16.msra.mxu0 0
      %3947 = vmatprep.subr.bf16.mxu0 0
      %3948 = vmatpush2.bf16.msra.mxu0 0
      %3949 = vmatprep.subr.bf16.mxu0 0
      %3950 = vmatpush2.bf16.msra.mxu0 0
      %3951 = vmatprep.subr.bf16.mxu0 0
      %3952 = vmatpush2.bf16.msra.mxu0 0
      %3953 = vmatprep.mubr.bf16.mxu0 0
      %3954 = vmatmul.mubr.bf16.gmra.mxu0 %v1736
      %v3955 = vpop.f32.mrf.mxu0
      %v3956 = vadd.f32 0.0, %v3955
      %v3957 = vpop.f32.mrf.mxu0
      %v3958 = vpop.f32.mrf.mxu0
      %v3959 = vadd.f32 0.0, %v3958
      %v3960 = vpop.f32.mrf.mxu0
      %3961 = vmatprep.mubr.bf16.mxu0 0
      %3962 = vmatmul.mubr.bf16.gmra.mxu0 %v1739
      %v3963 = vpop.f32.mrf.mxu0
      %v3964 = vadd.f32 0.0, %v3963
      %v3965 = vpop.f32.mrf.mxu0
      %v3966 = vpop.f32.mrf.mxu0
      %v3967 = vadd.f32 0.0, %v3966
      %v3968 = vpop.f32.mrf.mxu0
      %3969 = vmatprep.mubr.bf16.mxu0 0
      %3970 = vmatmul.mubr.bf16.gmra.mxu0 %v1742
      %v3971 = vpop.f32.mrf.mxu0
      %v3972 = vadd.f32 0.0, %v3971
      %v3973 = vpop.f32.mrf.mxu0
      %v3974 = vpop.f32.mrf.mxu0
      %v3975 = vadd.f32 0.0, %v3974
      %v3976 = vpop.f32.mrf.mxu0
      %3977 = vmatprep.mubr.bf16.mxu0 0
      %3978 = vmatmul.mubr.bf16.gmra.mxu0 %v1745
      %v3979 = vpop.f32.mrf.mxu0
      %v3980 = vadd.f32 0.0, %v3979
      %v3981 = vpop.f32.mrf.mxu0
      %v3982 = vpop.f32.mrf.mxu0
      %v3983 = vadd.f32 0.0, %v3982
      %v3984 = vpop.f32.mrf.mxu0
      %3985 = vmatprep.mubr.bf16.mxu0 0
      %3986 = vmatmul.mubr.bf16.gmra.mxu0 %v1748
      %v3987 = vpop.f32.mrf.mxu0
      %v3988 = vadd.f32 0.0, %v3987
      %v3989 = vpop.f32.mrf.mxu0
      %v3990 = vpop.f32.mrf.mxu0
      %v3991 = vadd.f32 0.0, %v3990
      %v3992 = vpop.f32.mrf.mxu0
      %3993 = vmatprep.mubr.bf16.mxu0 0
      %3994 = vmatmul.mubr.bf16.gmra.mxu0 %v1751
      %v3995 = vpop.f32.mrf.mxu0
      %v3996 = vadd.f32 0.0, %v3995
      %v3997 = vpop.f32.mrf.mxu0
      %v3998 = vpop.f32.mrf.mxu0
      %v3999 = vadd.f32 0.0, %v3998
      %v4000 = vpop.f32.mrf.mxu0
      %4001 = vmatprep.mubr.bf16.mxu0 0
      %4002 = vmatmul.mubr.bf16.gmra.mxu0 %v1754
      %v4003 = vpop.f32.mrf.mxu0
      %v4004 = vadd.f32 0.0, %v4003
      %v4005 = vpop.f32.mrf.mxu0
      %v4006 = vpop.f32.mrf.mxu0
      %v4007 = vadd.f32 0.0, %v4006
      %v4008 = vpop.f32.mrf.mxu0
      %4009 = vmatprep.mubr.bf16.mxu0 0
      %4010 = vmatmul.mubr.bf16.gmra.mxu0 %v1757
      %v4011 = vpop.f32.mrf.mxu0
      %v4012 = vadd.f32 0.0, %v4011
      %v4013 = vpop.f32.mrf.mxu0
      %v4014 = vpop.f32.mrf.mxu0
      %v4015 = vadd.f32 0.0, %v4014
      %v4016 = vpop.f32.mrf.mxu0
      %4017 = vmatprep.mubr.bf16.mxu0 0
      %4018 = vmatmul.mubr.bf16.gmra.mxu0 %v1760
      %v4019 = vpop.f32.mrf.mxu0
      %v4020 = vadd.f32 0.0, %v4019
      %v4021 = vpop.f32.mrf.mxu0
      %v4022 = vpop.f32.mrf.mxu0
      %v4023 = vadd.f32 0.0, %v4022
      %v4024 = vpop.f32.mrf.mxu0
      %4025 = vmatprep.mubr.bf16.mxu0 0
      %4026 = vmatmul.mubr.bf16.gmra.mxu0 %v1763
      %v4027 = vpop.f32.mrf.mxu0
      %v4028 = vadd.f32 0.0, %v4027
      %v4029 = vpop.f32.mrf.mxu0
      %v4030 = vpop.f32.mrf.mxu0
      %v4031 = vadd.f32 0.0, %v4030
      %v4032 = vpop.f32.mrf.mxu0
      %4033 = vmatprep.mubr.bf16.mxu0 0
      %4034 = vmatmul.mubr.bf16.gmra.mxu0 %v1766
      %v4035 = vpop.f32.mrf.mxu0
      %v4036 = vadd.f32 0.0, %v4035
      %v4037 = vpop.f32.mrf.mxu0
      %v4038 = vpop.f32.mrf.mxu0
      %v4039 = vadd.f32 0.0, %v4038
      %v4040 = vpop.f32.mrf.mxu0
      %4041 = vmatprep.mubr.bf16.mxu0 0
      %4042 = vmatmul.mubr.bf16.gmra.mxu0 %v1769
      %v4043 = vpop.f32.mrf.mxu0
      %v4044 = vadd.f32 0.0, %v4043
      %v4045 = vpop.f32.mrf.mxu0
      %v4046 = vpop.f32.mrf.mxu0
      %v4047 = vadd.f32 0.0, %v4046
      %v4048 = vpop.f32.mrf.mxu0
      %4049 = vmatprep.mubr.bf16.mxu0 0
      %4050 = vmatmul.mubr.bf16.gmra.mxu0 %v1772
      %v4051 = vpop.f32.mrf.mxu0
      %v4052 = vadd.f32 0.0, %v4051
      %v4053 = vpop.f32.mrf.mxu0
      %v4054 = vpop.f32.mrf.mxu0
      %v4055 = vadd.f32 0.0, %v4054
      %v4056 = vpop.f32.mrf.mxu0
      %4057 = vmatprep.mubr.bf16.mxu0 0
      %4058 = vmatmul.mubr.bf16.gmra.mxu0 %v1775
      %v4059 = vpop.f32.mrf.mxu0
      %v4060 = vadd.f32 0.0, %v4059
      %v4061 = vpop.f32.mrf.mxu0
      %v4062 = vpop.f32.mrf.mxu0
      %v4063 = vadd.f32 0.0, %v4062
      %v4064 = vpop.f32.mrf.mxu0
      %4065 = vmatprep.mubr.bf16.mxu0 0
      %4066 = vmatmul.mubr.bf16.gmra.mxu0 %v1778
      %v4067 = vpop.f32.mrf.mxu0
      %v4068 = vadd.f32 0.0, %v4067
      %v4069 = vpop.f32.mrf.mxu0
      %v4070 = vpop.f32.mrf.mxu0
      %v4071 = vadd.f32 0.0, %v4070
      %v4072 = vpop.f32.mrf.mxu0
      %4073 = vmatprep.mubr.bf16.mxu0 0
      %4074 = vmatmul.mubr.bf16.gmra.mxu0 %v1781
      %v4075 = vpop.f32.mrf.mxu0
      %v4076 = vadd.f32 0.0, %v4075
      %v4077 = vpop.f32.mrf.mxu0
      %v4078 = vpop.f32.mrf.mxu0
      %v4079 = vadd.f32 0.0, %v4078
      %v4080 = vpop.f32.mrf.mxu0
      %4081 = vmatprep.mubr.bf16.mxu0 0
      %4082 = vmatmul.mubr.bf16.gmra.mxu0 %v1784
      %v4083 = vpop.f32.mrf.mxu0
      %v4084 = vadd.f32 0.0, %v4083
      %v4085 = vpop.f32.mrf.mxu0
      %v4086 = vpop.f32.mrf.mxu0
      %v4087 = vadd.f32 0.0, %v4086
      %v4088 = vpop.f32.mrf.mxu0
      %4089 = vmatprep.mubr.bf16.mxu0 0
      %4090 = vmatmul.mubr.bf16.gmra.mxu0 %v1787
      %v4091 = vpop.f32.mrf.mxu0
      %v4092 = vadd.f32 0.0, %v4091
      %v4093 = vpop.f32.mrf.mxu0
      %v4094 = vpop.f32.mrf.mxu0
      %v4095 = vadd.f32 0.0, %v4094
      %v4096 = vpop.f32.mrf.mxu0
      %4097 = vmatprep.mubr.bf16.mxu0 0
      %4098 = vmatmul.mubr.bf16.gmra.mxu0 %v1790
      %v4099 = vpop.f32.mrf.mxu0
      %v4100 = vadd.f32 0.0, %v4099
      %v4101 = vpop.f32.mrf.mxu0
      %v4102 = vpop.f32.mrf.mxu0
      %v4103 = vadd.f32 0.0, %v4102
      %v4104 = vpop.f32.mrf.mxu0
      %4105 = vmatprep.mubr.bf16.mxu0 0
      %4106 = vmatmul.mubr.bf16.gmra.mxu0 %v1793
      %v4107 = vpop.f32.mrf.mxu0
      %v4108 = vadd.f32 0.0, %v4107
      %v4109 = vpop.f32.mrf.mxu0
      %v4110 = vpop.f32.mrf.mxu0
      %v4111 = vadd.f32 0.0, %v4110
      %v4112 = vpop.f32.mrf.mxu0
      %4113 = vmatprep.mubr.bf16.mxu0 0
      %4114 = vmatmul.mubr.bf16.gmra.mxu0 %v1796
      %v4115 = vpop.f32.mrf.mxu0
      %v4116 = vadd.f32 0.0, %v4115
      %v4117 = vpop.f32.mrf.mxu0
      %v4118 = vpop.f32.mrf.mxu0
      %v4119 = vadd.f32 0.0, %v4118
      %v4120 = vpop.f32.mrf.mxu0
      %4121 = vmatprep.mubr.bf16.mxu0 0
      %4122 = vmatmul.mubr.bf16.gmra.mxu0 %v1799
      %v4123 = vpop.f32.mrf.mxu0
      %v4124 = vadd.f32 0.0, %v4123
      %v4125 = vpop.f32.mrf.mxu0
      %v4126 = vpop.f32.mrf.mxu0
      %v4127 = vadd.f32 0.0, %v4126
      %v4128 = vpop.f32.mrf.mxu0
      %4129 = vmatprep.mubr.bf16.mxu0 0
      %4130 = vmatmul.mubr.bf16.gmra.mxu0 %v1802
      %v4131 = vpop.f32.mrf.mxu0
      %v4132 = vadd.f32 0.0, %v4131
      %v4133 = vpop.f32.mrf.mxu0
      %v4134 = vpop.f32.mrf.mxu0
      %v4135 = vadd.f32 0.0, %v4134
      %v4136 = vpop.f32.mrf.mxu0
      %4137 = vmatprep.mubr.bf16.mxu0 0
      %4138 = vmatmul.mubr.bf16.gmra.mxu0 %v1805
      %v4139 = vpop.f32.mrf.mxu0
      %v4140 = vadd.f32 0.0, %v4139
      %v4141 = vpop.f32.mrf.mxu0
      %v4142 = vpop.f32.mrf.mxu0
      %v4143 = vadd.f32 0.0, %v4142
      %v4144 = vpop.f32.mrf.mxu0
      %4145 = vmatprep.mubr.bf16.mxu0 0
      %4146 = vmatmul.mubr.bf16.gmra.mxu0 %v1808
      %v4147 = vpop.f32.mrf.mxu0
      %v4148 = vadd.f32 0.0, %v4147
      %v4149 = vpop.f32.mrf.mxu0
      %v4150 = vpop.f32.mrf.mxu0
      %v4151 = vadd.f32 0.0, %v4150
      %v4152 = vpop.f32.mrf.mxu0
      %4153 = vmatprep.mubr.bf16.mxu0 0
      %4154 = vmatmul.mubr.bf16.gmra.mxu0 %v1811
      %v4155 = vpop.f32.mrf.mxu0
      %v4156 = vadd.f32 0.0, %v4155
      %v4157 = vpop.f32.mrf.mxu0
      %v4158 = vpop.f32.mrf.mxu0
      %v4159 = vadd.f32 0.0, %v4158
      %v4160 = vpop.f32.mrf.mxu0
      %4161 = vmatprep.mubr.bf16.mxu0 0
      %4162 = vmatmul.mubr.bf16.gmra.mxu0 %v1814
      %v4163 = vpop.f32.mrf.mxu0
      %v4164 = vadd.f32 0.0, %v4163
      %v4165 = vpop.f32.mrf.mxu0
      %v4166 = vpop.f32.mrf.mxu0
      %v4167 = vadd.f32 0.0, %v4166
      %v4168 = vpop.f32.mrf.mxu0
      %4169 = vmatprep.mubr.bf16.mxu0 0
      %4170 = vmatmul.mubr.bf16.gmra.mxu0 %v1817
      %v4171 = vpop.f32.mrf.mxu0
      %v4172 = vadd.f32 0.0, %v4171
      %v4173 = vpop.f32.mrf.mxu0
      %v4174 = vpop.f32.mrf.mxu0
      %v4175 = vadd.f32 0.0, %v4174
      %v4176 = vpop.f32.mrf.mxu0
      %4177 = vmatprep.mubr.bf16.mxu0 0
      %4178 = vmatmul.mubr.bf16.gmra.mxu0 %v1820
      %v4179 = vpop.f32.mrf.mxu0
      %v4180 = vadd.f32 0.0, %v4179
      %v4181 = vpop.f32.mrf.mxu0
      %v4182 = vpop.f32.mrf.mxu0
      %v4183 = vadd.f32 0.0, %v4182
      %v4184 = vpop.f32.mrf.mxu0
      %4185 = vmatprep.mubr.bf16.mxu0 0
      %4186 = vmatmul.mubr.bf16.gmra.mxu0 %v1823
      %v4187 = vpop.f32.mrf.mxu0
      %v4188 = vadd.f32 0.0, %v4187
      %v4189 = vpop.f32.mrf.mxu0
      %v4190 = vpop.f32.mrf.mxu0
      %v4191 = vadd.f32 0.0, %v4190
      %v4192 = vpop.f32.mrf.mxu0
      %4193 = vmatprep.mubr.bf16.mxu0 0
      %4194 = vmatmul.mubr.bf16.gmra.mxu0 %v1826
      %v4195 = vpop.f32.mrf.mxu0
      %v4196 = vadd.f32 0.0, %v4195
      %v4197 = vpop.f32.mrf.mxu0
      %v4198 = vpop.f32.mrf.mxu0
      %v4199 = vadd.f32 0.0, %v4198
      %v4200 = vpop.f32.mrf.mxu0
      %4201 = vmatprep.mubr.bf16.mxu0 0
      %4202 = vmatmul.mubr.bf16.gmra.mxu0 %v1829
      %v4203 = vpop.f32.mrf.mxu0
      %v4204 = vadd.f32 0.0, %v4203
      %v4205 = vpop.f32.mrf.mxu0
      %v4206 = vpop.f32.mrf.mxu0
      %v4207 = vadd.f32 0.0, %v4206
      %v4208 = vpop.f32.mrf.mxu0
      %4209 = vdwg.mxu0
      %v4210 = vadd.f32 %v3662, %v3956
      %v4211 = vadd.f32 %v3665, %v3959
      %v4212 = vadd.f32 %v3670, %v3964
      %v4213 = vadd.f32 %v3673, %v3967
      %v4214 = vadd.f32 %v3678, %v3972
      %v4215 = vadd.f32 %v3681, %v3975
      %v4216 = vadd.f32 %v3686, %v3980
      %v4217 = vadd.f32 %v3689, %v3983
      %v4218 = vadd.f32 %v3694, %v3988
      %v4219 = vadd.f32 %v3697, %v3991
      %v4220 = vadd.f32 %v3702, %v3996
      %v4221 = vadd.f32 %v3705, %v3999
      %v4222 = vadd.f32 %v3710, %v4004
      %v4223 = vadd.f32 %v3713, %v4007
      %v4224 = vadd.f32 %v3718, %v4012
      %v4225 = vadd.f32 %v3721, %v4015
      %v4226 = vadd.f32 %v3726, %v4020
      %v4227 = vadd.f32 %v3729, %v4023
      %v4228 = vadd.f32 %v3734, %v4028
      %v4229 = vadd.f32 %v3737, %v4031
      %v4230 = vadd.f32 %v3742, %v4036
      %v4231 = vadd.f32 %v3745, %v4039
      %v4232 = vadd.f32 %v3750, %v4044
      %v4233 = vadd.f32 %v3753, %v4047
      %v4234 = vadd.f32 %v3758, %v4052
      %v4235 = vadd.f32 %v3761, %v4055
      %v4236 = vadd.f32 %v3766, %v4060
      %v4237 = vadd.f32 %v3769, %v4063
      %v4238 = vadd.f32 %v3774, %v4068
      %v4239 = vadd.f32 %v3777, %v4071
      %v4240 = vadd.f32 %v3782, %v4076
      %v4241 = vadd.f32 %v3785, %v4079
      %v4242 = vadd.f32 %v3790, %v4084
      %v4243 = vadd.f32 %v3793, %v4087
      %v4244 = vadd.f32 %v3798, %v4092
      %v4245 = vadd.f32 %v3801, %v4095
      %v4246 = vadd.f32 %v3806, %v4100
      %v4247 = vadd.f32 %v3809, %v4103
      %v4248 = vadd.f32 %v3814, %v4108
      %v4249 = vadd.f32 %v3817, %v4111
      %v4250 = vadd.f32 %v3822, %v4116
      %v4251 = vadd.f32 %v3825, %v4119
      %v4252 = vadd.f32 %v3830, %v4124
      %v4253 = vadd.f32 %v3833, %v4127
      %v4254 = vadd.f32 %v3838, %v4132
      %v4255 = vadd.f32 %v3841, %v4135
      %v4256 = vadd.f32 %v3846, %v4140
      %v4257 = vadd.f32 %v3849, %v4143
      %v4258 = vadd.f32 %v3854, %v4148
      %v4259 = vadd.f32 %v3857, %v4151
      %v4260 = vadd.f32 %v3862, %v4156
      %v4261 = vadd.f32 %v3865, %v4159
      %v4262 = vadd.f32 %v3870, %v4164
      %v4263 = vadd.f32 %v3873, %v4167
      %v4264 = vadd.f32 %v3878, %v4172
      %v4265 = vadd.f32 %v3881, %v4175
      %v4266 = vadd.f32 %v3886, %v4180
      %v4267 = vadd.f32 %v3889, %v4183
      %v4268 = vadd.f32 %v3894, %v4188
      %v4269 = vadd.f32 %v3897, %v4191
      %v4270 = vadd.f32 %v3902, %v4196
      %v4271 = vadd.f32 %v3905, %v4199
      %v4272 = vadd.f32 %v3910, %v4204
      %v4273 = vadd.f32 %v3913, %v4207
      %v4274 = vrot.slane %v4210, 2
      %v4275 = vrot.slane %v4211, 2
      %v4276 = vrot.slane %v4212, 2
      %v4277 = vrot.slane %v4213, 2
      %v4278 = vrot.slane %v4214, 2
      %v4279 = vrot.slane %v4215, 2
      %v4280 = vrot.slane %v4216, 2
      %v4281 = vrot.slane %v4217, 2
      %v4282 = vrot.slane %v4218, 2
      %v4283 = vrot.slane %v4219, 2
      %v4284 = vrot.slane %v4220, 2
      %v4285 = vrot.slane %v4221, 2
      %v4286 = vrot.slane %v4222, 2
      %v4287 = vrot.slane %v4223, 2
      %v4288 = vrot.slane %v4224, 2
      %v4289 = vrot.slane %v4225, 2
      %v4290 = vrot.slane %v4226, 2
      %v4291 = vrot.slane %v4227, 2
      %v4292 = vrot.slane %v4228, 2
      %v4293 = vrot.slane %v4229, 2
      %v4294 = vrot.slane %v4230, 2
      %v4295 = vrot.slane %v4231, 2
      %v4296 = vrot.slane %v4232, 2
      %v4297 = vrot.slane %v4233, 2
      %v4298 = vrot.slane %v4234, 2
      %v4299 = vrot.slane %v4235, 2
      %v4300 = vrot.slane %v4236, 2
      %v4301 = vrot.slane %v4237, 2
      %v4302 = vrot.slane %v4238, 2
      %v4303 = vrot.slane %v4239, 2
      %v4304 = vrot.slane %v4240, 2
      %v4305 = vrot.slane %v4241, 2
      %v4306 = vrot.slane %v4242, 2
      %v4307 = vrot.slane %v4243, 2
      %v4308 = vrot.slane %v4244, 2
      %v4309 = vrot.slane %v4245, 2
      %v4310 = vrot.slane %v4246, 2
      %v4311 = vrot.slane %v4247, 2
      %v4312 = vrot.slane %v4248, 2
      %v4313 = vrot.slane %v4249, 2
      %v4314 = vrot.slane %v4250, 2
      %v4315 = vrot.slane %v4251, 2
      %v4316 = vrot.slane %v4252, 2
      %v4317 = vrot.slane %v4253, 2
      %v4318 = vrot.slane %v4254, 2
      %v4319 = vrot.slane %v4255, 2
      %v4320 = vrot.slane %v4256, 2
      %v4321 = vrot.slane %v4257, 2
      %v4322 = vrot.slane %v4258, 2
      %v4323 = vrot.slane %v4259, 2
      %v4324 = vrot.slane %v4260, 2
      %v4325 = vrot.slane %v4261, 2
      %v4326 = vrot.slane %v4262, 2
      %v4327 = vrot.slane %v4263, 2
      %v4328 = vrot.slane %v4264, 2
      %v4329 = vrot.slane %v4265, 2
      %v4330 = vrot.slane %v4266, 2
      %v4331 = vrot.slane %v4267, 2
      %v4332 = vrot.slane %v4268, 2
      %v4333 = vrot.slane %v4269, 2
      %v4334 = vrot.slane %v4270, 2
      %v4335 = vrot.slane %v4271, 2
      %v4336 = vrot.slane %v4272, 2
      %v4337 = vrot.slane %v4273, 2
      %vm4338 = vcmp.lt.s32.totalorder %v3198, 6
      %v4339 = vsel %vm4338, %v4336, %v4337
      %v4340 = vsel %vm4338, %v4335, %v4336
      %v4341 = vsel %vm4338, %v4334, %v4335
      %v4342 = vsel %vm4338, %v4333, %v4334
      %v4343 = vsel %vm4338, %v4332, %v4333
      %v4344 = vsel %vm4338, %v4331, %v4332
      %v4345 = vsel %vm4338, %v4330, %v4331
      %v4346 = vsel %vm4338, %v4329, %v4330
      %v4347 = vsel %vm4338, %v4328, %v4329
      %v4348 = vsel %vm4338, %v4327, %v4328
      %v4349 = vsel %vm4338, %v4326, %v4327
      %v4350 = vsel %vm4338, %v4325, %v4326
      %v4351 = vsel %vm4338, %v4324, %v4325
      %v4352 = vsel %vm4338, %v4323, %v4324
      %v4353 = vsel %vm4338, %v4322, %v4323
      %v4354 = vsel %vm4338, %v4321, %v4322
      %v4355 = vsel %vm4338, %v4320, %v4321
      %v4356 = vsel %vm4338, %v4319, %v4320
      %v4357 = vsel %vm4338, %v4318, %v4319
      %v4358 = vsel %vm4338, %v4317, %v4318
      %v4359 = vsel %vm4338, %v4316, %v4317
      %v4360 = vsel %vm4338, %v4315, %v4316
      %v4361 = vsel %vm4338, %v4314, %v4315
      %v4362 = vsel %vm4338, %v4313, %v4314
      %v4363 = vsel %vm4338, %v4312, %v4313
      %v4364 = vsel %vm4338, %v4311, %v4312
      %v4365 = vsel %vm4338, %v4310, %v4311
      %v4366 = vsel %vm4338, %v4309, %v4310
      %v4367 = vsel %vm4338, %v4308, %v4309
      %v4368 = vsel %vm4338, %v4307, %v4308
      %v4369 = vsel %vm4338, %v4306, %v4307
      %v4370 = vsel %vm4338, %v4305, %v4306
      %v4371 = vsel %vm4338, %v4304, %v4305
      %v4372 = vsel %vm4338, %v4303, %v4304
      %v4373 = vsel %vm4338, %v4302, %v4303
      %v4374 = vsel %vm4338, %v4301, %v4302
      %v4375 = vsel %vm4338, %v4300, %v4301
      %v4376 = vsel %vm4338, %v4299, %v4300
      %v4377 = vsel %vm4338, %v4298, %v4299
      %v4378 = vsel %vm4338, %v4297, %v4298
      %v4379 = vsel %vm4338, %v4296, %v4297
      %v4380 = vsel %vm4338, %v4295, %v4296
      %v4381 = vsel %vm4338, %v4294, %v4295
      %v4382 = vsel %vm4338, %v4293, %v4294
      %v4383 = vsel %vm4338, %v4292, %v4293
      %v4384 = vsel %vm4338, %v4291, %v4292
      %v4385 = vsel %vm4338, %v4290, %v4291
      %v4386 = vsel %vm4338, %v4289, %v4290
      %v4387 = vsel %vm4338, %v4288, %v4289
      %v4388 = vsel %vm4338, %v4287, %v4288
      %v4389 = vsel %vm4338, %v4286, %v4287
      %v4390 = vsel %vm4338, %v4285, %v4286
      %v4391 = vsel %vm4338, %v4284, %v4285
      %v4392 = vsel %vm4338, %v4283, %v4284
      %v4393 = vsel %vm4338, %v4282, %v4283
      %v4394 = vsel %vm4338, %v4281, %v4282
      %v4395 = vsel %vm4338, %v4280, %v4281
      %v4396 = vsel %vm4338, %v4279, %v4280
      %v4397 = vsel %vm4338, %v4278, %v4279
      %v4398 = vsel %vm4338, %v4277, %v4278
      %v4399 = vsel %vm4338, %v4276, %v4277
      %v4400 = vsel %vm4338, %v4275, %v4276
      %v4401 = vsel %vm4338, %v4274, %v4275
      %v4402 = vsel %vm4338, %v4337, %v4274
      %v4403 = vadd.f32 %v3264, %v4401
      %v4404 = vadd.f32 %v3265, %v4400
      %v4405 = vadd.f32 %v3266, %v4399
      %v4406 = vadd.f32 %v3267, %v4398
      %v4407 = vadd.f32 %v3268, %v4397
      %v4408 = vadd.f32 %v3269, %v4396
      %v4409 = vadd.f32 %v3270, %v4395
      %v4410 = vadd.f32 %v3271, %v4394
      %v4411 = vadd.f32 %v3272, %v4393
      %v4412 = vadd.f32 %v3273, %v4392
      %v4413 = vadd.f32 %v3274, %v4391
      %v4414 = vadd.f32 %v3275, %v4390
      %v4415 = vadd.f32 %v3276, %v4389
      %v4416 = vadd.f32 %v3277, %v4388
      %v4417 = vadd.f32 %v3278, %v4387
      %v4418 = vadd.f32 %v3279, %v4386
      %v4419 = vadd.f32 %v3280, %v4385
      %v4420 = vadd.f32 %v3281, %v4384
      %v4421 = vadd.f32 %v3282, %v4383
      %v4422 = vadd.f32 %v3283, %v4382
      %v4423 = vadd.f32 %v3284, %v4381
      %v4424 = vadd.f32 %v3285, %v4380
      %v4425 = vadd.f32 %v3286, %v4379
      %v4426 = vadd.f32 %v3287, %v4378
      %v4427 = vadd.f32 %v3288, %v4377
      %v4428 = vadd.f32 %v3289, %v4376
      %v4429 = vadd.f32 %v3290, %v4375
      %v4430 = vadd.f32 %v3291, %v4374
      %v4431 = vadd.f32 %v3292, %v4373
      %v4432 = vadd.f32 %v3293, %v4372
      %v4433 = vadd.f32 %v3294, %v4371
      %v4434 = vadd.f32 %v3295, %v4370
      %v4435 = vadd.f32 %v3296, %v4369
      %v4436 = vadd.f32 %v3297, %v4368
      %v4437 = vadd.f32 %v3298, %v4367
      %v4438 = vadd.f32 %v3299, %v4366
      %v4439 = vadd.f32 %v3300, %v4365
      %v4440 = vadd.f32 %v3301, %v4364
      %v4441 = vadd.f32 %v3302, %v4363
      %v4442 = vadd.f32 %v3303, %v4362
      %v4443 = vadd.f32 %v3304, %v4361
      %v4444 = vadd.f32 %v3305, %v4360
      %v4445 = vadd.f32 %v3306, %v4359
      %v4446 = vadd.f32 %v3307, %v4358
      %v4447 = vadd.f32 %v3308, %v4357
      %v4448 = vadd.f32 %v3309, %v4356
      %v4449 = vadd.f32 %v3310, %v4355
      %v4450 = vadd.f32 %v3311, %v4354
      %v4451 = vadd.f32 %v3312, %v4353
      %v4452 = vadd.f32 %v3313, %v4352
      %v4453 = vadd.f32 %v3314, %v4351
      %v4454 = vadd.f32 %v3315, %v4350
      %v4455 = vadd.f32 %v3316, %v4349
      %v4456 = vadd.f32 %v3317, %v4348
      %v4457 = vadd.f32 %v3318, %v4347
      %v4458 = vadd.f32 %v3319, %v4346
      %v4459 = vadd.f32 %v3320, %v4345
      %v4460 = vadd.f32 %v3321, %v4344
      %v4461 = vadd.f32 %v3322, %v4343
      %v4462 = vadd.f32 %v3323, %v4342
      %v4463 = vadd.f32 %v3324, %v4341
      %v4464 = vadd.f32 %v3325, %v4340
      %v4465 = vadd.f32 %v3326, %v4339
      %v4466 = vadd.f32 %v3327, %v4402
      %v4467 = vadd.s32 %v3198, 8
      %v4468 = vadd.s32 %v3198, 16
      %v4469 = vadd.s32 %v3198, 24
      %vm4470 = vcmp.lt.s32.totalorder %v3198, 16
      %vm4471 = vcmp.lt.s32.totalorder %v4467, 16
      %vm4472 = vcmp.lt.s32.totalorder %v4468, 16
      %vm4473 = vcmp.lt.s32.totalorder %v4469, 16
      %v4474 = vsel %vm4470, %v4403, 0.0
      %v4475 = vsel %vm4471, %v4404, 0.0
      %v4476 = vsel %vm4472, %v4405, 0.0
      %v4477 = vsel %vm4473, %v4406, 0.0
      %v4478 = vsel %vm4470, %v4407, 0.0
      %v4479 = vsel %vm4471, %v4408, 0.0
      %v4480 = vsel %vm4472, %v4409, 0.0
      %v4481 = vsel %vm4473, %v4410, 0.0
      %v4482 = vsel %vm4470, %v4411, 0.0
      %v4483 = vsel %vm4471, %v4412, 0.0
      %v4484 = vsel %vm4472, %v4413, 0.0
      %v4485 = vsel %vm4473, %v4414, 0.0
      %v4486 = vsel %vm4470, %v4415, 0.0
      %v4487 = vsel %vm4471, %v4416, 0.0
      %v4488 = vsel %vm4472, %v4417, 0.0
      %v4489 = vsel %vm4473, %v4418, 0.0
      %v4490 = vsel %vm4470, %v4419, 0.0
      %v4491 = vsel %vm4471, %v4420, 0.0
      %v4492 = vsel %vm4472, %v4421, 0.0
      %v4493 = vsel %vm4473, %v4422, 0.0
      %v4494 = vsel %vm4470, %v4423, 0.0
      %v4495 = vsel %vm4471, %v4424, 0.0
      %v4496 = vsel %vm4472, %v4425, 0.0
      %v4497 = vsel %vm4473, %v4426, 0.0
      %v4498 = vsel %vm4470, %v4427, 0.0
      %v4499 = vsel %vm4471, %v4428, 0.0
      %v4500 = vsel %vm4472, %v4429, 0.0
      %v4501 = vsel %vm4473, %v4430, 0.0
      %v4502 = vsel %vm4470, %v4431, 0.0
      %v4503 = vsel %vm4471, %v4432, 0.0
      %v4504 = vsel %vm4472, %v4433, 0.0
      %v4505 = vsel %vm4473, %v4434, 0.0
      %v4506 = vsel %vm4470, %v4435, 0.0
      %v4507 = vsel %vm4471, %v4436, 0.0
      %v4508 = vsel %vm4472, %v4437, 0.0
      %v4509 = vsel %vm4473, %v4438, 0.0
      %v4510 = vsel %vm4470, %v4439, 0.0
      %v4511 = vsel %vm4471, %v4440, 0.0
      %v4512 = vsel %vm4472, %v4441, 0.0
      %v4513 = vsel %vm4473, %v4442, 0.0
      %v4514 = vsel %vm4470, %v4443, 0.0
      %v4515 = vsel %vm4471, %v4444, 0.0
      %v4516 = vsel %vm4472, %v4445, 0.0
      %v4517 = vsel %vm4473, %v4446, 0.0
      %v4518 = vsel %vm4470, %v4447, 0.0
      %v4519 = vsel %vm4471, %v4448, 0.0
      %v4520 = vsel %vm4472, %v4449, 0.0
      %v4521 = vsel %vm4473, %v4450, 0.0
      %v4522 = vsel %vm4470, %v4451, 0.0
      %v4523 = vsel %vm4471, %v4452, 0.0
      %v4524 = vsel %vm4472, %v4453, 0.0
      %v4525 = vsel %vm4473, %v4454, 0.0
      %v4526 = vsel %vm4470, %v4455, 0.0
      %v4527 = vsel %vm4471, %v4456, 0.0
      %v4528 = vsel %vm4472, %v4457, 0.0
      %v4529 = vsel %vm4473, %v4458, 0.0
      %v4530 = vsel %vm4470, %v4459, 0.0
      %v4531 = vsel %vm4471, %v4460, 0.0
      %v4532 = vsel %vm4472, %v4461, 0.0
      %v4533 = vsel %vm4473, %v4462, 0.0
      %v4534 = vsel %vm4470, %v4463, 0.0
      %v4535 = vsel %vm4471, %v4464, 0.0
      %v4536 = vsel %vm4472, %v4465, 0.0
      %v4537 = vsel %vm4473, %v4466, 0.0
      %v4538 = vsel %vm635, %v4474, 0.0
      %v4539 = vsel %vm635, %v4475, 0.0
      %v4540 = vadd.f32 %v4538, %v4539
      %v4541 = vsel %vm635, %v4476, 0.0
      %v4542 = vadd.f32 %v4540, %v4541
      %v4543 = vsel %vm635, %v4477, 0.0
      %v4544 = vadd.f32 %v4542, %v4543
      %v4545 = vsel %vm635, %v4478, 0.0
      %v4546 = vadd.f32 %v4544, %v4545
      %v4547 = vsel %vm635, %v4479, 0.0
      %v4548 = vadd.f32 %v4546, %v4547
      %v4549 = vsel %vm635, %v4480, 0.0
      %v4550 = vadd.f32 %v4548, %v4549
      %v4551 = vsel %vm635, %v4481, 0.0
      %v4552 = vadd.f32 %v4550, %v4551
      %v4553 = vsel %vm635, %v4482, 0.0
      %v4554 = vadd.f32 %v4552, %v4553
      %v4555 = vsel %vm635, %v4483, 0.0
      %v4556 = vadd.f32 %v4554, %v4555
      %v4557 = vsel %vm635, %v4484, 0.0
      %v4558 = vadd.f32 %v4556, %v4557
      %v4559 = vsel %vm635, %v4485, 0.0
      %v4560 = vadd.f32 %v4558, %v4559
      %v4561 = vsel %vm635, %v4486, 0.0
      %v4562 = vadd.f32 %v4560, %v4561
      %v4563 = vsel %vm635, %v4487, 0.0
      %v4564 = vadd.f32 %v4562, %v4563
      %v4565 = vsel %vm635, %v4488, 0.0
      %v4566 = vadd.f32 %v4564, %v4565
      %v4567 = vsel %vm635, %v4489, 0.0
      %v4568 = vadd.f32 %v4566, %v4567
      %v4569 = vsel %vm635, %v4490, 0.0
      %v4570 = vadd.f32 %v4568, %v4569
      %v4571 = vsel %vm635, %v4491, 0.0
      %v4572 = vadd.f32 %v4570, %v4571
      %v4573 = vsel %vm635, %v4492, 0.0
      %v4574 = vadd.f32 %v4572, %v4573
      %v4575 = vsel %vm635, %v4493, 0.0
      %v4576 = vadd.f32 %v4574, %v4575
      %v4577 = vsel %vm635, %v4494, 0.0
      %v4578 = vadd.f32 %v4576, %v4577
      %v4579 = vsel %vm635, %v4495, 0.0
      %v4580 = vadd.f32 %v4578, %v4579
      %v4581 = vsel %vm635, %v4496, 0.0
      %v4582 = vadd.f32 %v4580, %v4581
      %v4583 = vsel %vm635, %v4497, 0.0
      %v4584 = vadd.f32 %v4582, %v4583
      %v4585 = vsel %vm635, %v4498, 0.0
      %v4586 = vadd.f32 %v4584, %v4585
      %v4587 = vsel %vm635, %v4499, 0.0
      %v4588 = vadd.f32 %v4586, %v4587
      %v4589 = vsel %vm635, %v4500, 0.0
      %v4590 = vadd.f32 %v4588, %v4589
      %v4591 = vsel %vm635, %v4501, 0.0
      %v4592 = vadd.f32 %v4590, %v4591
      %v4593 = vsel %vm635, %v4502, 0.0
      %v4594 = vadd.f32 %v4592, %v4593
      %v4595 = vsel %vm635, %v4503, 0.0
      %v4596 = vadd.f32 %v4594, %v4595
      %v4597 = vsel %vm635, %v4504, 0.0
      %v4598 = vadd.f32 %v4596, %v4597
      %v4599 = vsel %vm635, %v4505, 0.0
      %v4600 = vadd.f32 %v4598, %v4599
      %v4601 = vsel %vm635, %v4506, 0.0
      %v4602 = vadd.f32 %v4600, %v4601
      %v4603 = vsel %vm635, %v4507, 0.0
      %v4604 = vadd.f32 %v4602, %v4603
      %v4605 = vsel %vm635, %v4508, 0.0
      %v4606 = vadd.f32 %v4604, %v4605
      %v4607 = vsel %vm635, %v4509, 0.0
      %v4608 = vadd.f32 %v4606, %v4607
      %v4609 = vsel %vm635, %v4510, 0.0
      %v4610 = vadd.f32 %v4608, %v4609
      %v4611 = vsel %vm635, %v4511, 0.0
      %v4612 = vadd.f32 %v4610, %v4611
      %v4613 = vsel %vm635, %v4512, 0.0
      %v4614 = vadd.f32 %v4612, %v4613
      %v4615 = vsel %vm635, %v4513, 0.0
      %v4616 = vadd.f32 %v4614, %v4615
      %v4617 = vsel %vm635, %v4514, 0.0
      %v4618 = vadd.f32 %v4616, %v4617
      %v4619 = vsel %vm635, %v4515, 0.0
      %v4620 = vadd.f32 %v4618, %v4619
      %v4621 = vsel %vm635, %v4516, 0.0
      %v4622 = vadd.f32 %v4620, %v4621
      %v4623 = vsel %vm635, %v4517, 0.0
      %v4624 = vadd.f32 %v4622, %v4623
      %v4625 = vsel %vm635, %v4518, 0.0
      %v4626 = vadd.f32 %v4624, %v4625
      %v4627 = vsel %vm635, %v4519, 0.0
      %v4628 = vadd.f32 %v4626, %v4627
      %v4629 = vsel %vm635, %v4520, 0.0
      %v4630 = vadd.f32 %v4628, %v4629
      %v4631 = vsel %vm635, %v4521, 0.0
      %v4632 = vadd.f32 %v4630, %v4631
      %v4633 = vsel %vm635, %v4522, 0.0
      %v4634 = vadd.f32 %v4632, %v4633
      %v4635 = vsel %vm635, %v4523, 0.0
      %v4636 = vadd.f32 %v4634, %v4635
      %v4637 = vsel %vm635, %v4524, 0.0
      %v4638 = vadd.f32 %v4636, %v4637
      %v4639 = vsel %vm635, %v4525, 0.0
      %v4640 = vadd.f32 %v4638, %v4639
      %v4641 = vsel %vm635, %v4526, 0.0
      %v4642 = vadd.f32 %v4640, %v4641
      %v4643 = vsel %vm635, %v4527, 0.0
      %v4644 = vadd.f32 %v4642, %v4643
      %v4645 = vsel %vm635, %v4528, 0.0
      %v4646 = vadd.f32 %v4644, %v4645
      %v4647 = vsel %vm635, %v4529, 0.0
      %v4648 = vadd.f32 %v4646, %v4647
      %v4649 = vsel %vm635, %v4530, 0.0
      %v4650 = vadd.f32 %v4648, %v4649
      %v4651 = vsel %vm635, %v4531, 0.0
      %v4652 = vadd.f32 %v4650, %v4651
      %v4653 = vsel %vm635, %v4532, 0.0
      %v4654 = vadd.f32 %v4652, %v4653
      %v4655 = vsel %vm635, %v4533, 0.0
      %v4656 = vadd.f32 %v4654, %v4655
      %v4657 = vsel %vm635, %v4534, 0.0
      %v4658 = vadd.f32 %v4656, %v4657
      %v4659 = vsel %vm635, %v4535, 0.0
      %v4660 = vadd.f32 %v4658, %v4659
      %v4661 = vsel %vm635, %v4536, 0.0
      %v4662 = vadd.f32 %v4660, %v4661
      %v4663 = vsel %vm635, %v4537, 0.0
      %v4664 = vadd.f32 %v4662, %v4663
      %v4665 = vrot.slane %v4664, 4
      %v4666 = vadd.f32 %v4664, %v4665
      %v4667 = vrot.slane %v4666, 2
      %v4668 = vadd.f32 %v4666, %v4667
      %v4669 = vrot.slane %v4668, 1
      %v4670 = vadd.f32 %v4668, %v4669
      %vm4671 = vcmask 24576
      %4672 = vst.msk [vmem:[%s276] sm:$0x1] %vm4671, %v4670
      %v4673 = vmul.f32 %v4474, %v4474
      %v4674 = vmul.f32 %v4475, %v4475
      %v4675 = vmul.f32 %v4476, %v4476
      %v4676 = vmul.f32 %v4477, %v4477
      %v4677 = vmul.f32 %v4478, %v4478
      %v4678 = vmul.f32 %v4479, %v4479
      %v4679 = vmul.f32 %v4480, %v4480
      %v4680 = vmul.f32 %v4481, %v4481
      %v4681 = vmul.f32 %v4482, %v4482
      %v4682 = vmul.f32 %v4483, %v4483
      %v4683 = vmul.f32 %v4484, %v4484
      %v4684 = vmul.f32 %v4485, %v4485
      %v4685 = vmul.f32 %v4486, %v4486
      %v4686 = vmul.f32 %v4487, %v4487
      %v4687 = vmul.f32 %v4488, %v4488
      %v4688 = vmul.f32 %v4489, %v4489
      %v4689 = vmul.f32 %v4490, %v4490
      %v4690 = vmul.f32 %v4491, %v4491
      %v4691 = vmul.f32 %v4492, %v4492
      %v4692 = vmul.f32 %v4493, %v4493
      %v4693 = vmul.f32 %v4494, %v4494
      %v4694 = vmul.f32 %v4495, %v4495
      %v4695 = vmul.f32 %v4496, %v4496
      %v4696 = vmul.f32 %v4497, %v4497
      %v4697 = vmul.f32 %v4498, %v4498
      %v4698 = vmul.f32 %v4499, %v4499
      %v4699 = vmul.f32 %v4500, %v4500
      %v4700 = vmul.f32 %v4501, %v4501
      %v4701 = vmul.f32 %v4502, %v4502
      %v4702 = vmul.f32 %v4503, %v4503
      %v4703 = vmul.f32 %v4504, %v4504
      %v4704 = vmul.f32 %v4505, %v4505
      %v4705 = vmul.f32 %v4506, %v4506
      %v4706 = vmul.f32 %v4507, %v4507
      %v4707 = vmul.f32 %v4508, %v4508
      %v4708 = vmul.f32 %v4509, %v4509
      %v4709 = vmul.f32 %v4510, %v4510
      %v4710 = vmul.f32 %v4511, %v4511
      %v4711 = vmul.f32 %v4512, %v4512
      %v4712 = vmul.f32 %v4513, %v4513
      %v4713 = vmul.f32 %v4514, %v4514
      %v4714 = vmul.f32 %v4515, %v4515
      %v4715 = vmul.f32 %v4516, %v4516
      %v4716 = vmul.f32 %v4517, %v4517
      %v4717 = vmul.f32 %v4518, %v4518
      %v4718 = vmul.f32 %v4519, %v4519
      %v4719 = vmul.f32 %v4520, %v4520
      %v4720 = vmul.f32 %v4521, %v4521
      %v4721 = vmul.f32 %v4522, %v4522
      %v4722 = vmul.f32 %v4523, %v4523
      %v4723 = vmul.f32 %v4524, %v4524
      %v4724 = vmul.f32 %v4525, %v4525
      %v4725 = vmul.f32 %v4526, %v4526
      %v4726 = vmul.f32 %v4527, %v4527
      %v4727 = vmul.f32 %v4528, %v4528
      %v4728 = vmul.f32 %v4529, %v4529
      %v4729 = vmul.f32 %v4530, %v4530
      %v4730 = vmul.f32 %v4531, %v4531
      %v4731 = vmul.f32 %v4532, %v4532
      %v4732 = vmul.f32 %v4533, %v4533
      %v4733 = vmul.f32 %v4534, %v4534
      %v4734 = vmul.f32 %v4535, %v4535
      %v4735 = vmul.f32 %v4536, %v4536
      %v4736 = vmul.f32 %v4537, %v4537
      %v4737 = vsel %vm635, %v4673, 0.0
      %v4738 = vsel %vm635, %v4674, 0.0
      %v4739 = vadd.f32 %v4737, %v4738
      %v4740 = vsel %vm635, %v4675, 0.0
      %v4741 = vadd.f32 %v4739, %v4740
      %v4742 = vsel %vm635, %v4676, 0.0
      %v4743 = vadd.f32 %v4741, %v4742
      %v4744 = vsel %vm635, %v4677, 0.0
      %v4745 = vadd.f32 %v4743, %v4744
      %v4746 = vsel %vm635, %v4678, 0.0
      %v4747 = vadd.f32 %v4745, %v4746
      %v4748 = vsel %vm635, %v4679, 0.0
      %v4749 = vadd.f32 %v4747, %v4748
      %v4750 = vsel %vm635, %v4680, 0.0
      %v4751 = vadd.f32 %v4749, %v4750
      %v4752 = vsel %vm635, %v4681, 0.0
      %v4753 = vadd.f32 %v4751, %v4752
      %v4754 = vsel %vm635, %v4682, 0.0
      %v4755 = vadd.f32 %v4753, %v4754
      %v4756 = vsel %vm635, %v4683, 0.0
      %v4757 = vadd.f32 %v4755, %v4756
      %v4758 = vsel %vm635, %v4684, 0.0
      %v4759 = vadd.f32 %v4757, %v4758
      %v4760 = vsel %vm635, %v4685, 0.0
      %v4761 = vadd.f32 %v4759, %v4760
      %v4762 = vsel %vm635, %v4686, 0.0
      %v4763 = vadd.f32 %v4761, %v4762
      %v4764 = vsel %vm635, %v4687, 0.0
      %v4765 = vadd.f32 %v4763, %v4764
      %v4766 = vsel %vm635, %v4688, 0.0
      %v4767 = vadd.f32 %v4765, %v4766
      %v4768 = vsel %vm635, %v4689, 0.0
      %v4769 = vadd.f32 %v4767, %v4768
      %v4770 = vsel %vm635, %v4690, 0.0
      %v4771 = vadd.f32 %v4769, %v4770
      %v4772 = vsel %vm635, %v4691, 0.0
      %v4773 = vadd.f32 %v4771, %v4772
      %v4774 = vsel %vm635, %v4692, 0.0
      %v4775 = vadd.f32 %v4773, %v4774
      %v4776 = vsel %vm635, %v4693, 0.0
      %v4777 = vadd.f32 %v4775, %v4776
      %v4778 = vsel %vm635, %v4694, 0.0
      %v4779 = vadd.f32 %v4777, %v4778
      %v4780 = vsel %vm635, %v4695, 0.0
      %v4781 = vadd.f32 %v4779, %v4780
      %v4782 = vsel %vm635, %v4696, 0.0
      %v4783 = vadd.f32 %v4781, %v4782
      %v4784 = vsel %vm635, %v4697, 0.0
      %v4785 = vadd.f32 %v4783, %v4784
      %v4786 = vsel %vm635, %v4698, 0.0
      %v4787 = vadd.f32 %v4785, %v4786
      %v4788 = vsel %vm635, %v4699, 0.0
      %v4789 = vadd.f32 %v4787, %v4788
      %v4790 = vsel %vm635, %v4700, 0.0
      %v4791 = vadd.f32 %v4789, %v4790
      %v4792 = vsel %vm635, %v4701, 0.0
      %v4793 = vadd.f32 %v4791, %v4792
      %v4794 = vsel %vm635, %v4702, 0.0
      %v4795 = vadd.f32 %v4793, %v4794
      %v4796 = vsel %vm635, %v4703, 0.0
      %v4797 = vadd.f32 %v4795, %v4796
      %v4798 = vsel %vm635, %v4704, 0.0
      %v4799 = vadd.f32 %v4797, %v4798
      %v4800 = vsel %vm635, %v4705, 0.0
      %v4801 = vadd.f32 %v4799, %v4800
      %v4802 = vsel %vm635, %v4706, 0.0
      %v4803 = vadd.f32 %v4801, %v4802
      %v4804 = vsel %vm635, %v4707, 0.0
      %v4805 = vadd.f32 %v4803, %v4804
      %v4806 = vsel %vm635, %v4708, 0.0
      %v4807 = vadd.f32 %v4805, %v4806
      %v4808 = vsel %vm635, %v4709, 0.0
      %v4809 = vadd.f32 %v4807, %v4808
      %v4810 = vsel %vm635, %v4710, 0.0
      %v4811 = vadd.f32 %v4809, %v4810
      %v4812 = vsel %vm635, %v4711, 0.0
      %v4813 = vadd.f32 %v4811, %v4812
      %v4814 = vsel %vm635, %v4712, 0.0
      %v4815 = vadd.f32 %v4813, %v4814
      %v4816 = vsel %vm635, %v4713, 0.0
      %v4817 = vadd.f32 %v4815, %v4816
      %v4818 = vsel %vm635, %v4714, 0.0
      %v4819 = vadd.f32 %v4817, %v4818
      %v4820 = vsel %vm635, %v4715, 0.0
      %v4821 = vadd.f32 %v4819, %v4820
      %v4822 = vsel %vm635, %v4716, 0.0
      %v4823 = vadd.f32 %v4821, %v4822
      %v4824 = vsel %vm635, %v4717, 0.0
      %v4825 = vadd.f32 %v4823, %v4824
      %v4826 = vsel %vm635, %v4718, 0.0
      %v4827 = vadd.f32 %v4825, %v4826
      %v4828 = vsel %vm635, %v4719, 0.0
      %v4829 = vadd.f32 %v4827, %v4828
      %v4830 = vsel %vm635, %v4720, 0.0
      %v4831 = vadd.f32 %v4829, %v4830
      %v4832 = vsel %vm635, %v4721, 0.0
      %v4833 = vadd.f32 %v4831, %v4832
      %v4834 = vsel %vm635, %v4722, 0.0
      %v4835 = vadd.f32 %v4833, %v4834
      %v4836 = vsel %vm635, %v4723, 0.0
      %v4837 = vadd.f32 %v4835, %v4836
      %v4838 = vsel %vm635, %v4724, 0.0
      %v4839 = vadd.f32 %v4837, %v4838
      %v4840 = vsel %vm635, %v4725, 0.0
      %v4841 = vadd.f32 %v4839, %v4840
      %v4842 = vsel %vm635, %v4726, 0.0
      %v4843 = vadd.f32 %v4841, %v4842
      %v4844 = vsel %vm635, %v4727, 0.0
      %v4845 = vadd.f32 %v4843, %v4844
      %v4846 = vsel %vm635, %v4728, 0.0
      %v4847 = vadd.f32 %v4845, %v4846
      %v4848 = vsel %vm635, %v4729, 0.0
      %v4849 = vadd.f32 %v4847, %v4848
      %v4850 = vsel %vm635, %v4730, 0.0
      %v4851 = vadd.f32 %v4849, %v4850
      %v4852 = vsel %vm635, %v4731, 0.0
      %v4853 = vadd.f32 %v4851, %v4852
      %v4854 = vsel %vm635, %v4732, 0.0
      %v4855 = vadd.f32 %v4853, %v4854
      %v4856 = vsel %vm635, %v4733, 0.0
      %v4857 = vadd.f32 %v4855, %v4856
      %v4858 = vsel %vm635, %v4734, 0.0
      %v4859 = vadd.f32 %v4857, %v4858
      %v4860 = vsel %vm635, %v4735, 0.0
      %v4861 = vadd.f32 %v4859, %v4860
      %v4862 = vsel %vm635, %v4736, 0.0
      %v4863 = vadd.f32 %v4861, %v4862
      %v4864 = vrot.slane %v4863, 4
      %v4865 = vadd.f32 %v4863, %v4864
      %v4866 = vrot.slane %v4865, 2
      %v4867 = vadd.f32 %v4865, %v4866
      %v4868 = vrot.slane %v4867, 1
      %v4869 = vadd.f32 %v4867, %v4868
      %4870 = vst.msk [vmem:[%s276 + $0x1] sm:$0x1] %vm4671, %v4869
      %v4871 = vsel %vm635, %v4403, -inf
      %v4872 = vsel %vm635, %v4407, -inf
      %v4873 = vmax.f32 %v4871, %v4872
      %v4874 = vsel %vm635, %v4404, -inf
      %v4875 = vsel %vm635, %v4408, -inf
      %v4876 = vmax.f32 %v4874, %v4875
      %v4877 = vsel %vm635, %v4405, -inf
      %v4878 = vsel %vm635, %v4409, -inf
      %v4879 = vmax.f32 %v4877, %v4878
      %v4880 = vsel %vm635, %v4406, -inf
      %v4881 = vsel %vm635, %v4410, -inf
      %v4882 = vmax.f32 %v4880, %v4881
      %v4883 = vsel %vm635, %v4411, -inf
      %v4884 = vsel %vm635, %v4415, -inf
      %v4885 = vmax.f32 %v4883, %v4884
      %v4886 = vsel %vm635, %v4412, -inf
      %v4887 = vsel %vm635, %v4416, -inf
      %v4888 = vmax.f32 %v4886, %v4887
      %v4889 = vsel %vm635, %v4413, -inf
      %v4890 = vsel %vm635, %v4417, -inf
      %v4891 = vmax.f32 %v4889, %v4890
      %v4892 = vsel %vm635, %v4414, -inf
      %v4893 = vsel %vm635, %v4418, -inf
      %v4894 = vmax.f32 %v4892, %v4893
      %v4895 = vsel %vm635, %v4419, -inf
      %v4896 = vsel %vm635, %v4423, -inf
      %v4897 = vmax.f32 %v4895, %v4896
      %v4898 = vsel %vm635, %v4420, -inf
      %v4899 = vsel %vm635, %v4424, -inf
      %v4900 = vmax.f32 %v4898, %v4899
      %v4901 = vsel %vm635, %v4421, -inf
      %v4902 = vsel %vm635, %v4425, -inf
      %v4903 = vmax.f32 %v4901, %v4902
      %v4904 = vsel %vm635, %v4422, -inf
      %v4905 = vsel %vm635, %v4426, -inf
      %v4906 = vmax.f32 %v4904, %v4905
      %v4907 = vsel %vm635, %v4427, -inf
      %v4908 = vsel %vm635, %v4431, -inf
      %v4909 = vmax.f32 %v4907, %v4908
      %v4910 = vsel %vm635, %v4428, -inf
      %v4911 = vsel %vm635, %v4432, -inf
      %v4912 = vmax.f32 %v4910, %v4911
      %v4913 = vsel %vm635, %v4429, -inf
      %v4914 = vsel %vm635, %v4433, -inf
      %v4915 = vmax.f32 %v4913, %v4914
      %v4916 = vsel %vm635, %v4430, -inf
      %v4917 = vsel %vm635, %v4434, -inf
      %v4918 = vmax.f32 %v4916, %v4917
      %v4919 = vsel %vm635, %v4435, -inf
      %v4920 = vsel %vm635, %v4439, -inf
      %v4921 = vmax.f32 %v4919, %v4920
      %v4922 = vsel %vm635, %v4436, -inf
      %v4923 = vsel %vm635, %v4440, -inf
      %v4924 = vmax.f32 %v4922, %v4923
      %v4925 = vsel %vm635, %v4437, -inf
      %v4926 = vsel %vm635, %v4441, -inf
      %v4927 = vmax.f32 %v4925, %v4926
      %v4928 = vsel %vm635, %v4438, -inf
      %v4929 = vsel %vm635, %v4442, -inf
      %v4930 = vmax.f32 %v4928, %v4929
      %v4931 = vsel %vm635, %v4443, -inf
      %v4932 = vsel %vm635, %v4447, -inf
      %v4933 = vmax.f32 %v4931, %v4932
      %v4934 = vsel %vm635, %v4444, -inf
      %v4935 = vsel %vm635, %v4448, -inf
      %v4936 = vmax.f32 %v4934, %v4935
      %v4937 = vsel %vm635, %v4445, -inf
      %v4938 = vsel %vm635, %v4449, -inf
      %v4939 = vmax.f32 %v4937, %v4938
      %v4940 = vsel %vm635, %v4446, -inf
      %v4941 = vsel %vm635, %v4450, -inf
      %v4942 = vmax.f32 %v4940, %v4941
      %v4943 = vsel %vm635, %v4451, -inf
      %v4944 = vsel %vm635, %v4455, -inf
      %v4945 = vmax.f32 %v4943, %v4944
      %v4946 = vsel %vm635, %v4452, -inf
      %v4947 = vsel %vm635, %v4456, -inf
      %v4948 = vmax.f32 %v4946, %v4947
      %v4949 = vsel %vm635, %v4453, -inf
      %v4950 = vsel %vm635, %v4457, -inf
      %v4951 = vmax.f32 %v4949, %v4950
      %v4952 = vsel %vm635, %v4454, -inf
      %v4953 = vsel %vm635, %v4458, -inf
      %v4954 = vmax.f32 %v4952, %v4953
      %v4955 = vsel %vm635, %v4459, -inf
      %v4956 = vsel %vm635, %v4463, -inf
      %v4957 = vmax.f32 %v4955, %v4956
      %v4958 = vsel %vm635, %v4460, -inf
      %v4959 = vsel %vm635, %v4464, -inf
      %v4960 = vmax.f32 %v4958, %v4959
      %v4961 = vsel %vm635, %v4461, -inf
      %v4962 = vsel %vm635, %v4465, -inf
      %v4963 = vmax.f32 %v4961, %v4962
      %v4964 = vsel %vm635, %v4462, -inf
      %v4965 = vsel %vm635, %v4466, -inf
      %v4966 = vmax.f32 %v4964, %v4965
      %4967 = vst.msk [vmem:[#allocation2] sm:$0xff] %vm635, %v4873
      %4968 = vst.msk [vmem:[#allocation2 + $0x8] sm:$0xff] %vm635, %v4876
      %4969 = vst.msk [vmem:[#allocation2 + $0x10] sm:$0xff] %vm635, %v4879
      %4970 = vst.msk [vmem:[#allocation2 + $0x18] sm:$0xff] %vm635, %v4882
      %4971 = vst.msk [vmem:[#allocation2 + $0x20] sm:$0xff] %vm635, %v4885
      %4972 = vst.msk [vmem:[#allocation2 + $0x28] sm:$0xff] %vm635, %v4888
      %4973 = vst.msk [vmem:[#allocation2 + $0x30] sm:$0xff] %vm635, %v4891
      %4974 = vst.msk [vmem:[#allocation2 + $0x38] sm:$0xff] %vm635, %v4894
      %4975 = vst.msk [vmem:[#allocation2 + $0x40] sm:$0xff] %vm635, %v4897
      %4976 = vst.msk [vmem:[#allocation2 + $0x48] sm:$0xff] %vm635, %v4900
      %4977 = vst.msk [vmem:[#allocation2 + $0x50] sm:$0xff] %vm635, %v4903
      %4978 = vst.msk [vmem:[#allocation2 + $0x58] sm:$0xff] %vm635, %v4906
      %4979 = vst.msk [vmem:[#allocation2 + $0x60] sm:$0xff] %vm635, %v4909
      %4980 = vst.msk [vmem:[#allocation2 + $0x68] sm:$0xff] %vm635, %v4912
      %4981 = vst.msk [vmem:[#allocation2 + $0x70] sm:$0xff] %vm635, %v4915
      %4982 = vst.msk [vmem:[#allocation2 + $0x78] sm:$0xff] %vm635, %v4918
      %4983 = vst.msk [vmem:[#allocation2 + $0x80] sm:$0xff] %vm635, %v4921
      %4984 = vst.msk [vmem:[#allocation2 + $0x88] sm:$0xff] %vm635, %v4924
      %4985 = vst.msk [vmem:[#allocation2 + $0x90] sm:$0xff] %vm635, %v4927
      %4986 = vst.msk [vmem:[#allocation2 + $0x98] sm:$0xff] %vm635, %v4930
      %4987 = vst.msk [vmem:[#allocation2 + $0xa0] sm:$0xff] %vm635, %v4933
      %4988 = vst.msk [vmem:[#allocation2 + $0xa8] sm:$0xff] %vm635, %v4936
      %4989 = vst.msk [vmem:[#allocation2 + $0xb0] sm:$0xff] %vm635, %v4939
      %4990 = vst.msk [vmem:[#allocation2 + $0xb8] sm:$0xff] %vm635, %v4942
      %4991 = vst.msk [vmem:[#allocation2 + $0xc0] sm:$0xff] %vm635, %v4945
      %4992 = vst.msk [vmem:[#allocation2 + $0xc8] sm:$0xff] %vm635, %v4948
      %4993 = vst.msk [vmem:[#allocation2 + $0xd0] sm:$0xff] %vm635, %v4951
      %4994 = vst.msk [vmem:[#allocation2 + $0xd8] sm:$0xff] %vm635, %v4954
      %4995 = vst.msk [vmem:[#allocation2 + $0xe0] sm:$0xff] %vm635, %v4957
      %4996 = vst.msk [vmem:[#allocation2 + $0xe8] sm:$0xff] %vm635, %v4960
      %4997 = vst.msk [vmem:[#allocation2 + $0xf0] sm:$0xff] %vm635, %v4963
      %4998 = vst.msk [vmem:[#allocation2 + $0xf8] sm:$0xff] %vm635, %v4966
      %v4999 = vsel %vm635, %v4403, inf
      %v5000 = vsel %vm635, %v4407, inf
      %v5001 = vmin.f32 %v4999, %v5000
      %v5002 = vsel %vm635, %v4404, inf
      %v5003 = vsel %vm635, %v4408, inf
      %v5004 = vmin.f32 %v5002, %v5003
      %v5005 = vsel %vm635, %v4405, inf
      %v5006 = vsel %vm635, %v4409, inf
      %v5007 = vmin.f32 %v5005, %v5006
      %v5008 = vsel %vm635, %v4406, inf
      %v5009 = vsel %vm635, %v4410, inf
      %v5010 = vmin.f32 %v5008, %v5009
      %v5011 = vsel %vm635, %v4411, inf
      %v5012 = vsel %vm635, %v4415, inf
      %v5013 = vmin.f32 %v5011, %v5012
      %v5014 = vsel %vm635, %v4412, inf
      %v5015 = vsel %vm635, %v4416, inf
      %v5016 = vmin.f32 %v5014, %v5015
      %v5017 = vsel %vm635, %v4413, inf
      %v5018 = vsel %vm635, %v4417, inf
      %v5019 = vmin.f32 %v5017, %v5018
      %v5020 = vsel %vm635, %v4414, inf
      %v5021 = vsel %vm635, %v4418, inf
      %v5022 = vmin.f32 %v5020, %v5021
      %v5023 = vsel %vm635, %v4419, inf
      %v5024 = vsel %vm635, %v4423, inf
      %v5025 = vmin.f32 %v5023, %v5024
      %v5026 = vsel %vm635, %v4420, inf
      %v5027 = vsel %vm635, %v4424, inf
      %v5028 = vmin.f32 %v5026, %v5027
      %v5029 = vsel %vm635, %v4421, inf
      %v5030 = vsel %vm635, %v4425, inf
      %v5031 = vmin.f32 %v5029, %v5030
      %v5032 = vsel %vm635, %v4422, inf
      %v5033 = vsel %vm635, %v4426, inf
      %v5034 = vmin.f32 %v5032, %v5033
      %v5035 = vsel %vm635, %v4427, inf
      %v5036 = vsel %vm635, %v4431, inf
      %v5037 = vmin.f32 %v5035, %v5036
      %v5038 = vsel %vm635, %v4428, inf
      %v5039 = vsel %vm635, %v4432, inf
      %v5040 = vmin.f32 %v5038, %v5039
      %v5041 = vsel %vm635, %v4429, inf
      %v5042 = vsel %vm635, %v4433, inf
      %v5043 = vmin.f32 %v5041, %v5042
      %v5044 = vsel %vm635, %v4430, inf
      %v5045 = vsel %vm635, %v4434, inf
      %v5046 = vmin.f32 %v5044, %v5045
      %v5047 = vsel %vm635, %v4435, inf
      %v5048 = vsel %vm635, %v4439, inf
      %v5049 = vmin.f32 %v5047, %v5048
      %v5050 = vsel %vm635, %v4436, inf
      %v5051 = vsel %vm635, %v4440, inf
      %v5052 = vmin.f32 %v5050, %v5051
      %v5053 = vsel %vm635, %v4437, inf
      %v5054 = vsel %vm635, %v4441, inf
      %v5055 = vmin.f32 %v5053, %v5054
      %v5056 = vsel %vm635, %v4438, inf
      %v5057 = vsel %vm635, %v4442, inf
      %v5058 = vmin.f32 %v5056, %v5057
      %v5059 = vsel %vm635, %v4443, inf
      %v5060 = vsel %vm635, %v4447, inf
      %v5061 = vmin.f32 %v5059, %v5060
      %v5062 = vsel %vm635, %v4444, inf
      %v5063 = vsel %vm635, %v4448, inf
      %v5064 = vmin.f32 %v5062, %v5063
      %v5065 = vsel %vm635, %v4445, inf
      %v5066 = vsel %vm635, %v4449, inf
      %v5067 = vmin.f32 %v5065, %v5066
      %v5068 = vsel %vm635, %v4446, inf
      %v5069 = vsel %vm635, %v4450, inf
      %v5070 = vmin.f32 %v5068, %v5069
      %v5071 = vsel %vm635, %v4451, inf
      %v5072 = vsel %vm635, %v4455, inf
      %v5073 = vmin.f32 %v5071, %v5072
      %v5074 = vsel %vm635, %v4452, inf
      %v5075 = vsel %vm635, %v4456, inf
      %v5076 = vmin.f32 %v5074, %v5075
      %v5077 = vsel %vm635, %v4453, inf
      %v5078 = vsel %vm635, %v4457, inf
      %v5079 = vmin.f32 %v5077, %v5078
      %v5080 = vsel %vm635, %v4454, inf
      %v5081 = vsel %vm635, %v4458, inf
      %v5082 = vmin.f32 %v5080, %v5081
      %v5083 = vsel %vm635, %v4459, inf
      %v5084 = vsel %vm635, %v4463, inf
      %v5085 = vmin.f32 %v5083, %v5084
      %v5086 = vsel %vm635, %v4460, inf
      %v5087 = vsel %vm635, %v4464, inf
      %v5088 = vmin.f32 %v5086, %v5087
      %v5089 = vsel %vm635, %v4461, inf
      %v5090 = vsel %vm635, %v4465, inf
      %v5091 = vmin.f32 %v5089, %v5090
      %v5092 = vsel %vm635, %v4462, inf
      %v5093 = vsel %vm635, %v4466, inf
      %v5094 = vmin.f32 %v5092, %v5093
      %5095 = vst.msk [vmem:[#allocation3] sm:$0xff] %vm635, %v5001
      %5096 = vst.msk [vmem:[#allocation3 + $0x8] sm:$0xff] %vm635, %v5004
      %5097 = vst.msk [vmem:[#allocation3 + $0x10] sm:$0xff] %vm635, %v5007
      %5098 = vst.msk [vmem:[#allocation3 + $0x18] sm:$0xff] %vm635, %v5010
      %5099 = vst.msk [vmem:[#allocation3 + $0x20] sm:$0xff] %vm635, %v5013
      %5100 = vst.msk [vmem:[#allocation3 + $0x28] sm:$0xff] %vm635, %v5016
      %5101 = vst.msk [vmem:[#allocation3 + $0x30] sm:$0xff] %vm635, %v5019
      %5102 = vst.msk [vmem:[#allocation3 + $0x38] sm:$0xff] %vm635, %v5022
      %5103 = vst.msk [vmem:[#allocation3 + $0x40] sm:$0xff] %vm635, %v5025
      %5104 = vst.msk [vmem:[#allocation3 + $0x48] sm:$0xff] %vm635, %v5028
      %5105 = vst.msk [vmem:[#allocation3 + $0x50] sm:$0xff] %vm635, %v5031
      %5106 = vst.msk [vmem:[#allocation3 + $0x58] sm:$0xff] %vm635, %v5034
      %5107 = vst.msk [vmem:[#allocation3 + $0x60] sm:$0xff] %vm635, %v5037
      %5108 = vst.msk [vmem:[#allocation3 + $0x68] sm:$0xff] %vm635, %v5040
      %5109 = vst.msk [vmem:[#allocation3 + $0x70] sm:$0xff] %vm635, %v5043
      %5110 = vst.msk [vmem:[#allocation3 + $0x78] sm:$0xff] %vm635, %v5046
      %5111 = vst.msk [vmem:[#allocation3 + $0x80] sm:$0xff] %vm635, %v5049
      %5112 = vst.msk [vmem:[#allocation3 + $0x88] sm:$0xff] %vm635, %v5052
      %5113 = vst.msk [vmem:[#allocation3 + $0x90] sm:$0xff] %vm635, %v5055
      %5114 = vst.msk [vmem:[#allocation3 + $0x98] sm:$0xff] %vm635, %v5058
      %5115 = vst.msk [vmem:[#allocation3 + $0xa0] sm:$0xff] %vm635, %v5061
      %5116 = vst.msk [vmem:[#allocation3 + $0xa8] sm:$0xff] %vm635, %v5064
      %5117 = vst.msk [vmem:[#allocation3 + $0xb0] sm:$0xff] %vm635, %v5067
      %5118 = vst.msk [vmem:[#allocation3 + $0xb8] sm:$0xff] %vm635, %v5070
      %5119 = vst.msk [vmem:[#allocation3 + $0xc0] sm:$0xff] %vm635, %v5073
      %5120 = vst.msk [vmem:[#allocation3 + $0xc8] sm:$0xff] %vm635, %v5076
      %5121 = vst.msk [vmem:[#allocation3 + $0xd0] sm:$0xff] %vm635, %v5079
      %5122 = vst.msk [vmem:[#allocation3 + $0xd8] sm:$0xff] %vm635, %v5082
      %5123 = vst.msk [vmem:[#allocation3 + $0xe0] sm:$0xff] %vm635, %v5085
      %5124 = vst.msk [vmem:[#allocation3 + $0xe8] sm:$0xff] %vm635, %v5088
      %5125 = vst.msk [vmem:[#allocation3 + $0xf0] sm:$0xff] %vm635, %v5091
      %5126 = vst.msk [vmem:[#allocation3 + $0xf8] sm:$0xff] %vm635, %v5094
      %v5127 = vld [vmem:[#allocation2] ss:$2 sm:$0xff]
      %s5128 = scalar_lea.vmem [#allocation2], 32
      %v5129 = vld [vmem:[%s5128] ss:$2 sm:$0xff]
      %s5130 = scalar_lea.vmem [#allocation2], 64
      %v5131 = vld [vmem:[%s5130] ss:$2 sm:$0xff]
      %s5132 = scalar_lea.vmem [#allocation2], 96
      %v5133 = vld [vmem:[%s5132] ss:$2 sm:$0xff]
      %s5134 = scalar_lea.vmem [#allocation2], 128
      %v5135 = vld [vmem:[%s5134] ss:$2 sm:$0xff]
      %s5136 = scalar_lea.vmem [#allocation2], 160
      %v5137 = vld [vmem:[%s5136] ss:$2 sm:$0xff]
      %s5138 = scalar_lea.vmem [#allocation2], 192
      %v5139 = vld [vmem:[%s5138] ss:$2 sm:$0xff]
      %s5140 = scalar_lea.vmem [#allocation2], 224
      %v5141 = vld [vmem:[%s5140] ss:$2 sm:$0xff]
      %v5142 = vld [vmem:[#allocation3] ss:$2 sm:$0xff]
      %s5143 = scalar_lea.vmem [#allocation3], 32
      %v5144 = vld [vmem:[%s5143] ss:$2 sm:$0xff]
      %s5145 = scalar_lea.vmem [#allocation3], 64
      %v5146 = vld [vmem:[%s5145] ss:$2 sm:$0xff]
      %s5147 = scalar_lea.vmem [#allocation3], 96
      %v5148 = vld [vmem:[%s5147] ss:$2 sm:$0xff]
      %s5149 = scalar_lea.vmem [#allocation3], 128
      %v5150 = vld [vmem:[%s5149] ss:$2 sm:$0xff]
      %s5151 = scalar_lea.vmem [#allocation3], 160
      %v5152 = vld [vmem:[%s5151] ss:$2 sm:$0xff]
      %s5153 = scalar_lea.vmem [#allocation3], 192
      %v5154 = vld [vmem:[%s5153] ss:$2 sm:$0xff]
      %s5155 = scalar_lea.vmem [#allocation3], 224
      %v5156 = vld [vmem:[%s5155] ss:$2 sm:$0xff]
      %s5157 = scalar_lea.vmem [#allocation2], 1
      %v5158 = vld [vmem:[%s5157] ss:$2 sm:$0xff]
      %s5159 = scalar_lea.vmem [#allocation2], 33
      %v5160 = vld [vmem:[%s5159] ss:$2 sm:$0xff]
      %s5161 = scalar_lea.vmem [#allocation2], 65
      %v5162 = vld [vmem:[%s5161] ss:$2 sm:$0xff]
      %s5163 = scalar_lea.vmem [#allocation2], 97
      %v5164 = vld [vmem:[%s5163] ss:$2 sm:$0xff]
      %s5165 = scalar_lea.vmem [#allocation2], 129
      %v5166 = vld [vmem:[%s5165] ss:$2 sm:$0xff]
      %s5167 = scalar_lea.vmem [#allocation2], 161
      %v5168 = vld [vmem:[%s5167] ss:$2 sm:$0xff]
      %s5169 = scalar_lea.vmem [#allocation2], 193
      %v5170 = vld [vmem:[%s5169] ss:$2 sm:$0xff]
      %s5171 = scalar_lea.vmem [#allocation2], 225
      %v5172 = vld [vmem:[%s5171] ss:$2 sm:$0xff]
      %v5173 = vmax.f32 %v5127, %v5158
      %v5174 = vmax.f32 %v5129, %v5160
      %v5175 = vmax.f32 %v5131, %v5162
      %v5176 = vmax.f32 %v5133, %v5164
      %v5177 = vmax.f32 %v5135, %v5166
      %v5178 = vmax.f32 %v5137, %v5168
      %v5179 = vmax.f32 %v5139, %v5170
      %v5180 = vmax.f32 %v5141, %v5172
      %s5181 = scalar_lea.vmem [#allocation3], 1
      %v5182 = vld [vmem:[%s5181] ss:$2 sm:$0xff]
      %s5183 = scalar_lea.vmem [#allocation3], 33
      %v5184 = vld [vmem:[%s5183] ss:$2 sm:$0xff]
      %s5185 = scalar_lea.vmem [#allocation3], 65
      %v5186 = vld [vmem:[%s5185] ss:$2 sm:$0xff]
      %s5187 = scalar_lea.vmem [#allocation3], 97
      %v5188 = vld [vmem:[%s5187] ss:$2 sm:$0xff]
      %s5189 = scalar_lea.vmem [#allocation3], 129
      %v5190 = vld [vmem:[%s5189] ss:$2 sm:$0xff]
      %s5191 = scalar_lea.vmem [#allocation3], 161
      %v5192 = vld [vmem:[%s5191] ss:$2 sm:$0xff]
      %s5193 = scalar_lea.vmem [#allocation3], 193
      %v5194 = vld [vmem:[%s5193] ss:$2 sm:$0xff]
      %s5195 = scalar_lea.vmem [#allocation3], 225
      %v5196 = vld [vmem:[%s5195] ss:$2 sm:$0xff]
      %v5197 = vmin.f32 %v5142, %v5182
      %v5198 = vmin.f32 %v5144, %v5184
      %v5199 = vmin.f32 %v5146, %v5186
      %v5200 = vmin.f32 %v5148, %v5188
      %v5201 = vmin.f32 %v5150, %v5190
      %v5202 = vmin.f32 %v5152, %v5192
      %v5203 = vmin.f32 %v5154, %v5194
      %v5204 = vmin.f32 %v5156, %v5196
      %5205 = vst.msk [vmem:[%s258] sm:$0xff] %vm635, %v5173
      %5206 = vst.msk [vmem:[%s258 + $0x8] sm:$0xff] %vm635, %v5174
      %5207 = vst.msk [vmem:[%s258 + $0x10] sm:$0xff] %vm635, %v5175
      %5208 = vst.msk [vmem:[%s258 + $0x18] sm:$0xff] %vm635, %v5176
      %5209 = vst.msk [vmem:[%s258 + $0x20] sm:$0xff] %vm635, %v5177
      %5210 = vst.msk [vmem:[%s258 + $0x28] sm:$0xff] %vm635, %v5178
      %5211 = vst.msk [vmem:[%s258 + $0x30] sm:$0xff] %vm635, %v5179
      %5212 = vst.msk [vmem:[%s258 + $0x38] sm:$0xff] %vm635, %v5180
      %5213 = vst.msk [vmem:[%s268] sm:$0xff] %vm635, %v5197
      %5214 = vst.msk [vmem:[%s268 + $0x8] sm:$0xff] %vm635, %v5198
      %5215 = vst.msk [vmem:[%s268 + $0x10] sm:$0xff] %vm635, %v5199
      %5216 = vst.msk [vmem:[%s268 + $0x18] sm:$0xff] %vm635, %v5200
      %5217 = vst.msk [vmem:[%s268 + $0x20] sm:$0xff] %vm635, %v5201
      %5218 = vst.msk [vmem:[%s268 + $0x28] sm:$0xff] %vm635, %v5202
      %5219 = vst.msk [vmem:[%s268 + $0x30] sm:$0xff] %vm635, %v5203
      %5220 = vst.msk [vmem:[%s268 + $0x38] sm:$0xff] %vm635, %v5204
      %s5221 = smul.u32 8, %s21
      %p5222 = scmp.lt.s32.totalorder %s20, 1
      %s5223 = scalar_select %p5222, %s20, 1
      %p5224 = scmp.lt.s32.totalorder %s5221, 7
      %s5225 = scalar_select %p5224, %s5221, 7
      %s5226 = smul.addr %s5223, 8
      %s5227 = sadd.s32 %s5225, %s5226
      %s5228 = smul.addr %s5227, 8
      %s5229 = scalar_lea.vmem %s2, %s5228
      %s5230 = smul.u32 8, %s21
      %p5231 = scmp.lt.s32.totalorder %s20, 1
      %s5232 = scalar_select %p5231, %s20, 1
      %p5233 = scmp.lt.s32.totalorder %s5230, 7
      %s5234 = scalar_select %p5233, %s5230, 7
      %s5235 = smul.addr %s5232, 8
      %s5236 = sadd.s32 %s5234, %s5235
      %s5237 = smul.addr %s5236, 8
      %s5238 = scalar_lea.vmem %s3, %s5237
      %p5239 = scmp.lt.s32.totalorder %s20, 1
      %s5240 = scalar_select %p5239, %s20, 1
      %p5241 = scmp.lt.s32.totalorder %s21, 0
      %s5242 = scalar_select %p5241, %s21, 0
      %s5243 = sadd.s32 %s5242, %s5240
      %s5244 = smul.addr %s5243, 2
      %s5245 = scalar_lea.vmem %s4, %s5244
      // Predicated region
      $region29: #{down_crfb.2} parent=27 // pred_check
        %p5246 = pneg %p97
      $region30: #{down_crfb.2} parent=27 // pred_check_branch
        %5248 = sbr.rel (%p5246) target = $region32
      $region31: #{down_crfb.2} parent=27 // pred_region
        %s5249 = smul.u32 8, %s21
      $region32: #{down_crfb.2} parent=27 // pred_fallthru
        _
      // Predicated region
      $region33: #{down_crfb.2} parent=27 // pred_check
        %p5250 = pneg %p125
      $region34: #{down_crfb.2} parent=27 // pred_check_branch
        %5252 = sbr.rel (%p5250) target = $region36
      $region35: #{down_crfb.2} parent=27 // pred_region
        %s5253 = smul.u32 8, %s21
      $region36: #{down_crfb.2} parent=27 // pred_fallthru
        _
      // Predicated region
      $region37: #{down_crfb.2} parent=27 // pred_check
        %p5254 = pneg %p153
      $region38: #{down_crfb.2} parent=27 // pred_check_branch
        %5256 = sbr.rel (%p5254) target = $region40
      $region39: #{down_crfb.2} parent=27 // pred_region
        _
      $region40: #{down_crfb.2} parent=27 // pred_fallthru
        _
    $region28: #{down_crfb.2} parent=5 // pred_fallthru
      _
    %p5257 = scmp.le.s32.totalorder 2, %s11
    // Predicated region
    $region41: #{down_crfb.2} parent=5 // pred_check
      %p5258 = pneg %p5257
    $region42: #{down_crfb.2} parent=5 // pred_check_branch
      %5260 = sbr.rel (%p5258) target = $region44
    $region43: #{down_crfb.2} parent=5 // pred_region
      %s5261 = ssub.s32 %s11, 2
      // Predicated region
      $region45: #{down_crfb.2} parent=43 // pred_check
        %p5262 = pneg %p103
      $region46: #{down_crfb.2} parent=43 // pred_check_branch
        %5264 = sbr.rel (%p5262) target = $region48
      $region47: #{down_crfb.2} parent=43 // pred_region
        %s5265 = smul.u32 8, %s23
        %p5266 = scmp.lt.s32.totalorder %s22, 1
        %s5267 = scalar_select %p5266, %s22, 1
        %p5268 = scmp.lt.s32.totalorder %s5265, 7
        %s5269 = scalar_select %p5268, %s5265, 7
        %s5270 = smul.addr %s5267, 8
        %s5271 = sadd.s32 %s5269, %s5270
        %s5272 = smul.addr %s5271, 8
        %s5273 = scalar_lea.vmem %s2, %s5272
      $region48: #{down_crfb.2} parent=43 // pred_fallthru
        _
      // Predicated region
      $region49: #{down_crfb.2} parent=43 // pred_check
        %p5274 = pneg %p131
      $region50: #{down_crfb.2} parent=43 // pred_check_branch
        %5276 = sbr.rel (%p5274) target = $region52
      $region51: #{down_crfb.2} parent=43 // pred_region
        %s5277 = smul.u32 8, %s23
        %p5278 = scmp.lt.s32.totalorder %s22, 1
        %s5279 = scalar_select %p5278, %s22, 1
        %p5280 = scmp.lt.s32.totalorder %s5277, 7
        %s5281 = scalar_select %p5280, %s5277, 7
        %s5282 = smul.addr %s5279, 8
        %s5283 = sadd.s32 %s5281, %s5282
        %s5284 = smul.addr %s5283, 8
        %s5285 = scalar_lea.vmem %s3, %s5284
      $region52: #{down_crfb.2} parent=43 // pred_fallthru
        _
      // Predicated region
      $region53: #{down_crfb.2} parent=43 // pred_check
        %p5286 = pneg %p159
      $region54: #{down_crfb.2} parent=43 // pred_check_branch
        %5288 = sbr.rel (%p5286) target = $region56
      $region55: #{down_crfb.2} parent=43 // pred_region
        %p5289 = scmp.lt.s32.totalorder %s22, 1
        %s5290 = scalar_select %p5289, %s22, 1
        %p5291 = scmp.lt.s32.totalorder %s23, 0
        %s5292 = scalar_select %p5291, %s23, 0
        %s5293 = sadd.s32 %s5292, %s5290
        %s5294 = smul.addr %s5293, 2
        %s5295 = scalar_lea.vmem %s4, %s5294
      $region56: #{down_crfb.2} parent=43 // pred_fallthru
        _
    $region44: #{down_crfb.2} parent=5 // pred_fallthru
      _
  $region6: #{down_crfb.2} parent=0 // loop_footer
    %s15 = sadd.s32 1, %s11
  $region7: #{down_crfb.2} parent=0 // loop_footer_branch
    %10 = sbr.rel target = $region3
  $region8: #{down_crfb.2} parent=0 // loop_exit
    _

</llo_original>
